<compile_context>
chip_gen: v7x
topology: tpu7x:2x2x1
jax: 0.10.0
libtpu: 0.0.40
codegen_flags: <defaults>
</compile_context>

<pallas_src>
import functools

import jax
import jax.numpy as jnp
from jax import lax
from jax.experimental import pallas as pl
from jax.experimental.pallas import tpu as pltpu

HIDDEN_SIZE = 64
INPUT_SIZE = 1
NUM_LAYERS = 2
HP = 128          # gate slab / hidden padded to one full vreg lane width
KP = 128          # padded num_keys for the FC head
B_TILE = 8        # batch rows per grid step (one sublane tile)


def _lstm_fc_kernel(x_ref, wih0_ref, b0_ref, whh0_ref, w1_ref, b1_ref,
                    wfc_ref, bfc_ref, out_ref):
    """Fused 2-layer LSTM + FC head for one batch tile.

    x_ref:    (T, B, 1)     f32   raw inputs (batch tile, time-major)
    wih0_ref: (1, 4*HP)     f32   layer-0 input weight (gate-padded)
    b0_ref:   (1, 4*HP)     f32   b_ih_l0 + b_hh_l0 (gate-padded)
    whh0_ref: (HP, 4*HP)    bf16  layer-0 recurrent weight (rows 64.. zero)
    w1_ref:   (2*H, 4*HP)   bf16  stacked [W_ih_l1; W_hh_l1], K=128, no zero rows
    b1_ref:   (1, 4*HP)     f32   b_ih_l1 + b_hh_l1 (gate-padded)
    wfc_ref:  (HP, KP)      bf16  fc weight (padded)
    bfc_ref:  (1, KP)       f32   fc bias (padded)
    out_ref:  (B, KP)       f32
    """
    T = x_ref.shape[0]
    B = x_ref.shape[1]
    G = whh0_ref.shape[1]             # 4 * HP
    Hp = G // 4
    H = HIDDEN_SIZE

    # Hoist weight loads and all bias/weight broadcasts out of the time loop
    # (broadcast_in_dim is not CSE'd by JAX).
    whh0 = whh0_ref[...]                                  # (Hp, 4Hp) bf16
    w1 = w1_ref[...]                                      # (2H, 4Hp) bf16
    wih0 = jnp.broadcast_to(wih0_ref[...], (B, G))        # (B, 4Hp) f32
    b0 = jnp.broadcast_to(b0_ref[...], (B, G))            # (B, 4Hp) f32
    b1 = jnp.broadcast_to(b1_ref[...], (B, G))            # (B, 4Hp) f32

    # Lane mask for the 128-lane [h0 | h1] blend feeding layer 1.
    lane = lax.broadcasted_iota(jnp.int32, (B, Hp), 1)
    low_mask = lane < H

    def gates_to_hc(gates, c):
        # Gate slices are vreg-aligned: 0/128/256/384 (order i, f, g, o).
        i = jax.nn.sigmoid(gates[:, 0 * Hp:1 * Hp])
        f = jax.nn.sigmoid(gates[:, 1 * Hp:2 * Hp])
        g = jnp.tanh(gates[:, 2 * Hp:3 * Hp])
        o = jax.nn.sigmoid(gates[:, 3 * Hp:4 * Hp])
        c_new = f * c + i * g
        h_new = o * jnp.tanh(c_new)
        return h_new, c_new

    zeros = jnp.zeros((B, Hp), jnp.float32)

    def body(t, carry):
        h0, c0, h1, c1 = carry
        # ---- layer 0: input projection computed in-kernel (VPU, hidden under
        # the MXU latency of the recurrent matmul); one K=128 recurrent matmul.
        x_t = x_ref[t]                                    # (B, 1) f32
        g0 = (x_t * wih0 + b0
              + jnp.dot(h0.astype(jnp.bfloat16), whh0,
                        preferred_element_type=jnp.float32))
        h0, c0 = gates_to_hc(g0, c0)
        # ---- layer 1: single K=128 matmul over the lane blend
        # lanes [0,64) = h0 features, lanes [64,128) = h1_{t-1} features.
        # roll+select goes to XLU/VPU and does not depend on padded-lane zeros.
        hcat = jnp.where(low_mask, h0, pltpu.roll(h1, shift=H, axis=1))
        g1 = b1 + jnp.dot(hcat.astype(jnp.bfloat16), w1,
                          preferred_element_type=jnp.float32)
        h1, c1 = gates_to_hc(g1, c1)
        return (h0, c0, h1, c1)

    # T is static and small -> fully unroll for cross-iteration scheduling.
    _, _, h1_last, _ = lax.fori_loop(0, T, body, (zeros, zeros, zeros, zeros),
                                     unroll=True)

    # ---- fc head on the last time step (lane-dense padded output).
    out_ref[...] = (jnp.dot(h1_last.astype(jnp.bfloat16), wfc_ref[...],
                            preferred_element_type=jnp.float32)
                    + bfc_ref[...])


def prepare_params(params):
    """One-time pad / cast / stack of the weights into kernel-ready layout.

    Call once (outside the per-call jitted path) and reuse the result.
    """
    H = HIDDEN_SIZE
    num_keys = params["w_fc"].shape[0]
    assert num_keys <= KP, "increase KP for large num_keys"

    def pad_gates(w_t):
        # (in, 4H) with gate order (i,f,g,o) -> (in, 4*HP), zero-padded lanes.
        ind = w_t.shape[0]
        return jnp.pad(w_t.reshape(ind, 4, H),
                       ((0, 0), (0, 0), (0, HP - H))).reshape(ind, 4 * HP)

    # layer 0
    wih0 = pad_gates(params["w_ih_l0"].T).astype(jnp.float32)          # (1, 4HP)
    b0 = pad_gates((params["b_ih_l0"] + params["b_hh_l0"])[None])      # (1, 4HP)
    whh0 = jnp.pad(pad_gates(params["w_hh_l0"].T),
                   ((0, HP - H), (0, 0))).astype(jnp.bfloat16)         # (HP, 4HP)
    # layer 1: K=128 merged weight (no zero rows): rows 0..63 -> h0, 64..127 -> h1.
    w1 = jnp.concatenate([pad_gates(params["w_ih_l1"].T),
                          pad_gates(params["w_hh_l1"].T)],
                         axis=0).astype(jnp.bfloat16)                  # (2H, 4HP)
    b1 = pad_gates((params["b_ih_l1"] + params["b_hh_l1"])[None])      # (1, 4HP)
    # fc head (lane-dense padded output)
    wfc = jnp.pad(params["w_fc"].T,
                  ((0, HP - H), (0, KP - num_keys))).astype(jnp.bfloat16)
    bfc = jnp.pad(params["b_fc"], (0, KP - num_keys))[None, :].astype(jnp.float32)

    return dict(wih0=wih0, b0=b0.astype(jnp.float32), whh0=whh0, w1=w1,
                b1=b1.astype(jnp.float32), wfc=wfc, bfc=bfc)


def model_forward(x, prep, *, num_keys):
    """x: (B, T, INPUT_SIZE) float32, batch_first — same as the PyTorch module.

    `prep` is the output of prepare_params(); num_keys is static.
    """
    B, T, _ = x.shape

    # Pad the batch to a multiple of one sublane tile and go time-major.
    Bp = ((B + B_TILE - 1) // B_TILE) * B_TILE
    x_p = jnp.pad(x.astype(jnp.float32), ((0, Bp - B), (0, 0), (0, 0)))
    x_tm = jnp.transpose(x_p, (1, 0, 2))                               # (T, Bp, 1)

    gate_n = 4 * HP
    flops = int(Bp * (T * 2 * (2 * HP * gate_n) + 2 * HP * KP))
    transcendentals = int(Bp * T * 2 * 5 * HP)
    bytes_accessed = int(
        x_tm.size * 4
        + sum(int(v.size) * jnp.dtype(v.dtype).itemsize for v in prep.values())
        + Bp * KP * 4)

    grid = (Bp // B_TILE,)
    const = lambda i: (0, 0)   # weights stay resident (not re-DMA'd per tile)
    out_p = pl.pallas_call(
        _lstm_fc_kernel,
        out_shape=jax.ShapeDtypeStruct((Bp, KP), jnp.float32),
        grid=grid,
        in_specs=[
            pl.BlockSpec((T, B_TILE, 1), lambda i: (0, i, 0)),   # x
            pl.BlockSpec((1, 4 * HP), const),                    # wih0
            pl.BlockSpec((1, 4 * HP), const),                    # b0
            pl.BlockSpec((HP, 4 * HP), const),                   # whh0
            pl.BlockSpec((2 * HIDDEN_SIZE, 4 * HP), const),      # w1
            pl.BlockSpec((1, 4 * HP), const),                    # b1
            pl.BlockSpec((HP, KP), const),                       # wfc
            pl.BlockSpec((1, KP), const),                        # bfc
        ],
        out_specs=pl.BlockSpec((B_TILE, KP), lambda i: (i, 0)),
        compiler_params=pltpu.CompilerParams(
            dimension_semantics=("parallel",)),
        cost_estimate=pl.CostEstimate(flops=flops,
                                      transcendentals=transcendentals,
                                      bytes_accessed=bytes_accessed),
    )(x_tm, prep["wih0"], prep["b0"], prep["whh0"], prep["w1"], prep["b1"],
      prep["wfc"], prep["bfc"])

    return out_p[:B, :num_keys]


def init_params(key, num_keys):
    """Deterministic init matching PyTorch LSTM/Linear shapes (uniform(-k, k), k=1/sqrt(H))."""
    H, I = HIDDEN_SIZE, INPUT_SIZE
    k = 1.0 / jnp.sqrt(jnp.float32(H))
    names_shapes = [
        ("w_ih_l0", (4 * H, I)),
        ("w_hh_l0", (4 * H, H)),
        ("b_ih_l0", (4 * H,)),
        ("b_hh_l0", (4 * H,)),
        ("w_ih_l1", (4 * H, H)),
        ("w_hh_l1", (4 * H, H)),
        ("b_ih_l1", (4 * H,)),
        ("b_hh_l1", (4 * H,)),
        ("w_fc", (num_keys, H)),
        ("b_fc", (num_keys,)),
    ]
    params = {}
    keys = jax.random.split(key, len(names_shapes))
    for sub, (name, shape) in zip(keys, names_shapes):
        params[name] = jax.random.uniform(
            sub, shape, jnp.float32, minval=-k, maxval=k)
    return params


def reference_forward(x, params):
    """Pure-JAX f32 reference of the PyTorch forward (for validation)."""
    B, T, _ = x.shape
    H = HIDDEN_SIZE

    def lstm_layer(seq, wih, whh, bih, bhh):
        # seq: (T, B, in)
        def step(carry, x_t):
            h, c = carry
            gates = x_t @ wih.T + bih + h @ whh.T + bhh
            i = jax.nn.sigmoid(gates[:, 0:H])
            f = jax.nn.sigmoid(gates[:, H:2 * H])
            g = jnp.tanh(gates[:, 2 * H:3 * H])
            o = jax.nn.sigmoid(gates[:, 3 * H:4 * H])
            c = f * c + i * g
            h = o * jnp.tanh(c)
            return (h, c), h

        zeros = jnp.zeros((B, H), jnp.float32)
        (_, _), hs = lax.scan(step, (zeros, zeros), seq)
        return hs

    seq = jnp.transpose(x, (1, 0, 2)).astype(jnp.float32)
    seq = lstm_layer(seq, params["w_ih_l0"], params["w_hh_l0"],
                     params["b_ih_l0"], params["b_hh_l0"])
    seq = lstm_layer(seq, params["w_ih_l1"], params["w_hh_l1"],
                     params["b_ih_l1"], params["b_hh_l1"])
    h_last = seq[-1]                                    # (B, H)
    return h_last @ params["w_fc"].T + params["b_fc"]


if __name__ == "__main__":
    B, T, NUM_KEYS = 2, 8, 16

    key = jax.random.PRNGKey(0)
    k_params, k_x = jax.random.split(key)
    params = init_params(k_params, NUM_KEYS)
    # DeepLog feeds integer log keys cast to float; synthesize small values.
    x = jax.random.randint(k_x, (B, T, INPUT_SIZE), 0, NUM_KEYS).astype(jnp.float32)

    prep = prepare_params(params)          # one-time weight pad/cast/stack
    fwd = jax.jit(functools.partial(model_forward, num_keys=NUM_KEYS))
    out = fwd(x, prep)
    jax.block_until_ready(out)

    ref = reference_forward(x, params)
    assert out.shape == (B, NUM_KEYS), out.shape
    assert jnp.allclose(out, ref, atol=1e-2, rtol=1e-2), (
        "mismatch vs reference", jnp.max(jnp.abs(out - ref)))

    print("KERNEL_OK")
</pallas_src>

<mosaic_0001>
module attributes {stable_mosaic.version = 11 : i64} {
  func.func @_lstm_fc_kernel(%arg0: i32, %arg1: memref<8x8x1xf32, #tpu.memory_space<vmem>>, %arg2: memref<1x512xf32, #tpu.memory_space<vmem>>, %arg3: memref<1x512xf32, #tpu.memory_space<vmem>>, %arg4: memref<128x512xbf16, #tpu.memory_space<vmem>>, %arg5: memref<128x512xbf16, #tpu.memory_space<vmem>>, %arg6: memref<1x512xf32, #tpu.memory_space<vmem>>, %arg7: memref<128x128xbf16, #tpu.memory_space<vmem>>, %arg8: memref<1x128xf32, #tpu.memory_space<vmem>>, %arg9: memref<8x128xf32, #tpu.memory_space<vmem>>) attributes {dimension_semantics = [#tpu.dimension_semantics<parallel>], iteration_bounds = array<i64: 1>, scalar_prefetch = 0 : i64, scratch_operands = 0 : i64, tpu.core_type = #tpu.core_type<tc>, window_params = [{transform_indices = @transform_0, window_bounds = array<i64: 8, 8, 1>}, {pipeline_mode = #tpu.pipeline_mode<synchronous>, transform_indices = @transform_1, window_bounds = array<i64: 1, 512>}, {pipeline_mode = #tpu.pipeline_mode<synchronous>, transform_indices = @transform_2, window_bounds = array<i64: 1, 512>}, {pipeline_mode = #tpu.pipeline_mode<synchronous>, transform_indices = @transform_3, window_bounds = array<i64: 128, 512>}, {pipeline_mode = #tpu.pipeline_mode<synchronous>, transform_indices = @transform_4, window_bounds = array<i64: 128, 512>}, {pipeline_mode = #tpu.pipeline_mode<synchronous>, transform_indices = @transform_5, window_bounds = array<i64: 1, 512>}, {pipeline_mode = #tpu.pipeline_mode<synchronous>, transform_indices = @transform_6, window_bounds = array<i64: 128, 128>}, {pipeline_mode = #tpu.pipeline_mode<synchronous>, transform_indices = @transform_7, window_bounds = array<i64: 1, 128>}, {transform_indices = @transform_8, window_bounds = array<i64: 8, 128>}]} {
    %c0 = arith.constant 0 : index
    %c0_0 = arith.constant 0 : index
    %0 = vector.load %arg4[%c0, %c0_0] : memref<128x512xbf16, #tpu.memory_space<vmem>>, vector<128x512xbf16>
    %c0_1 = arith.constant 0 : index
    %c0_2 = arith.constant 0 : index
    %1 = vector.load %arg5[%c0_1, %c0_2] : memref<128x512xbf16, #tpu.memory_space<vmem>>, vector<128x512xbf16>
    %c0_3 = arith.constant 0 : index
    %c0_4 = arith.constant 0 : index
    %2 = vector.load %arg2[%c0_3, %c0_4] : memref<1x512xf32, #tpu.memory_space<vmem>>, vector<1x512xf32>
    %3 = vector.shape_cast %2 : vector<1x512xf32> to vector<1x512xf32>
    %4 = vector.broadcast %3 : vector<1x512xf32> to vector<8x512xf32>
    %c0_5 = arith.constant 0 : index
    %c0_6 = arith.constant 0 : index
    %5 = vector.load %arg3[%c0_5, %c0_6] : memref<1x512xf32, #tpu.memory_space<vmem>>, vector<1x512xf32>
    %6 = vector.shape_cast %5 : vector<1x512xf32> to vector<1x512xf32>
    %7 = vector.broadcast %6 : vector<1x512xf32> to vector<8x512xf32>
    %c0_7 = arith.constant 0 : index
    %c0_8 = arith.constant 0 : index
    %8 = vector.load %arg6[%c0_7, %c0_8] : memref<1x512xf32, #tpu.memory_space<vmem>>, vector<1x512xf32>
    %9 = vector.shape_cast %8 : vector<1x512xf32> to vector<1x512xf32>
    %10 = vector.broadcast %9 : vector<1x512xf32> to vector<8x512xf32>
    %11 = tpu.iota {dimensions = array<i32: 1>} : vector<8x128xi32>
    %c64_i32 = arith.constant 64 : i32
    %12 = vector.broadcast %c64_i32 : i32 to vector<8x128xi32>
    %13 = arith.cmpi slt, %11, %12 : vector<8x128xi32>
    %cst = arith.constant 0.000000e+00 : f32
    %14 = vector.broadcast %cst : f32 to vector<8x128xf32>
    %c0_i32 = arith.constant 0 : i32
    %15 = arith.index_cast %c0_i32 : i32 to index
    %c0_9 = arith.constant 0 : index
    %c0_10 = arith.constant 0 : index
    %16 = vector.load %arg1[%15, %c0_9, %c0_10] : memref<8x8x1xf32, #tpu.memory_space<vmem>>, vector<1x8x1xf32>
    %17 = vector.shape_cast %16 : vector<1x8x1xf32> to vector<8x1xf32>
    %18 = vector.broadcast %17 : vector<8x1xf32> to vector<8x512xf32>
    %19 = arith.mulf %18, %4 : vector<8x512xf32>
    %20 = arith.addf %19, %7 : vector<8x512xf32>
    %21 = arith.truncf %14 : vector<8x128xf32> to vector<8x128xbf16>
    %cst_11 = arith.constant dense<0.000000e+00> : vector<8x512xf32>
    %22 = tpu.matmul %21, %0, %cst_11 {dimension_numbers = #tpu.dot_dimension_numbers<[1], [0], [0], [1], [0, 0, 1, 1], [], []>} : vector<8x128xbf16>, vector<128x512xbf16>, vector<8x512xf32> -> vector<8x512xf32>
    %23 = arith.addf %20, %22 : vector<8x512xf32>
    %24 = vector.extract_strided_slice %23 {offsets = [0, 0], sizes = [8, 128], strides = [1, 1]} : vector<8x512xf32> to vector<8x128xf32>
    %25 = arith.negf %24 : vector<8x128xf32>
    %26 = math.exp %25 : vector<8x128xf32>
    %cst_12 = arith.constant 1.000000e+00 : f32
    %27 = vector.broadcast %cst_12 : f32 to vector<8x128xf32>
    %28 = arith.addf %27, %26 : vector<8x128xf32>
    %29 = arith.divf %27, %28 : vector<8x128xf32>
    %30 = vector.extract_strided_slice %23 {offsets = [0, 128], sizes = [8, 128], strides = [1, 1]} : vector<8x512xf32> to vector<8x128xf32>
    %31 = arith.negf %30 : vector<8x128xf32>
    %32 = math.exp %31 : vector<8x128xf32>
    %cst_13 = arith.constant 1.000000e+00 : f32
    %33 = vector.broadcast %cst_13 : f32 to vector<8x128xf32>
    %34 = arith.addf %33, %32 : vector<8x128xf32>
    %35 = arith.divf %33, %34 : vector<8x128xf32>
    %36 = vector.extract_strided_slice %23 {offsets = [0, 256], sizes = [8, 128], strides = [1, 1]} : vector<8x512xf32> to vector<8x128xf32>
    %37 = math.tanh %36 : vector<8x128xf32>
    %38 = vector.extract_strided_slice %23 {offsets = [0, 384], sizes = [8, 128], strides = [1, 1]} : vector<8x512xf32> to vector<8x128xf32>
    %39 = arith.negf %38 : vector<8x128xf32>
    %40 = math.exp %39 : vector<8x128xf32>
    %cst_14 = arith.constant 1.000000e+00 : f32
    %41 = vector.broadcast %cst_14 : f32 to vector<8x128xf32>
    %42 = arith.addf %41, %40 : vector<8x128xf32>
    %43 = arith.divf %41, %42 : vector<8x128xf32>
    %44 = arith.mulf %35, %14 : vector<8x128xf32>
    %45 = arith.mulf %29, %37 : vector<8x128xf32>
    %46 = arith.addf %44, %45 : vector<8x128xf32>
    %47 = math.tanh %46 : vector<8x128xf32>
    %48 = arith.mulf %43, %47 : vector<8x128xf32>
    %c64_i32_15 = arith.constant 64 : i32
    %49 = tpu.dynamic_rotate %14 by %c64_i32_15 dim 1 : vector<8x128xf32>, i32 -> vector<8x128xf32>
    %50 = arith.select %13, %48, %49 : vector<8x128xi1>, vector<8x128xf32>
    %51 = arith.truncf %50 : vector<8x128xf32> to vector<8x128xbf16>
    %cst_16 = arith.constant dense<0.000000e+00> : vector<8x512xf32>
    %52 = tpu.matmul %51, %1, %cst_16 {dimension_numbers = #tpu.dot_dimension_numbers<[1], [0], [0], [1], [0, 0, 1, 1], [], []>} : vector<8x128xbf16>, vector<128x512xbf16>, vector<8x512xf32> -> vector<8x512xf32>
    %53 = arith.addf %10, %52 : vector<8x512xf32>
    %54 = vector.extract_strided_slice %53 {offsets = [0, 0], sizes = [8, 128], strides = [1, 1]} : vector<8x512xf32> to vector<8x128xf32>
    %55 = arith.negf %54 : vector<8x128xf32>
    %56 = math.exp %55 : vector<8x128xf32>
    %cst_17 = arith.constant 1.000000e+00 : f32
    %57 = vector.broadcast %cst_17 : f32 to vector<8x128xf32>
    %58 = arith.addf %57, %56 : vector<8x128xf32>
    %59 = arith.divf %57, %58 : vector<8x128xf32>
    %60 = vector.extract_strided_slice %53 {offsets = [0, 128], sizes = [8, 128], strides = [1, 1]} : vector<8x512xf32> to vector<8x128xf32>
    %61 = arith.negf %60 : vector<8x128xf32>
    %62 = math.exp %61 : vector<8x128xf32>
    %cst_18 = arith.constant 1.000000e+00 : f32
    %63 = vector.broadcast %cst_18 : f32 to vector<8x128xf32>
    %64 = arith.addf %63, %62 : vector<8x128xf32>
    %65 = arith.divf %63, %64 : vector<8x128xf32>
    %66 = vector.extract_strided_slice %53 {offsets = [0, 256], sizes = [8, 128], strides = [1, 1]} : vector<8x512xf32> to vector<8x128xf32>
    %67 = math.tanh %66 : vector<8x128xf32>
    %68 = vector.extract_strided_slice %53 {offsets = [0, 384], sizes = [8, 128], strides = [1, 1]} : vector<8x512xf32> to vector<8x128xf32>
    %69 = arith.negf %68 : vector<8x128xf32>
    %70 = math.exp %69 : vector<8x128xf32>
    %cst_19 = arith.constant 1.000000e+00 : f32
    %71 = vector.broadcast %cst_19 : f32 to vector<8x128xf32>
    %72 = arith.addf %71, %70 : vector<8x128xf32>
    %73 = arith.divf %71, %72 : vector<8x128xf32>
    %74 = arith.mulf %65, %14 : vector<8x128xf32>
    %75 = arith.mulf %59, %67 : vector<8x128xf32>
    %76 = arith.addf %74, %75 : vector<8x128xf32>
    %77 = math.tanh %76 : vector<8x128xf32>
    %78 = arith.mulf %73, %77 : vector<8x128xf32>
    %c1_i32 = arith.constant 1 : i32
    %79 = arith.index_cast %c1_i32 : i32 to index
    %c0_20 = arith.constant 0 : index
    %c0_21 = arith.constant 0 : index
    %80 = vector.load %arg1[%79, %c0_20, %c0_21] : memref<8x8x1xf32, #tpu.memory_space<vmem>>, vector<1x8x1xf32>
    %81 = vector.shape_cast %80 : vector<1x8x1xf32> to vector<8x1xf32>
    %82 = vector.broadcast %81 : vector<8x1xf32> to vector<8x512xf32>
    %83 = arith.mulf %82, %4 : vector<8x512xf32>
    %84 = arith.addf %83, %7 : vector<8x512xf32>
    %85 = arith.truncf %48 : vector<8x128xf32> to vector<8x128xbf16>
    %cst_22 = arith.constant dense<0.000000e+00> : vector<8x512xf32>
    %86 = tpu.matmul %85, %0, %cst_22 {dimension_numbers = #tpu.dot_dimension_numbers<[1], [0], [0], [1], [0, 0, 1, 1], [], []>} : vector<8x128xbf16>, vector<128x512xbf16>, vector<8x512xf32> -> vector<8x512xf32>
    %87 = arith.addf %84, %86 : vector<8x512xf32>
    %88 = vector.extract_strided_slice %87 {offsets = [0, 0], sizes = [8, 128], strides = [1, 1]} : vector<8x512xf32> to vector<8x128xf32>
    %89 = arith.negf %88 : vector<8x128xf32>
    %90 = math.exp %89 : vector<8x128xf32>
    %cst_23 = arith.constant 1.000000e+00 : f32
    %91 = vector.broadcast %cst_23 : f32 to vector<8x128xf32>
    %92 = arith.addf %91, %90 : vector<8x128xf32>
    %93 = arith.divf %91, %92 : vector<8x128xf32>
    %94 = vector.extract_strided_slice %87 {offsets = [0, 128], sizes = [8, 128], strides = [1, 1]} : vector<8x512xf32> to vector<8x128xf32>
    %95 = arith.negf %94 : vector<8x128xf32>
    %96 = math.exp %95 : vector<8x128xf32>
    %cst_24 = arith.constant 1.000000e+00 : f32
    %97 = vector.broadcast %cst_24 : f32 to vector<8x128xf32>
    %98 = arith.addf %97, %96 : vector<8x128xf32>
    %99 = arith.divf %97, %98 : vector<8x128xf32>
    %100 = vector.extract_strided_slice %87 {offsets = [0, 256], sizes = [8, 128], strides = [1, 1]} : vector<8x512xf32> to vector<8x128xf32>
    %101 = math.tanh %100 : vector<8x128xf32>
    %102 = vector.extract_strided_slice %87 {offsets = [0, 384], sizes = [8, 128], strides = [1, 1]} : vector<8x512xf32> to vector<8x128xf32>
    %103 = arith.negf %102 : vector<8x128xf32>
    %104 = math.exp %103 : vector<8x128xf32>
    %cst_25 = arith.constant 1.000000e+00 : f32
    %105 = vector.broadcast %cst_25 : f32 to vector<8x128xf32>
    %106 = arith.addf %105, %104 : vector<8x128xf32>
    %107 = arith.divf %105, %106 : vector<8x128xf32>
    %108 = arith.mulf %99, %46 : vector<8x128xf32>
    %109 = arith.mulf %93, %101 : vector<8x128xf32>
    %110 = arith.addf %108, %109 : vector<8x128xf32>
    %111 = math.tanh %110 : vector<8x128xf32>
    %112 = arith.mulf %107, %111 : vector<8x128xf32>
    %c64_i32_26 = arith.constant 64 : i32
    %113 = tpu.dynamic_rotate %78 by %c64_i32_26 dim 1 : vector<8x128xf32>, i32 -> vector<8x128xf32>
    %114 = arith.select %13, %112, %113 : vector<8x128xi1>, vector<8x128xf32>
    %115 = arith.truncf %114 : vector<8x128xf32> to vector<8x128xbf16>
    %cst_27 = arith.constant dense<0.000000e+00> : vector<8x512xf32>
    %116 = tpu.matmul %115, %1, %cst_27 {dimension_numbers = #tpu.dot_dimension_numbers<[1], [0], [0], [1], [0, 0, 1, 1], [], []>} : vector<8x128xbf16>, vector<128x512xbf16>, vector<8x512xf32> -> vector<8x512xf32>
    %117 = arith.addf %10, %116 : vector<8x512xf32>
    %118 = vector.extract_strided_slice %117 {offsets = [0, 0], sizes = [8, 128], strides = [1, 1]} : vector<8x512xf32> to vector<8x128xf32>
    %119 = arith.negf %118 : vector<8x128xf32>
    %120 = math.exp %119 : vector<8x128xf32>
    %cst_28 = arith.constant 1.000000e+00 : f32
    %121 = vector.broadcast %cst_28 : f32 to vector<8x128xf32>
    %122 = arith.addf %121, %120 : vector<8x128xf32>
    %123 = arith.divf %121, %122 : vector<8x128xf32>
    %124 = vector.extract_strided_slice %117 {offsets = [0, 128], sizes = [8, 128], strides = [1, 1]} : vector<8x512xf32> to vector<8x128xf32>
    %125 = arith.negf %124 : vector<8x128xf32>
    %126 = math.exp %125 : vector<8x128xf32>
    %cst_29 = arith.constant 1.000000e+00 : f32
    %127 = vector.broadcast %cst_29 : f32 to vector<8x128xf32>
    %128 = arith.addf %127, %126 : vector<8x128xf32>
    %129 = arith.divf %127, %128 : vector<8x128xf32>
    %130 = vector.extract_strided_slice %117 {offsets = [0, 256], sizes = [8, 128], strides = [1, 1]} : vector<8x512xf32> to vector<8x128xf32>
    %131 = math.tanh %130 : vector<8x128xf32>
    %132 = vector.extract_strided_slice %117 {offsets = [0, 384], sizes = [8, 128], strides = [1, 1]} : vector<8x512xf32> to vector<8x128xf32>
    %133 = arith.negf %132 : vector<8x128xf32>
    %134 = math.exp %133 : vector<8x128xf32>
    %cst_30 = arith.constant 1.000000e+00 : f32
    %135 = vector.broadcast %cst_30 : f32 to vector<8x128xf32>
    %136 = arith.addf %135, %134 : vector<8x128xf32>
    %137 = arith.divf %135, %136 : vector<8x128xf32>
    %138 = arith.mulf %129, %76 : vector<8x128xf32>
    %139 = arith.mulf %123, %131 : vector<8x128xf32>
    %140 = arith.addf %138, %139 : vector<8x128xf32>
    %141 = math.tanh %140 : vector<8x128xf32>
    %142 = arith.mulf %137, %141 : vector<8x128xf32>
    %c2_i32 = arith.constant 2 : i32
    %143 = arith.index_cast %c2_i32 : i32 to index
    %c0_31 = arith.constant 0 : index
    %c0_32 = arith.constant 0 : index
    %144 = vector.load %arg1[%143, %c0_31, %c0_32] : memref<8x8x1xf32, #tpu.memory_space<vmem>>, vector<1x8x1xf32>
    %145 = vector.shape_cast %144 : vector<1x8x1xf32> to vector<8x1xf32>
    %146 = vector.broadcast %145 : vector<8x1xf32> to vector<8x512xf32>
    %147 = arith.mulf %146, %4 : vector<8x512xf32>
    %148 = arith.addf %147, %7 : vector<8x512xf32>
    %149 = arith.truncf %112 : vector<8x128xf32> to vector<8x128xbf16>
    %cst_33 = arith.constant dense<0.000000e+00> : vector<8x512xf32>
    %150 = tpu.matmul %149, %0, %cst_33 {dimension_numbers = #tpu.dot_dimension_numbers<[1], [0], [0], [1], [0, 0, 1, 1], [], []>} : vector<8x128xbf16>, vector<128x512xbf16>, vector<8x512xf32> -> vector<8x512xf32>
    %151 = arith.addf %148, %150 : vector<8x512xf32>
    %152 = vector.extract_strided_slice %151 {offsets = [0, 0], sizes = [8, 128], strides = [1, 1]} : vector<8x512xf32> to vector<8x128xf32>
    %153 = arith.negf %152 : vector<8x128xf32>
    %154 = math.exp %153 : vector<8x128xf32>
    %cst_34 = arith.constant 1.000000e+00 : f32
    %155 = vector.broadcast %cst_34 : f32 to vector<8x128xf32>
    %156 = arith.addf %155, %154 : vector<8x128xf32>
    %157 = arith.divf %155, %156 : vector<8x128xf32>
    %158 = vector.extract_strided_slice %151 {offsets = [0, 128], sizes = [8, 128], strides = [1, 1]} : vector<8x512xf32> to vector<8x128xf32>
    %159 = arith.negf %158 : vector<8x128xf32>
    %160 = math.exp %159 : vector<8x128xf32>
    %cst_35 = arith.constant 1.000000e+00 : f32
    %161 = vector.broadcast %cst_35 : f32 to vector<8x128xf32>
    %162 = arith.addf %161, %160 : vector<8x128xf32>
    %163 = arith.divf %161, %162 : vector<8x128xf32>
    %164 = vector.extract_strided_slice %151 {offsets = [0, 256], sizes = [8, 128], strides = [1, 1]} : vector<8x512xf32> to vector<8x128xf32>
    %165 = math.tanh %164 : vector<8x128xf32>
    %166 = vector.extract_strided_slice %151 {offsets = [0, 384], sizes = [8, 128], strides = [1, 1]} : vector<8x512xf32> to vector<8x128xf32>
    %167 = arith.negf %166 : vector<8x128xf32>
    %168 = math.exp %167 : vector<8x128xf32>
    %cst_36 = arith.constant 1.000000e+00 : f32
    %169 = vector.broadcast %cst_36 : f32 to vector<8x128xf32>
    %170 = arith.addf %169, %168 : vector<8x128xf32>
    %171 = arith.divf %169, %170 : vector<8x128xf32>
    %172 = arith.mulf %163, %110 : vector<8x128xf32>
    %173 = arith.mulf %157, %165 : vector<8x128xf32>
    %174 = arith.addf %172, %173 : vector<8x128xf32>
    %175 = math.tanh %174 : vector<8x128xf32>
    %176 = arith.mulf %171, %175 : vector<8x128xf32>
    %c64_i32_37 = arith.constant 64 : i32
    %177 = tpu.dynamic_rotate %142 by %c64_i32_37 dim 1 : vector<8x128xf32>, i32 -> vector<8x128xf32>
    %178 = arith.select %13, %176, %177 : vector<8x128xi1>, vector<8x128xf32>
    %179 = arith.truncf %178 : vector<8x128xf32> to vector<8x128xbf16>
    %cst_38 = arith.constant dense<0.000000e+00> : vector<8x512xf32>
    %180 = tpu.matmul %179, %1, %cst_38 {dimension_numbers = #tpu.dot_dimension_numbers<[1], [0], [0], [1], [0, 0, 1, 1], [], []>} : vector<8x128xbf16>, vector<128x512xbf16>, vector<8x512xf32> -> vector<8x512xf32>
    %181 = arith.addf %10, %180 : vector<8x512xf32>
    %182 = vector.extract_strided_slice %181 {offsets = [0, 0], sizes = [8, 128], strides = [1, 1]} : vector<8x512xf32> to vector<8x128xf32>
    %183 = arith.negf %182 : vector<8x128xf32>
    %184 = math.exp %183 : vector<8x128xf32>
    %cst_39 = arith.constant 1.000000e+00 : f32
    %185 = vector.broadcast %cst_39 : f32 to vector<8x128xf32>
    %186 = arith.addf %185, %184 : vector<8x128xf32>
    %187 = arith.divf %185, %186 : vector<8x128xf32>
    %188 = vector.extract_strided_slice %181 {offsets = [0, 128], sizes = [8, 128], strides = [1, 1]} : vector<8x512xf32> to vector<8x128xf32>
    %189 = arith.negf %188 : vector<8x128xf32>
    %190 = math.exp %189 : vector<8x128xf32>
    %cst_40 = arith.constant 1.000000e+00 : f32
    %191 = vector.broadcast %cst_40 : f32 to vector<8x128xf32>
    %192 = arith.addf %191, %190 : vector<8x128xf32>
    %193 = arith.divf %191, %192 : vector<8x128xf32>
    %194 = vector.extract_strided_slice %181 {offsets = [0, 256], sizes = [8, 128], strides = [1, 1]} : vector<8x512xf32> to vector<8x128xf32>
    %195 = math.tanh %194 : vector<8x128xf32>
    %196 = vector.extract_strided_slice %181 {offsets = [0, 384], sizes = [8, 128], strides = [1, 1]} : vector<8x512xf32> to vector<8x128xf32>
    %197 = arith.negf %196 : vector<8x128xf32>
    %198 = math.exp %197 : vector<8x128xf32>
    %cst_41 = arith.constant 1.000000e+00 : f32
    %199 = vector.broadcast %cst_41 : f32 to vector<8x128xf32>
    %200 = arith.addf %199, %198 : vector<8x128xf32>
    %201 = arith.divf %199, %200 : vector<8x128xf32>
    %202 = arith.mulf %193, %140 : vector<8x128xf32>
    %203 = arith.mulf %187, %195 : vector<8x128xf32>
    %204 = arith.addf %202, %203 : vector<8x128xf32>
    %205 = math.tanh %204 : vector<8x128xf32>
    %206 = arith.mulf %201, %205 : vector<8x128xf32>
    %c3_i32 = arith.constant 3 : i32
    %207 = arith.index_cast %c3_i32 : i32 to index
    %c0_42 = arith.constant 0 : index
    %c0_43 = arith.constant 0 : index
    %208 = vector.load %arg1[%207, %c0_42, %c0_43] : memref<8x8x1xf32, #tpu.memory_space<vmem>>, vector<1x8x1xf32>
    %209 = vector.shape_cast %208 : vector<1x8x1xf32> to vector<8x1xf32>
    %210 = vector.broadcast %209 : vector<8x1xf32> to vector<8x512xf32>
    %211 = arith.mulf %210, %4 : vector<8x512xf32>
    %212 = arith.addf %211, %7 : vector<8x512xf32>
    %213 = arith.truncf %176 : vector<8x128xf32> to vector<8x128xbf16>
    %cst_44 = arith.constant dense<0.000000e+00> : vector<8x512xf32>
    %214 = tpu.matmul %213, %0, %cst_44 {dimension_numbers = #tpu.dot_dimension_numbers<[1], [0], [0], [1], [0, 0, 1, 1], [], []>} : vector<8x128xbf16>, vector<128x512xbf16>, vector<8x512xf32> -> vector<8x512xf32>
    %215 = arith.addf %212, %214 : vector<8x512xf32>
    %216 = vector.extract_strided_slice %215 {offsets = [0, 0], sizes = [8, 128], strides = [1, 1]} : vector<8x512xf32> to vector<8x128xf32>
    %217 = arith.negf %216 : vector<8x128xf32>
    %218 = math.exp %217 : vector<8x128xf32>
    %cst_45 = arith.constant 1.000000e+00 : f32
    %219 = vector.broadcast %cst_45 : f32 to vector<8x128xf32>
    %220 = arith.addf %219, %218 : vector<8x128xf32>
    %221 = arith.divf %219, %220 : vector<8x128xf32>
    %222 = vector.extract_strided_slice %215 {offsets = [0, 128], sizes = [8, 128], strides = [1, 1]} : vector<8x512xf32> to vector<8x128xf32>
    %223 = arith.negf %222 : vector<8x128xf32>
    %224 = math.exp %223 : vector<8x128xf32>
    %cst_46 = arith.constant 1.000000e+00 : f32
    %225 = vector.broadcast %cst_46 : f32 to vector<8x128xf32>
    %226 = arith.addf %225, %224 : vector<8x128xf32>
    %227 = arith.divf %225, %226 : vector<8x128xf32>
    %228 = vector.extract_strided_slice %215 {offsets = [0, 256], sizes = [8, 128], strides = [1, 1]} : vector<8x512xf32> to vector<8x128xf32>
    %229 = math.tanh %228 : vector<8x128xf32>
    %230 = vector.extract_strided_slice %215 {offsets = [0, 384], sizes = [8, 128], strides = [1, 1]} : vector<8x512xf32> to vector<8x128xf32>
    %231 = arith.negf %230 : vector<8x128xf32>
    %232 = math.exp %231 : vector<8x128xf32>
    %cst_47 = arith.constant 1.000000e+00 : f32
    %233 = vector.broadcast %cst_47 : f32 to vector<8x128xf32>
    %234 = arith.addf %233, %232 : vector<8x128xf32>
    %235 = arith.divf %233, %234 : vector<8x128xf32>
    %236 = arith.mulf %227, %174 : vector<8x128xf32>
    %237 = arith.mulf %221, %229 : vector<8x128xf32>
    %238 = arith.addf %236, %237 : vector<8x128xf32>
    %239 = math.tanh %238 : vector<8x128xf32>
    %240 = arith.mulf %235, %239 : vector<8x128xf32>
    %c64_i32_48 = arith.constant 64 : i32
    %241 = tpu.dynamic_rotate %206 by %c64_i32_48 dim 1 : vector<8x128xf32>, i32 -> vector<8x128xf32>
    %242 = arith.select %13, %240, %241 : vector<8x128xi1>, vector<8x128xf32>
    %243 = arith.truncf %242 : vector<8x128xf32> to vector<8x128xbf16>
    %cst_49 = arith.constant dense<0.000000e+00> : vector<8x512xf32>
    %244 = tpu.matmul %243, %1, %cst_49 {dimension_numbers = #tpu.dot_dimension_numbers<[1], [0], [0], [1], [0, 0, 1, 1], [], []>} : vector<8x128xbf16>, vector<128x512xbf16>, vector<8x512xf32> -> vector<8x512xf32>
    %245 = arith.addf %10, %244 : vector<8x512xf32>
    %246 = vector.extract_strided_slice %245 {offsets = [0, 0], sizes = [8, 128], strides = [1, 1]} : vector<8x512xf32> to vector<8x128xf32>
    %247 = arith.negf %246 : vector<8x128xf32>
    %248 = math.exp %247 : vector<8x128xf32>
    %cst_50 = arith.constant 1.000000e+00 : f32
    %249 = vector.broadcast %cst_50 : f32 to vector<8x128xf32>
    %250 = arith.addf %249, %248 : vector<8x128xf32>
    %251 = arith.divf %249, %250 : vector<8x128xf32>
    %252 = vector.extract_strided_slice %245 {offsets = [0, 128], sizes = [8, 128], strides = [1, 1]} : vector<8x512xf32> to vector<8x128xf32>
    %253 = arith.negf %252 : vector<8x128xf32>
    %254 = math.exp %253 : vector<8x128xf32>
    %cst_51 = arith.constant 1.000000e+00 : f32
    %255 = vector.broadcast %cst_51 : f32 to vector<8x128xf32>
    %256 = arith.addf %255, %254 : vector<8x128xf32>
    %257 = arith.divf %255, %256 : vector<8x128xf32>
    %258 = vector.extract_strided_slice %245 {offsets = [0, 256], sizes = [8, 128], strides = [1, 1]} : vector<8x512xf32> to vector<8x128xf32>
    %259 = math.tanh %258 : vector<8x128xf32>
    %260 = vector.extract_strided_slice %245 {offsets = [0, 384], sizes = [8, 128], strides = [1, 1]} : vector<8x512xf32> to vector<8x128xf32>
    %261 = arith.negf %260 : vector<8x128xf32>
    %262 = math.exp %261 : vector<8x128xf32>
    %cst_52 = arith.constant 1.000000e+00 : f32
    %263 = vector.broadcast %cst_52 : f32 to vector<8x128xf32>
    %264 = arith.addf %263, %262 : vector<8x128xf32>
    %265 = arith.divf %263, %264 : vector<8x128xf32>
    %266 = arith.mulf %257, %204 : vector<8x128xf32>
    %267 = arith.mulf %251, %259 : vector<8x128xf32>
    %268 = arith.addf %266, %267 : vector<8x128xf32>
    %269 = math.tanh %268 : vector<8x128xf32>
    %270 = arith.mulf %265, %269 : vector<8x128xf32>
    %c4_i32 = arith.constant 4 : i32
    %271 = arith.index_cast %c4_i32 : i32 to index
    %c0_53 = arith.constant 0 : index
    %c0_54 = arith.constant 0 : index
    %272 = vector.load %arg1[%271, %c0_53, %c0_54] : memref<8x8x1xf32, #tpu.memory_space<vmem>>, vector<1x8x1xf32>
    %273 = vector.shape_cast %272 : vector<1x8x1xf32> to vector<8x1xf32>
    %274 = vector.broadcast %273 : vector<8x1xf32> to vector<8x512xf32>
    %275 = arith.mulf %274, %4 : vector<8x512xf32>
    %276 = arith.addf %275, %7 : vector<8x512xf32>
    %277 = arith.truncf %240 : vector<8x128xf32> to vector<8x128xbf16>
    %cst_55 = arith.constant dense<0.000000e+00> : vector<8x512xf32>
    %278 = tpu.matmul %277, %0, %cst_55 {dimension_numbers = #tpu.dot_dimension_numbers<[1], [0], [0], [1], [0, 0, 1, 1], [], []>} : vector<8x128xbf16>, vector<128x512xbf16>, vector<8x512xf32> -> vector<8x512xf32>
    %279 = arith.addf %276, %278 : vector<8x512xf32>
    %280 = vector.extract_strided_slice %279 {offsets = [0, 0], sizes = [8, 128], strides = [1, 1]} : vector<8x512xf32> to vector<8x128xf32>
    %281 = arith.negf %280 : vector<8x128xf32>
    %282 = math.exp %281 : vector<8x128xf32>
    %cst_56 = arith.constant 1.000000e+00 : f32
    %283 = vector.broadcast %cst_56 : f32 to vector<8x128xf32>
    %284 = arith.addf %283, %282 : vector<8x128xf32>
    %285 = arith.divf %283, %284 : vector<8x128xf32>
    %286 = vector.extract_strided_slice %279 {offsets = [0, 128], sizes = [8, 128], strides = [1, 1]} : vector<8x512xf32> to vector<8x128xf32>
    %287 = arith.negf %286 : vector<8x128xf32>
    %288 = math.exp %287 : vector<8x128xf32>
    %cst_57 = arith.constant 1.000000e+00 : f32
    %289 = vector.broadcast %cst_57 : f32 to vector<8x128xf32>
    %290 = arith.addf %289, %288 : vector<8x128xf32>
    %291 = arith.divf %289, %290 : vector<8x128xf32>
    %292 = vector.extract_strided_slice %279 {offsets = [0, 256], sizes = [8, 128], strides = [1, 1]} : vector<8x512xf32> to vector<8x128xf32>
    %293 = math.tanh %292 : vector<8x128xf32>
    %294 = vector.extract_strided_slice %279 {offsets = [0, 384], sizes = [8, 128], strides = [1, 1]} : vector<8x512xf32> to vector<8x128xf32>
    %295 = arith.negf %294 : vector<8x128xf32>
    %296 = math.exp %295 : vector<8x128xf32>
    %cst_58 = arith.constant 1.000000e+00 : f32
    %297 = vector.broadcast %cst_58 : f32 to vector<8x128xf32>
    %298 = arith.addf %297, %296 : vector<8x128xf32>
    %299 = arith.divf %297, %298 : vector<8x128xf32>
    %300 = arith.mulf %291, %238 : vector<8x128xf32>
    %301 = arith.mulf %285, %293 : vector<8x128xf32>
    %302 = arith.addf %300, %301 : vector<8x128xf32>
    %303 = math.tanh %302 : vector<8x128xf32>
    %304 = arith.mulf %299, %303 : vector<8x128xf32>
    %c64_i32_59 = arith.constant 64 : i32
    %305 = tpu.dynamic_rotate %270 by %c64_i32_59 dim 1 : vector<8x128xf32>, i32 -> vector<8x128xf32>
    %306 = arith.select %13, %304, %305 : vector<8x128xi1>, vector<8x128xf32>
    %307 = arith.truncf %306 : vector<8x128xf32> to vector<8x128xbf16>
    %cst_60 = arith.constant dense<0.000000e+00> : vector<8x512xf32>
    %308 = tpu.matmul %307, %1, %cst_60 {dimension_numbers = #tpu.dot_dimension_numbers<[1], [0], [0], [1], [0, 0, 1, 1], [], []>} : vector<8x128xbf16>, vector<128x512xbf16>, vector<8x512xf32> -> vector<8x512xf32>
    %309 = arith.addf %10, %308 : vector<8x512xf32>
    %310 = vector.extract_strided_slice %309 {offsets = [0, 0], sizes = [8, 128], strides = [1, 1]} : vector<8x512xf32> to vector<8x128xf32>
    %311 = arith.negf %310 : vector<8x128xf32>
    %312 = math.exp %311 : vector<8x128xf32>
    %cst_61 = arith.constant 1.000000e+00 : f32
    %313 = vector.broadcast %cst_61 : f32 to vector<8x128xf32>
    %314 = arith.addf %313, %312 : vector<8x128xf32>
    %315 = arith.divf %313, %314 : vector<8x128xf32>
    %316 = vector.extract_strided_slice %309 {offsets = [0, 128], sizes = [8, 128], strides = [1, 1]} : vector<8x512xf32> to vector<8x128xf32>
    %317 = arith.negf %316 : vector<8x128xf32>
    %318 = math.exp %317 : vector<8x128xf32>
    %cst_62 = arith.constant 1.000000e+00 : f32
    %319 = vector.broadcast %cst_62 : f32 to vector<8x128xf32>
    %320 = arith.addf %319, %318 : vector<8x128xf32>
    %321 = arith.divf %319, %320 : vector<8x128xf32>
    %322 = vector.extract_strided_slice %309 {offsets = [0, 256], sizes = [8, 128], strides = [1, 1]} : vector<8x512xf32> to vector<8x128xf32>
    %323 = math.tanh %322 : vector<8x128xf32>
    %324 = vector.extract_strided_slice %309 {offsets = [0, 384], sizes = [8, 128], strides = [1, 1]} : vector<8x512xf32> to vector<8x128xf32>
    %325 = arith.negf %324 : vector<8x128xf32>
    %326 = math.exp %325 : vector<8x128xf32>
    %cst_63 = arith.constant 1.000000e+00 : f32
    %327 = vector.broadcast %cst_63 : f32 to vector<8x128xf32>
    %328 = arith.addf %327, %326 : vector<8x128xf32>
    %329 = arith.divf %327, %328 : vector<8x128xf32>
    %330 = arith.mulf %321, %268 : vector<8x128xf32>
    %331 = arith.mulf %315, %323 : vector<8x128xf32>
    %332 = arith.addf %330, %331 : vector<8x128xf32>
    %333 = math.tanh %332 : vector<8x128xf32>
    %334 = arith.mulf %329, %333 : vector<8x128xf32>
    %c5_i32 = arith.constant 5 : i32
    %335 = arith.index_cast %c5_i32 : i32 to index
    %c0_64 = arith.constant 0 : index
    %c0_65 = arith.constant 0 : index
    %336 = vector.load %arg1[%335, %c0_64, %c0_65] : memref<8x8x1xf32, #tpu.memory_space<vmem>>, vector<1x8x1xf32>
    %337 = vector.shape_cast %336 : vector<1x8x1xf32> to vector<8x1xf32>
    %338 = vector.broadcast %337 : vector<8x1xf32> to vector<8x512xf32>
    %339 = arith.mulf %338, %4 : vector<8x512xf32>
    %340 = arith.addf %339, %7 : vector<8x512xf32>
    %341 = arith.truncf %304 : vector<8x128xf32> to vector<8x128xbf16>
    %cst_66 = arith.constant dense<0.000000e+00> : vector<8x512xf32>
    %342 = tpu.matmul %341, %0, %cst_66 {dimension_numbers = #tpu.dot_dimension_numbers<[1], [0], [0], [1], [0, 0, 1, 1], [], []>} : vector<8x128xbf16>, vector<128x512xbf16>, vector<8x512xf32> -> vector<8x512xf32>
    %343 = arith.addf %340, %342 : vector<8x512xf32>
    %344 = vector.extract_strided_slice %343 {offsets = [0, 0], sizes = [8, 128], strides = [1, 1]} : vector<8x512xf32> to vector<8x128xf32>
    %345 = arith.negf %344 : vector<8x128xf32>
    %346 = math.exp %345 : vector<8x128xf32>
    %cst_67 = arith.constant 1.000000e+00 : f32
    %347 = vector.broadcast %cst_67 : f32 to vector<8x128xf32>
    %348 = arith.addf %347, %346 : vector<8x128xf32>
    %349 = arith.divf %347, %348 : vector<8x128xf32>
    %350 = vector.extract_strided_slice %343 {offsets = [0, 128], sizes = [8, 128], strides = [1, 1]} : vector<8x512xf32> to vector<8x128xf32>
    %351 = arith.negf %350 : vector<8x128xf32>
    %352 = math.exp %351 : vector<8x128xf32>
    %cst_68 = arith.constant 1.000000e+00 : f32
    %353 = vector.broadcast %cst_68 : f32 to vector<8x128xf32>
    %354 = arith.addf %353, %352 : vector<8x128xf32>
    %355 = arith.divf %353, %354 : vector<8x128xf32>
    %356 = vector.extract_strided_slice %343 {offsets = [0, 256], sizes = [8, 128], strides = [1, 1]} : vector<8x512xf32> to vector<8x128xf32>
    %357 = math.tanh %356 : vector<8x128xf32>
    %358 = vector.extract_strided_slice %343 {offsets = [0, 384], sizes = [8, 128], strides = [1, 1]} : vector<8x512xf32> to vector<8x128xf32>
    %359 = arith.negf %358 : vector<8x128xf32>
    %360 = math.exp %359 : vector<8x128xf32>
    %cst_69 = arith.constant 1.000000e+00 : f32
    %361 = vector.broadcast %cst_69 : f32 to vector<8x128xf32>
    %362 = arith.addf %361, %360 : vector<8x128xf32>
    %363 = arith.divf %361, %362 : vector<8x128xf32>
    %364 = arith.mulf %355, %302 : vector<8x128xf32>
    %365 = arith.mulf %349, %357 : vector<8x128xf32>
    %366 = arith.addf %364, %365 : vector<8x128xf32>
    %367 = math.tanh %366 : vector<8x128xf32>
    %368 = arith.mulf %363, %367 : vector<8x128xf32>
    %c64_i32_70 = arith.constant 64 : i32
    %369 = tpu.dynamic_rotate %334 by %c64_i32_70 dim 1 : vector<8x128xf32>, i32 -> vector<8x128xf32>
    %370 = arith.select %13, %368, %369 : vector<8x128xi1>, vector<8x128xf32>
    %371 = arith.truncf %370 : vector<8x128xf32> to vector<8x128xbf16>
    %cst_71 = arith.constant dense<0.000000e+00> : vector<8x512xf32>
    %372 = tpu.matmul %371, %1, %cst_71 {dimension_numbers = #tpu.dot_dimension_numbers<[1], [0], [0], [1], [0, 0, 1, 1], [], []>} : vector<8x128xbf16>, vector<128x512xbf16>, vector<8x512xf32> -> vector<8x512xf32>
    %373 = arith.addf %10, %372 : vector<8x512xf32>
    %374 = vector.extract_strided_slice %373 {offsets = [0, 0], sizes = [8, 128], strides = [1, 1]} : vector<8x512xf32> to vector<8x128xf32>
    %375 = arith.negf %374 : vector<8x128xf32>
    %376 = math.exp %375 : vector<8x128xf32>
    %cst_72 = arith.constant 1.000000e+00 : f32
    %377 = vector.broadcast %cst_72 : f32 to vector<8x128xf32>
    %378 = arith.addf %377, %376 : vector<8x128xf32>
    %379 = arith.divf %377, %378 : vector<8x128xf32>
    %380 = vector.extract_strided_slice %373 {offsets = [0, 128], sizes = [8, 128], strides = [1, 1]} : vector<8x512xf32> to vector<8x128xf32>
    %381 = arith.negf %380 : vector<8x128xf32>
    %382 = math.exp %381 : vector<8x128xf32>
    %cst_73 = arith.constant 1.000000e+00 : f32
    %383 = vector.broadcast %cst_73 : f32 to vector<8x128xf32>
    %384 = arith.addf %383, %382 : vector<8x128xf32>
    %385 = arith.divf %383, %384 : vector<8x128xf32>
    %386 = vector.extract_strided_slice %373 {offsets = [0, 256], sizes = [8, 128], strides = [1, 1]} : vector<8x512xf32> to vector<8x128xf32>
    %387 = math.tanh %386 : vector<8x128xf32>
    %388 = vector.extract_strided_slice %373 {offsets = [0, 384], sizes = [8, 128], strides = [1, 1]} : vector<8x512xf32> to vector<8x128xf32>
    %389 = arith.negf %388 : vector<8x128xf32>
    %390 = math.exp %389 : vector<8x128xf32>
    %cst_74 = arith.constant 1.000000e+00 : f32
    %391 = vector.broadcast %cst_74 : f32 to vector<8x128xf32>
    %392 = arith.addf %391, %390 : vector<8x128xf32>
    %393 = arith.divf %391, %392 : vector<8x128xf32>
    %394 = arith.mulf %385, %332 : vector<8x128xf32>
    %395 = arith.mulf %379, %387 : vector<8x128xf32>
    %396 = arith.addf %394, %395 : vector<8x128xf32>
    %397 = math.tanh %396 : vector<8x128xf32>
    %398 = arith.mulf %393, %397 : vector<8x128xf32>
    %c6_i32 = arith.constant 6 : i32
    %399 = arith.index_cast %c6_i32 : i32 to index
    %c0_75 = arith.constant 0 : index
    %c0_76 = arith.constant 0 : index
    %400 = vector.load %arg1[%399, %c0_75, %c0_76] : memref<8x8x1xf32, #tpu.memory_space<vmem>>, vector<1x8x1xf32>
    %401 = vector.shape_cast %400 : vector<1x8x1xf32> to vector<8x1xf32>
    %402 = vector.broadcast %401 : vector<8x1xf32> to vector<8x512xf32>
    %403 = arith.mulf %402, %4 : vector<8x512xf32>
    %404 = arith.addf %403, %7 : vector<8x512xf32>
    %405 = arith.truncf %368 : vector<8x128xf32> to vector<8x128xbf16>
    %cst_77 = arith.constant dense<0.000000e+00> : vector<8x512xf32>
    %406 = tpu.matmul %405, %0, %cst_77 {dimension_numbers = #tpu.dot_dimension_numbers<[1], [0], [0], [1], [0, 0, 1, 1], [], []>} : vector<8x128xbf16>, vector<128x512xbf16>, vector<8x512xf32> -> vector<8x512xf32>
    %407 = arith.addf %404, %406 : vector<8x512xf32>
    %408 = vector.extract_strided_slice %407 {offsets = [0, 0], sizes = [8, 128], strides = [1, 1]} : vector<8x512xf32> to vector<8x128xf32>
    %409 = arith.negf %408 : vector<8x128xf32>
    %410 = math.exp %409 : vector<8x128xf32>
    %cst_78 = arith.constant 1.000000e+00 : f32
    %411 = vector.broadcast %cst_78 : f32 to vector<8x128xf32>
    %412 = arith.addf %411, %410 : vector<8x128xf32>
    %413 = arith.divf %411, %412 : vector<8x128xf32>
    %414 = vector.extract_strided_slice %407 {offsets = [0, 128], sizes = [8, 128], strides = [1, 1]} : vector<8x512xf32> to vector<8x128xf32>
    %415 = arith.negf %414 : vector<8x128xf32>
    %416 = math.exp %415 : vector<8x128xf32>
    %cst_79 = arith.constant 1.000000e+00 : f32
    %417 = vector.broadcast %cst_79 : f32 to vector<8x128xf32>
    %418 = arith.addf %417, %416 : vector<8x128xf32>
    %419 = arith.divf %417, %418 : vector<8x128xf32>
    %420 = vector.extract_strided_slice %407 {offsets = [0, 256], sizes = [8, 128], strides = [1, 1]} : vector<8x512xf32> to vector<8x128xf32>
    %421 = math.tanh %420 : vector<8x128xf32>
    %422 = vector.extract_strided_slice %407 {offsets = [0, 384], sizes = [8, 128], strides = [1, 1]} : vector<8x512xf32> to vector<8x128xf32>
    %423 = arith.negf %422 : vector<8x128xf32>
    %424 = math.exp %423 : vector<8x128xf32>
    %cst_80 = arith.constant 1.000000e+00 : f32
    %425 = vector.broadcast %cst_80 : f32 to vector<8x128xf32>
    %426 = arith.addf %425, %424 : vector<8x128xf32>
    %427 = arith.divf %425, %426 : vector<8x128xf32>
    %428 = arith.mulf %419, %366 : vector<8x128xf32>
    %429 = arith.mulf %413, %421 : vector<8x128xf32>
    %430 = arith.addf %428, %429 : vector<8x128xf32>
    %431 = math.tanh %430 : vector<8x128xf32>
    %432 = arith.mulf %427, %431 : vector<8x128xf32>
    %c64_i32_81 = arith.constant 64 : i32
    %433 = tpu.dynamic_rotate %398 by %c64_i32_81 dim 1 : vector<8x128xf32>, i32 -> vector<8x128xf32>
    %434 = arith.select %13, %432, %433 : vector<8x128xi1>, vector<8x128xf32>
    %435 = arith.truncf %434 : vector<8x128xf32> to vector<8x128xbf16>
    %cst_82 = arith.constant dense<0.000000e+00> : vector<8x512xf32>
    %436 = tpu.matmul %435, %1, %cst_82 {dimension_numbers = #tpu.dot_dimension_numbers<[1], [0], [0], [1], [0, 0, 1, 1], [], []>} : vector<8x128xbf16>, vector<128x512xbf16>, vector<8x512xf32> -> vector<8x512xf32>
    %437 = arith.addf %10, %436 : vector<8x512xf32>
    %438 = vector.extract_strided_slice %437 {offsets = [0, 0], sizes = [8, 128], strides = [1, 1]} : vector<8x512xf32> to vector<8x128xf32>
    %439 = arith.negf %438 : vector<8x128xf32>
    %440 = math.exp %439 : vector<8x128xf32>
    %cst_83 = arith.constant 1.000000e+00 : f32
    %441 = vector.broadcast %cst_83 : f32 to vector<8x128xf32>
    %442 = arith.addf %441, %440 : vector<8x128xf32>
    %443 = arith.divf %441, %442 : vector<8x128xf32>
    %444 = vector.extract_strided_slice %437 {offsets = [0, 128], sizes = [8, 128], strides = [1, 1]} : vector<8x512xf32> to vector<8x128xf32>
    %445 = arith.negf %444 : vector<8x128xf32>
    %446 = math.exp %445 : vector<8x128xf32>
    %cst_84 = arith.constant 1.000000e+00 : f32
    %447 = vector.broadcast %cst_84 : f32 to vector<8x128xf32>
    %448 = arith.addf %447, %446 : vector<8x128xf32>
    %449 = arith.divf %447, %448 : vector<8x128xf32>
    %450 = vector.extract_strided_slice %437 {offsets = [0, 256], sizes = [8, 128], strides = [1, 1]} : vector<8x512xf32> to vector<8x128xf32>
    %451 = math.tanh %450 : vector<8x128xf32>
    %452 = vector.extract_strided_slice %437 {offsets = [0, 384], sizes = [8, 128], strides = [1, 1]} : vector<8x512xf32> to vector<8x128xf32>
    %453 = arith.negf %452 : vector<8x128xf32>
    %454 = math.exp %453 : vector<8x128xf32>
    %cst_85 = arith.constant 1.000000e+00 : f32
    %455 = vector.broadcast %cst_85 : f32 to vector<8x128xf32>
    %456 = arith.addf %455, %454 : vector<8x128xf32>
    %457 = arith.divf %455, %456 : vector<8x128xf32>
    %458 = arith.mulf %449, %396 : vector<8x128xf32>
    %459 = arith.mulf %443, %451 : vector<8x128xf32>
    %460 = arith.addf %458, %459 : vector<8x128xf32>
    %461 = math.tanh %460 : vector<8x128xf32>
    %462 = arith.mulf %457, %461 : vector<8x128xf32>
    %c7_i32 = arith.constant 7 : i32
    %463 = arith.index_cast %c7_i32 : i32 to index
    %c0_86 = arith.constant 0 : index
    %c0_87 = arith.constant 0 : index
    %464 = vector.load %arg1[%463, %c0_86, %c0_87] : memref<8x8x1xf32, #tpu.memory_space<vmem>>, vector<1x8x1xf32>
    %465 = vector.shape_cast %464 : vector<1x8x1xf32> to vector<8x1xf32>
    %466 = vector.broadcast %465 : vector<8x1xf32> to vector<8x512xf32>
    %467 = arith.mulf %466, %4 : vector<8x512xf32>
    %468 = arith.addf %467, %7 : vector<8x512xf32>
    %469 = arith.truncf %432 : vector<8x128xf32> to vector<8x128xbf16>
    %cst_88 = arith.constant dense<0.000000e+00> : vector<8x512xf32>
    %470 = tpu.matmul %469, %0, %cst_88 {dimension_numbers = #tpu.dot_dimension_numbers<[1], [0], [0], [1], [0, 0, 1, 1], [], []>} : vector<8x128xbf16>, vector<128x512xbf16>, vector<8x512xf32> -> vector<8x512xf32>
    %471 = arith.addf %468, %470 : vector<8x512xf32>
    %472 = vector.extract_strided_slice %471 {offsets = [0, 0], sizes = [8, 128], strides = [1, 1]} : vector<8x512xf32> to vector<8x128xf32>
    %473 = arith.negf %472 : vector<8x128xf32>
    %474 = math.exp %473 : vector<8x128xf32>
    %cst_89 = arith.constant 1.000000e+00 : f32
    %475 = vector.broadcast %cst_89 : f32 to vector<8x128xf32>
    %476 = arith.addf %475, %474 : vector<8x128xf32>
    %477 = arith.divf %475, %476 : vector<8x128xf32>
    %478 = vector.extract_strided_slice %471 {offsets = [0, 128], sizes = [8, 128], strides = [1, 1]} : vector<8x512xf32> to vector<8x128xf32>
    %479 = arith.negf %478 : vector<8x128xf32>
    %480 = math.exp %479 : vector<8x128xf32>
    %cst_90 = arith.constant 1.000000e+00 : f32
    %481 = vector.broadcast %cst_90 : f32 to vector<8x128xf32>
    %482 = arith.addf %481, %480 : vector<8x128xf32>
    %483 = arith.divf %481, %482 : vector<8x128xf32>
    %484 = vector.extract_strided_slice %471 {offsets = [0, 256], sizes = [8, 128], strides = [1, 1]} : vector<8x512xf32> to vector<8x128xf32>
    %485 = math.tanh %484 : vector<8x128xf32>
    %486 = vector.extract_strided_slice %471 {offsets = [0, 384], sizes = [8, 128], strides = [1, 1]} : vector<8x512xf32> to vector<8x128xf32>
    %487 = arith.negf %486 : vector<8x128xf32>
    %488 = math.exp %487 : vector<8x128xf32>
    %cst_91 = arith.constant 1.000000e+00 : f32
    %489 = vector.broadcast %cst_91 : f32 to vector<8x128xf32>
    %490 = arith.addf %489, %488 : vector<8x128xf32>
    %491 = arith.divf %489, %490 : vector<8x128xf32>
    %492 = arith.mulf %483, %430 : vector<8x128xf32>
    %493 = arith.mulf %477, %485 : vector<8x128xf32>
    %494 = arith.addf %492, %493 : vector<8x128xf32>
    %495 = math.tanh %494 : vector<8x128xf32>
    %496 = arith.mulf %491, %495 : vector<8x128xf32>
    %c64_i32_92 = arith.constant 64 : i32
    %497 = tpu.dynamic_rotate %462 by %c64_i32_92 dim 1 : vector<8x128xf32>, i32 -> vector<8x128xf32>
    %498 = arith.select %13, %496, %497 : vector<8x128xi1>, vector<8x128xf32>
    %499 = arith.truncf %498 : vector<8x128xf32> to vector<8x128xbf16>
    %cst_93 = arith.constant dense<0.000000e+00> : vector<8x512xf32>
    %500 = tpu.matmul %499, %1, %cst_93 {dimension_numbers = #tpu.dot_dimension_numbers<[1], [0], [0], [1], [0, 0, 1, 1], [], []>} : vector<8x128xbf16>, vector<128x512xbf16>, vector<8x512xf32> -> vector<8x512xf32>
    %501 = arith.addf %10, %500 : vector<8x512xf32>
    %502 = vector.extract_strided_slice %501 {offsets = [0, 0], sizes = [8, 128], strides = [1, 1]} : vector<8x512xf32> to vector<8x128xf32>
    %503 = arith.negf %502 : vector<8x128xf32>
    %504 = math.exp %503 : vector<8x128xf32>
    %cst_94 = arith.constant 1.000000e+00 : f32
    %505 = vector.broadcast %cst_94 : f32 to vector<8x128xf32>
    %506 = arith.addf %505, %504 : vector<8x128xf32>
    %507 = arith.divf %505, %506 : vector<8x128xf32>
    %508 = vector.extract_strided_slice %501 {offsets = [0, 128], sizes = [8, 128], strides = [1, 1]} : vector<8x512xf32> to vector<8x128xf32>
    %509 = arith.negf %508 : vector<8x128xf32>
    %510 = math.exp %509 : vector<8x128xf32>
    %cst_95 = arith.constant 1.000000e+00 : f32
    %511 = vector.broadcast %cst_95 : f32 to vector<8x128xf32>
    %512 = arith.addf %511, %510 : vector<8x128xf32>
    %513 = arith.divf %511, %512 : vector<8x128xf32>
    %514 = vector.extract_strided_slice %501 {offsets = [0, 256], sizes = [8, 128], strides = [1, 1]} : vector<8x512xf32> to vector<8x128xf32>
    %515 = math.tanh %514 : vector<8x128xf32>
    %516 = vector.extract_strided_slice %501 {offsets = [0, 384], sizes = [8, 128], strides = [1, 1]} : vector<8x512xf32> to vector<8x128xf32>
    %517 = arith.negf %516 : vector<8x128xf32>
    %518 = math.exp %517 : vector<8x128xf32>
    %cst_96 = arith.constant 1.000000e+00 : f32
    %519 = vector.broadcast %cst_96 : f32 to vector<8x128xf32>
    %520 = arith.addf %519, %518 : vector<8x128xf32>
    %521 = arith.divf %519, %520 : vector<8x128xf32>
    %522 = arith.mulf %513, %460 : vector<8x128xf32>
    %523 = arith.mulf %507, %515 : vector<8x128xf32>
    %524 = arith.addf %522, %523 : vector<8x128xf32>
    %525 = math.tanh %524 : vector<8x128xf32>
    %526 = arith.mulf %521, %525 : vector<8x128xf32>
    %c8_i32 = arith.constant 8 : i32
    %527 = arith.truncf %526 : vector<8x128xf32> to vector<8x128xbf16>
    %c0_97 = arith.constant 0 : index
    %c0_98 = arith.constant 0 : index
    %528 = vector.load %arg7[%c0_97, %c0_98] : memref<128x128xbf16, #tpu.memory_space<vmem>>, vector<128x128xbf16>
    %cst_99 = arith.constant dense<0.000000e+00> : vector<8x128xf32>
    %529 = tpu.matmul %527, %528, %cst_99 {dimension_numbers = #tpu.dot_dimension_numbers<[1], [0], [0], [1], [0, 0, 1, 1], [], []>} : vector<8x128xbf16>, vector<128x128xbf16>, vector<8x128xf32> -> vector<8x128xf32>
    %c0_100 = arith.constant 0 : index
    %c0_101 = arith.constant 0 : index
    %530 = vector.load %arg8[%c0_100, %c0_101] : memref<1x128xf32, #tpu.memory_space<vmem>>, vector<1x128xf32>
    %531 = vector.broadcast %530 : vector<1x128xf32> to vector<8x128xf32>
    %532 = arith.addf %529, %531 : vector<8x128xf32>
    %c0_102 = arith.constant 0 : index
    %c0_103 = arith.constant 0 : index
    %533 = vector.load %arg9[%c0_102, %c0_103] : memref<8x128xf32, #tpu.memory_space<vmem>>, vector<8x128xf32>
    tpu.vector_store %arg9[%c0_102, %c0_103], %532 {strides = array<i32>} : memref<8x128xf32, #tpu.memory_space<vmem>>, vector<8x128xf32>,
    return
  }
  func.func @transform_0(%arg0: i32) -> (i32, i32, i32) {
    %c0_i32 = arith.constant 0 : i32
    %c0_i32_0 = arith.constant 0 : i32
    %c0_i32_1 = arith.constant 0 : i32
    return %c0_i32, %arg0, %c0_i32_0 : i32, i32, i32
  }
  func.func @transform_1(%arg0: i32) -> (i32, i32) {
    %c0_i32 = arith.constant 0 : i32
    %c0_i32_0 = arith.constant 0 : i32
    %c0_i32_1 = arith.constant 0 : i32
    return %c0_i32, %c0_i32_0 : i32, i32
  }
  func.func @transform_2(%arg0: i32) -> (i32, i32) {
    %c0_i32 = arith.constant 0 : i32
    %c0_i32_0 = arith.constant 0 : i32
    %c0_i32_1 = arith.constant 0 : i32
    return %c0_i32, %c0_i32_0 : i32, i32
  }
  func.func @transform_3(%arg0: i32) -> (i32, i32) {
    %c0_i32 = arith.constant 0 : i32
    %c0_i32_0 = arith.constant 0 : i32
    %c0_i32_1 = arith.constant 0 : i32
    return %c0_i32, %c0_i32_0 : i32, i32
  }
  func.func @transform_4(%arg0: i32) -> (i32, i32) {
    %c0_i32 = arith.constant 0 : i32
    %c0_i32_0 = arith.constant 0 : i32
    %c0_i32_1 = arith.constant 0 : i32
    return %c0_i32, %c0_i32_0 : i32, i32
  }
  func.func @transform_5(%arg0: i32) -> (i32, i32) {
    %c0_i32 = arith.constant 0 : i32
    %c0_i32_0 = arith.constant 0 : i32
    %c0_i32_1 = arith.constant 0 : i32
    return %c0_i32, %c0_i32_0 : i32, i32
  }
  func.func @transform_6(%arg0: i32) -> (i32, i32) {
    %c0_i32 = arith.constant 0 : i32
    %c0_i32_0 = arith.constant 0 : i32
    %c0_i32_1 = arith.constant 0 : i32
    return %c0_i32, %c0_i32_0 : i32, i32
  }
  func.func @transform_7(%arg0: i32) -> (i32, i32) {
    %c0_i32 = arith.constant 0 : i32
    %c0_i32_0 = arith.constant 0 : i32
    %c0_i32_1 = arith.constant 0 : i32
    return %c0_i32, %c0_i32_0 : i32, i32
  }
  func.func @transform_8(%arg0: i32) -> (i32, i32) {
    %c0_i32 = arith.constant 0 : i32
    %c0_i32_0 = arith.constant 0 : i32
    return %arg0, %c0_i32 : i32, i32
  }
}

</mosaic_0001>

<llo_original>
// kernel: model_forward.1
$region0: #{model_forward.1}
  #allocation0 [shape = 'u32[]', space=smem, size = 0x4, offset = 0x4, fixed_abs, tag = 'smem constant byte address 0x4 - core index']
  #allocation1 [shape = 'u32[144,128]{1,0:T(1,128)}', space=vmem, size = 0x12000, scoped, tag = 'internal scratch']
  %s0 = inlined_call_operand.vmem [shape: f32[8,8,1], index: 0, kind: input, shape index: {}]
  %s1 = inlined_call_operand.vmem [shape: f32[1,512], index: 1, kind: input, shape index: {}]
  %s2 = inlined_call_operand.vmem [shape: f32[1,512], index: 2, kind: input, shape index: {}]
  %s3 = inlined_call_operand.hbm [shape: bf16[128,512], index: 3, kind: input, shape index: {}]
  %s4 = inlined_call_operand.hbm [shape: bf16[128,512], index: 4, kind: input, shape index: {}]
  %s5 = inlined_call_operand.vmem [shape: f32[1,512], index: 5, kind: input, shape index: {}]
  %s6 = inlined_call_operand.vmem [shape: bf16[128,128], index: 6, kind: input, shape index: {}]
  %s7 = inlined_call_operand.vmem [shape: f32[1,128], index: 7, kind: input, shape index: {}]
  %s8 = inlined_call_operand.vmem [shape: f32[8,128], index: 8, kind: output, shape index: {}]
  %s9 = sld [smem:[#allocation0]]
  $region50: #{model_forward.1} parent=0
    _
  %s11 = ssub.s32 1, %s9
  %s12 = scalar_select 0, %s11, %s9
  $region1: #{model_forward.1} parent=0
    #allocation2 [shape = 'u8[131072]{0}', space=vmem, size = 0x20000, scoped, tag = 'input window, operand 3, single buffered']
    #allocation3 [shape = 's32[1]{0}', space=sflag, size = 0x4, scoped, tag = 'scoped memory for model_forward.1']
    #allocation4 [shape = 'u8[131072]{0}', space=vmem, size = 0x20000, scoped, tag = 'input window, operand 4, single buffered']
    #allocation5 [shape = 's32[1]{0}', space=sflag, size = 0x4, scoped, tag = 'scoped memory for model_forward.1']
    %13 = vsyncpa [#allocation3], 0
    %14 = vsyncpa [#allocation5], 0
    // Predicated region
    $region2: #{model_forward.1} parent=1 // pred_check
      _
    $region3: #{model_forward.1} parent=1 // pred_check_branch
      %16 = sbr.rel (0) target = $region5
    $region4: #{model_forward.1} parent=1 // pred_region
      _
    $region5: #{model_forward.1} parent=1 // pred_fallthru
      _
    // Predicated region
    $region6: #{model_forward.1} parent=1 // pred_check
      _
    $region7: #{model_forward.1} parent=1 // pred_check_branch
      %18 = sbr.rel (0) target = $region9
    $region8: #{model_forward.1} parent=1 // pred_region
      _
    $region9: #{model_forward.1} parent=1 // pred_fallthru
      _
    // Predicated region
    $region10: #{model_forward.1} parent=1 // pred_check
      _
    $region11: #{model_forward.1} parent=1 // pred_check_branch
      %20 = sbr.rel (0) target = $region13
    $region12: #{model_forward.1} parent=1 // pred_region
      _
    $region13: #{model_forward.1} parent=1 // pred_fallthru
      _
    // Predicated region
    $region14: #{model_forward.1} parent=1 // pred_check
      _
    $region15: #{model_forward.1} parent=1 // pred_check_branch
      %22 = sbr.rel (0) target = $region17
    $region16: #{model_forward.1} parent=1 // pred_region
      %s24 = ssub.s32 4096, 4096
      %25 = vsyncadd [#allocation3], %s24
      %s26 = sshll.u32 [#allocation2], 4
      %s27 = int_to_ptr.vmem [resolvable:$true] %s26
      %32 = dma.hbm_to_vmem [thread:$0]  %s3, 4096, %s27, [#allocation3], 256, 256, 16
    $region17: #{model_forward.1} parent=1 // pred_fallthru
      _
    // Predicated region
    $region18: #{model_forward.1} parent=1 // pred_check
      _
    $region19: #{model_forward.1} parent=1 // pred_check_branch
      %34 = sbr.rel (0) target = $region21
    $region20: #{model_forward.1} parent=1 // pred_region
      %s36 = ssub.s32 4096, 4096
      %37 = vsyncadd [#allocation5], %s36
      %s38 = sshll.u32 [#allocation4], 4
      %s39 = int_to_ptr.vmem [resolvable:$true] %s38
      %44 = dma.hbm_to_vmem [thread:$0]  %s4, 4096, %s39, [#allocation5], 256, 256, 16
    $region21: #{model_forward.1} parent=1 // pred_fallthru
      _
    // Predicated region
    $region22: #{model_forward.1} parent=1 // pred_check
      _
    $region23: #{model_forward.1} parent=1 // pred_check_branch
      %46 = sbr.rel (0) target = $region25
    $region24: #{model_forward.1} parent=1 // pred_region
      _
    $region25: #{model_forward.1} parent=1 // pred_fallthru
      _
    // Predicated region
    $region26: #{model_forward.1} parent=1 // pred_check
      _
    $region27: #{model_forward.1} parent=1 // pred_check_branch
      %48 = sbr.rel (0) target = $region29
    $region28: #{model_forward.1} parent=1 // pred_region
      _
    $region29: #{model_forward.1} parent=1 // pred_fallthru
      _
    // Predicated region
    $region30: #{model_forward.1} parent=1 // pred_check
      _
    $region31: #{model_forward.1} parent=1 // pred_check_branch
      %50 = sbr.rel (0) target = $region33
    $region32: #{model_forward.1} parent=1 // pred_region
      _
    $region33: #{model_forward.1} parent=1 // pred_fallthru
      _
    // Predicated region
    $region34: #{model_forward.1} parent=1 // pred_check
      _
    $region35: #{model_forward.1} parent=1 // pred_check_branch
      %52 = sbr.rel (0) target = $region37
    $region36: #{model_forward.1} parent=1 // pred_region
      %53 = dma.done [#allocation3], 4096
    $region37: #{model_forward.1} parent=1 // pred_fallthru
      _
    // Predicated region
    $region38: #{model_forward.1} parent=1 // pred_check
      _
    $region39: #{model_forward.1} parent=1 // pred_check_branch
      %55 = sbr.rel (0) target = $region41
    $region40: #{model_forward.1} parent=1 // pred_region
      %56 = dma.done [#allocation5], 4096
    $region41: #{model_forward.1} parent=1 // pred_fallthru
      _
    %v58 = vld [vmem:[#allocation2] sm:$0xff]
    %v59 = vld [vmem:[#allocation2 + $0x8] sm:$0xff]
    %v60 = vld [vmem:[#allocation2 + $0x10] sm:$0xff]
    %v61 = vld [vmem:[#allocation2 + $0x18] sm:$0xff]
    %v62 = vld [vmem:[#allocation2 + $0x20] sm:$0xff]
    %v63 = vld [vmem:[#allocation2 + $0x28] sm:$0xff]
    %v64 = vld [vmem:[#allocation2 + $0x30] sm:$0xff]
    %v65 = vld [vmem:[#allocation2 + $0x38] sm:$0xff]
    %v66 = vld [vmem:[#allocation2 + $0x40] sm:$0xff]
    %v67 = vld [vmem:[#allocation2 + $0x48] sm:$0xff]
    %v68 = vld [vmem:[#allocation2 + $0x50] sm:$0xff]
    %v69 = vld [vmem:[#allocation2 + $0x58] sm:$0xff]
    %v70 = vld [vmem:[#allocation2 + $0x60] sm:$0xff]
    %v71 = vld [vmem:[#allocation2 + $0x68] sm:$0xff]
    %v72 = vld [vmem:[#allocation2 + $0x70] sm:$0xff]
    %v73 = vld [vmem:[#allocation2 + $0x78] sm:$0xff]
    %v74 = vld [vmem:[#allocation2 + $0x80] sm:$0xff]
    %v75 = vld [vmem:[#allocation2 + $0x88] sm:$0xff]
    %v76 = vld [vmem:[#allocation2 + $0x90] sm:$0xff]
    %v77 = vld [vmem:[#allocation2 + $0x98] sm:$0xff]
    %v78 = vld [vmem:[#allocation2 + $0xa0] sm:$0xff]
    %v79 = vld [vmem:[#allocation2 + $0xa8] sm:$0xff]
    %v80 = vld [vmem:[#allocation2 + $0xb0] sm:$0xff]
    %v81 = vld [vmem:[#allocation2 + $0xb8] sm:$0xff]
    %v82 = vld [vmem:[#allocation2 + $0xc0] sm:$0xff]
    %v83 = vld [vmem:[#allocation2 + $0xc8] sm:$0xff]
    %v84 = vld [vmem:[#allocation2 + $0xd0] sm:$0xff]
    %v85 = vld [vmem:[#allocation2 + $0xd8] sm:$0xff]
    %v86 = vld [vmem:[#allocation2 + $0xe0] sm:$0xff]
    %v87 = vld [vmem:[#allocation2 + $0xe8] sm:$0xff]
    %v88 = vld [vmem:[#allocation2 + $0xf0] sm:$0xff]
    %v89 = vld [vmem:[#allocation2 + $0xf8] sm:$0xff]
    %v90 = vld [vmem:[#allocation4] sm:$0xff]
    %v91 = vld [vmem:[#allocation4 + $0x8] sm:$0xff]
    %v92 = vld [vmem:[#allocation4 + $0x10] sm:$0xff]
    %v93 = vld [vmem:[#allocation4 + $0x18] sm:$0xff]
    %v94 = vld [vmem:[#allocation4 + $0x20] sm:$0xff]
    %v95 = vld [vmem:[#allocation4 + $0x28] sm:$0xff]
    %v96 = vld [vmem:[#allocation4 + $0x30] sm:$0xff]
    %v97 = vld [vmem:[#allocation4 + $0x38] sm:$0xff]
    %v98 = vld [vmem:[#allocation4 + $0x40] sm:$0xff]
    %v99 = vld [vmem:[#allocation4 + $0x48] sm:$0xff]
    %v100 = vld [vmem:[#allocation4 + $0x50] sm:$0xff]
    %v101 = vld [vmem:[#allocation4 + $0x58] sm:$0xff]
    %v102 = vld [vmem:[#allocation4 + $0x60] sm:$0xff]
    %v103 = vld [vmem:[#allocation4 + $0x68] sm:$0xff]
    %v104 = vld [vmem:[#allocation4 + $0x70] sm:$0xff]
    %v105 = vld [vmem:[#allocation4 + $0x78] sm:$0xff]
    %v106 = vld [vmem:[#allocation4 + $0x80] sm:$0xff]
    %v107 = vld [vmem:[#allocation4 + $0x88] sm:$0xff]
    %v108 = vld [vmem:[#allocation4 + $0x90] sm:$0xff]
    %v109 = vld [vmem:[#allocation4 + $0x98] sm:$0xff]
    %v110 = vld [vmem:[#allocation4 + $0xa0] sm:$0xff]
    %v111 = vld [vmem:[#allocation4 + $0xa8] sm:$0xff]
    %v112 = vld [vmem:[#allocation4 + $0xb0] sm:$0xff]
    %v113 = vld [vmem:[#allocation4 + $0xb8] sm:$0xff]
    %v114 = vld [vmem:[#allocation4 + $0xc0] sm:$0xff]
    %v115 = vld [vmem:[#allocation4 + $0xc8] sm:$0xff]
    %v116 = vld [vmem:[#allocation4 + $0xd0] sm:$0xff]
    %v117 = vld [vmem:[#allocation4 + $0xd8] sm:$0xff]
    %v118 = vld [vmem:[#allocation4 + $0xe0] sm:$0xff]
    %v119 = vld [vmem:[#allocation4 + $0xe8] sm:$0xff]
    %v120 = vld [vmem:[#allocation4 + $0xf0] sm:$0xff]
    %v121 = vld [vmem:[#allocation4 + $0xf8] sm:$0xff]
    %v122 = vld [vmem:[%s1] sm:$0xf]
    %v124 = vlaneseq
    %v125 = vshrl.u32 %v124, 7
    %v126 = vsub.s32 0, %v125
    %v127 = vrot.slane %v122, %v126
    %v128 = vlaneseq
    %v129 = vshrl.u32 %v128, 7
    %v130 = vsub.s32 1, %v129
    %v131 = vrot.slane %v122, %v130
    %v132 = vlaneseq
    %v133 = vshrl.u32 %v132, 7
    %v134 = vsub.s32 2, %v133
    %v135 = vrot.slane %v122, %v134
    %v136 = vlaneseq
    %v137 = vshrl.u32 %v136, 7
    %v138 = vsub.s32 3, %v137
    %v139 = vrot.slane %v122, %v138
    %v144 = vld [vmem:[%s2] sm:$0xf]
    %v146 = vlaneseq
    %v147 = vshrl.u32 %v146, 7
    %v148 = vsub.s32 0, %v147
    %v149 = vrot.slane %v144, %v148
    %v150 = vlaneseq
    %v151 = vshrl.u32 %v150, 7
    %v152 = vsub.s32 1, %v151
    %v153 = vrot.slane %v144, %v152
    %v154 = vlaneseq
    %v155 = vshrl.u32 %v154, 7
    %v156 = vsub.s32 2, %v155
    %v157 = vrot.slane %v144, %v156
    %v158 = vlaneseq
    %v159 = vshrl.u32 %v158, 7
    %v160 = vsub.s32 3, %v159
    %v161 = vrot.slane %v144, %v160
    %v166 = vld [vmem:[%s5] sm:$0xf]
    %v168 = vlaneseq
    %v169 = vshrl.u32 %v168, 7
    %v170 = vsub.s32 0, %v169
    %v171 = vrot.slane %v166, %v170
    %v172 = vlaneseq
    %v173 = vshrl.u32 %v172, 7
    %v174 = vsub.s32 1, %v173
    %v175 = vrot.slane %v166, %v174
    %v176 = vlaneseq
    %v177 = vshrl.u32 %v176, 7
    %v178 = vsub.s32 2, %v177
    %v179 = vrot.slane %v166, %v178
    %v180 = vlaneseq
    %v181 = vshrl.u32 %v180, 7
    %v182 = vsub.s32 3, %v181
    %v183 = vrot.slane %v166, %v182
    %v188 = vlaneseq
    %v189 = vand.u32 %v188, 127
    %vm190 = vcmp.lt.s32.totalorder %v189, 64
    %v191 = vld [vmem:[%s0] sm:$0xff]
    %193 = vset.pattern.permute.xlu0 0
    %194 = vperm.xlu0 %193, %v191
    %v195 = vpop.permute.xlu0 %194
    %v197 = vmul.f32 %v195, %v127
    %v198 = vmul.f32 %v195, %v131
    %v199 = vmul.f32 %v195, %v135
    %v200 = vmul.f32 %v195, %v139
    %v201 = vadd.f32 %v197, %v149
    %v202 = vadd.f32 %v198, %v153
    %v203 = vadd.f32 %v199, %v157
    %v204 = vadd.f32 %v200, %v161
    %v237 = vunpack.c.l.b16 %v58
    %v238 = vunpack.c.h.b16 %v58
    %v239 = vunpack.c.l.b16 %v59
    %v240 = vunpack.c.h.b16 %v59
    %v241 = vunpack.c.l.b16 %v60
    %v242 = vunpack.c.h.b16 %v60
    %v243 = vunpack.c.l.b16 %v61
    %v244 = vunpack.c.h.b16 %v61
    %v245 = vunpack.c.l.b16 %v62
    %v246 = vunpack.c.h.b16 %v62
    %v247 = vunpack.c.l.b16 %v63
    %v248 = vunpack.c.h.b16 %v63
    %v249 = vunpack.c.l.b16 %v64
    %v250 = vunpack.c.h.b16 %v64
    %v251 = vunpack.c.l.b16 %v65
    %v252 = vunpack.c.h.b16 %v65
    %v253 = vunpack.c.l.b16 %v66
    %v254 = vunpack.c.h.b16 %v66
    %v255 = vunpack.c.l.b16 %v67
    %v256 = vunpack.c.h.b16 %v67
    %v257 = vunpack.c.l.b16 %v68
    %v258 = vunpack.c.h.b16 %v68
    %v259 = vunpack.c.l.b16 %v69
    %v260 = vunpack.c.h.b16 %v69
    %v261 = vunpack.c.l.b16 %v70
    %v262 = vunpack.c.h.b16 %v70
    %v263 = vunpack.c.l.b16 %v71
    %v264 = vunpack.c.h.b16 %v71
    %v265 = vunpack.c.l.b16 %v72
    %v266 = vunpack.c.h.b16 %v72
    %v267 = vunpack.c.l.b16 %v73
    %v268 = vunpack.c.h.b16 %v73
    %v269 = vunpack.c.l.b16 %v74
    %v270 = vunpack.c.h.b16 %v74
    %v271 = vunpack.c.l.b16 %v75
    %v272 = vunpack.c.h.b16 %v75
    %v273 = vunpack.c.l.b16 %v76
    %v274 = vunpack.c.h.b16 %v76
    %v275 = vunpack.c.l.b16 %v77
    %v276 = vunpack.c.h.b16 %v77
    %v277 = vunpack.c.l.b16 %v78
    %v278 = vunpack.c.h.b16 %v78
    %v279 = vunpack.c.l.b16 %v79
    %v280 = vunpack.c.h.b16 %v79
    %v281 = vunpack.c.l.b16 %v80
    %v282 = vunpack.c.h.b16 %v80
    %v283 = vunpack.c.l.b16 %v81
    %v284 = vunpack.c.h.b16 %v81
    %v285 = vunpack.c.l.b16 %v82
    %v286 = vunpack.c.h.b16 %v82
    %v287 = vunpack.c.l.b16 %v83
    %v288 = vunpack.c.h.b16 %v83
    %v289 = vunpack.c.l.b16 %v84
    %v290 = vunpack.c.h.b16 %v84
    %v291 = vunpack.c.l.b16 %v85
    %v292 = vunpack.c.h.b16 %v85
    %v293 = vunpack.c.l.b16 %v86
    %v294 = vunpack.c.h.b16 %v86
    %v295 = vunpack.c.l.b16 %v87
    %v296 = vunpack.c.h.b16 %v87
    %v297 = vunpack.c.l.b16 %v88
    %v298 = vunpack.c.h.b16 %v88
    %v299 = vunpack.c.l.b16 %v89
    %v300 = vunpack.c.h.b16 %v89
    %v301 = vpack.c.b16 %v241, %v237
    %v302 = vpack.c.b16 %v242, %v238
    %v303 = vpack.c.b16 %v243, %v239
    %v304 = vpack.c.b16 %v244, %v240
    %v305 = vpack.c.b16 %v249, %v245
    %v306 = vpack.c.b16 %v250, %v246
    %v307 = vpack.c.b16 %v251, %v247
    %v308 = vpack.c.b16 %v252, %v248
    %v309 = vpack.c.b16 %v257, %v253
    %v310 = vpack.c.b16 %v258, %v254
    %v311 = vpack.c.b16 %v259, %v255
    %v312 = vpack.c.b16 %v260, %v256
    %v313 = vpack.c.b16 %v265, %v261
    %v314 = vpack.c.b16 %v266, %v262
    %v315 = vpack.c.b16 %v267, %v263
    %v316 = vpack.c.b16 %v268, %v264
    %v317 = vpack.c.b16 %v273, %v269
    %v318 = vpack.c.b16 %v274, %v270
    %v319 = vpack.c.b16 %v275, %v271
    %v320 = vpack.c.b16 %v276, %v272
    %v321 = vpack.c.b16 %v281, %v277
    %v322 = vpack.c.b16 %v282, %v278
    %v323 = vpack.c.b16 %v283, %v279
    %v324 = vpack.c.b16 %v284, %v280
    %v325 = vpack.c.b16 %v289, %v285
    %v326 = vpack.c.b16 %v290, %v286
    %v327 = vpack.c.b16 %v291, %v287
    %v328 = vpack.c.b16 %v292, %v288
    %v329 = vpack.c.b16 %v297, %v293
    %v330 = vpack.c.b16 %v298, %v294
    %v331 = vpack.c.b16 %v299, %v295
    %v332 = vpack.c.b16 %v300, %v296
    %365 = vmatprep.subr.bf16.mxu0 %v302
    %366 = vmatpush1.bf16.msra.mxu0 %v301
    %367 = vmatprep.subr.bf16.mxu0 %v306
    %368 = vmatpush1.bf16.msra.mxu0 %v305
    %369 = vmatprep.subr.bf16.mxu0 %v310
    %370 = vmatpush1.bf16.msra.mxu0 %v309
    %371 = vmatprep.subr.bf16.mxu0 %v314
    %372 = vmatpush1.bf16.msra.mxu0 %v313
    %373 = vmatprep.subr.bf16.mxu0 %v318
    %374 = vmatpush1.bf16.msra.mxu0 %v317
    %375 = vmatprep.subr.bf16.mxu0 %v322
    %376 = vmatpush1.bf16.msra.mxu0 %v321
    %377 = vmatprep.subr.bf16.mxu0 %v326
    %378 = vmatpush1.bf16.msra.mxu0 %v325
    %379 = vmatprep.subr.bf16.mxu0 %v330
    %380 = vmatpush1.bf16.msra.mxu0 %v329
    %381 = vmatprep.subr.bf16.mxu0 0
    %382 = vmatpush1.bf16.msra.mxu0 0
    %383 = vmatprep.subr.bf16.mxu0 0
    %384 = vmatpush1.bf16.msra.mxu0 0
    %385 = vmatprep.subr.bf16.mxu0 0
    %386 = vmatpush1.bf16.msra.mxu0 0
    %387 = vmatprep.subr.bf16.mxu0 0
    %388 = vmatpush1.bf16.msra.mxu0 0
    %389 = vmatprep.subr.bf16.mxu0 0
    %390 = vmatpush1.bf16.msra.mxu0 0
    %391 = vmatprep.subr.bf16.mxu0 0
    %392 = vmatpush1.bf16.msra.mxu0 0
    %393 = vmatprep.subr.bf16.mxu0 0
    %394 = vmatpush1.bf16.msra.mxu0 0
    %395 = vmatprep.subr.bf16.mxu0 0
    %396 = vmatpush1.bf16.msra.mxu0 0
    %397 = vmatprep.mubr.bf16.mxu0 0
    %398 = vmatmul.mubr.bf16.gmra.mrb[0].mxu0 0
    %v399 = vpop.f32.mrb[0].mxu0
    %v400 = vadd.f32 0.0, %v399
    %v401 = vpop.f32.mrb[0].mxu0
    %v402 = vadd.f32 0.0, %v401
    %v403 = vpop.f32.mrb[0].mxu0
    %v404 = vpop.f32.mrb[0].mxu0
    %405 = vdwg.mxu0
    %406 = vmatprep.subr.bf16.mxu0 %v304
    %407 = vmatpush1.bf16.msra.mxu0 %v303
    %408 = vmatprep.subr.bf16.mxu0 %v308
    %409 = vmatpush1.bf16.msra.mxu0 %v307
    %410 = vmatprep.subr.bf16.mxu0 %v312
    %411 = vmatpush1.bf16.msra.mxu0 %v311
    %412 = vmatprep.subr.bf16.mxu0 %v316
    %413 = vmatpush1.bf16.msra.mxu0 %v315
    %414 = vmatprep.subr.bf16.mxu0 %v320
    %415 = vmatpush1.bf16.msra.mxu0 %v319
    %416 = vmatprep.subr.bf16.mxu0 %v324
    %417 = vmatpush1.bf16.msra.mxu0 %v323
    %418 = vmatprep.subr.bf16.mxu0 %v328
    %419 = vmatpush1.bf16.msra.mxu0 %v327
    %420 = vmatprep.subr.bf16.mxu0 %v332
    %421 = vmatpush1.bf16.msra.mxu0 %v331
    %422 = vmatprep.subr.bf16.mxu0 0
    %423 = vmatpush1.bf16.msra.mxu0 0
    %424 = vmatprep.subr.bf16.mxu0 0
    %425 = vmatpush1.bf16.msra.mxu0 0
    %426 = vmatprep.subr.bf16.mxu0 0
    %427 = vmatpush1.bf16.msra.mxu0 0
    %428 = vmatprep.subr.bf16.mxu0 0
    %429 = vmatpush1.bf16.msra.mxu0 0
    %430 = vmatprep.subr.bf16.mxu0 0
    %431 = vmatpush1.bf16.msra.mxu0 0
    %432 = vmatprep.subr.bf16.mxu0 0
    %433 = vmatpush1.bf16.msra.mxu0 0
    %434 = vmatprep.subr.bf16.mxu0 0
    %435 = vmatpush1.bf16.msra.mxu0 0
    %436 = vmatprep.subr.bf16.mxu0 0
    %437 = vmatpush1.bf16.msra.mxu0 0
    %438 = vmatprep.mubr.bf16.mxu0 0
    %439 = vmatmul.mubr.bf16.gmra.mrb[0].mxu0 0
    %v440 = vpop.f32.mrb[0].mxu0
    %v441 = vadd.f32 0.0, %v440
    %v442 = vpop.f32.mrb[0].mxu0
    %v443 = vadd.f32 0.0, %v442
    %v444 = vpop.f32.mrb[0].mxu0
    %v445 = vpop.f32.mrb[0].mxu0
    %446 = vdwg.mxu0
    %v447 = vadd.f32 %v201, %v400
    %v448 = vadd.f32 %v202, %v402
    %v449 = vadd.f32 %v203, %v441
    %v450 = vadd.f32 %v204, %v443
    %v451 = vxor.u32 %v447, 2147483648
    %v452 = vmul.f32 %v451, 1.442695
    %v453 = vpow.pop %v452
    %v454 = vadd.f32 %v453, 1.0
    %v455 = vrcp.pop %v454
    %v456 = vmul.f32 1.0, %v455
    %v457 = vxor.u32 %v448, 2147483648
    %v458 = vmul.f32 %v457, 1.442695
    %v459 = vpow.pop %v458
    %v460 = vadd.f32 %v459, 1.0
    %v461 = vrcp.pop %v460
    %v462 = vmul.f32 1.0, %v461
    %v463 = vtanh.pop %v449
    %v464 = vxor.u32 %v450, 2147483648
    %v465 = vmul.f32 %v464, 1.442695
    %v466 = vpow.pop %v465
    %v467 = vadd.f32 %v466, 1.0
    %v468 = vrcp.pop %v467
    %v469 = vmul.f32 1.0, %v468
    %v470 = vmul.f32 %v462, 0.0
    %v471 = vmul.f32 %v456, %v463
    %v472 = vadd.f32 %v470, %v471
    %v473 = vtanh.pop %v472
    %v474 = vmul.f32 %v469, %v473
    %475 = vrot.lane.b32.xlu0 0.0, 64
    %v476 = vpop.permute.xlu0 %475
    %v477 = vsel %vm190, %v474, %v476
    %v478 = vpack.c.bf16 %v477, %v477
    %v511 = vunpack.c.l.b16 %v90
    %v512 = vunpack.c.h.b16 %v90
    %v513 = vunpack.c.l.b16 %v91
    %v514 = vunpack.c.h.b16 %v91
    %v515 = vunpack.c.l.b16 %v92
    %v516 = vunpack.c.h.b16 %v92
    %v517 = vunpack.c.l.b16 %v93
    %v518 = vunpack.c.h.b16 %v93
    %v519 = vunpack.c.l.b16 %v94
    %v520 = vunpack.c.h.b16 %v94
    %v521 = vunpack.c.l.b16 %v95
    %v522 = vunpack.c.h.b16 %v95
    %v523 = vunpack.c.l.b16 %v96
    %v524 = vunpack.c.h.b16 %v96
    %v525 = vunpack.c.l.b16 %v97
    %v526 = vunpack.c.h.b16 %v97
    %v527 = vunpack.c.l.b16 %v98
    %v528 = vunpack.c.h.b16 %v98
    %v529 = vunpack.c.l.b16 %v99
    %v530 = vunpack.c.h.b16 %v99
    %v531 = vunpack.c.l.b16 %v100
    %v532 = vunpack.c.h.b16 %v100
    %v533 = vunpack.c.l.b16 %v101
    %v534 = vunpack.c.h.b16 %v101
    %v535 = vunpack.c.l.b16 %v102
    %v536 = vunpack.c.h.b16 %v102
    %v537 = vunpack.c.l.b16 %v103
    %v538 = vunpack.c.h.b16 %v103
    %v539 = vunpack.c.l.b16 %v104
    %v540 = vunpack.c.h.b16 %v104
    %v541 = vunpack.c.l.b16 %v105
    %v542 = vunpack.c.h.b16 %v105
    %v543 = vunpack.c.l.b16 %v106
    %v544 = vunpack.c.h.b16 %v106
    %v545 = vunpack.c.l.b16 %v107
    %v546 = vunpack.c.h.b16 %v107
    %v547 = vunpack.c.l.b16 %v108
    %v548 = vunpack.c.h.b16 %v108
    %v549 = vunpack.c.l.b16 %v109
    %v550 = vunpack.c.h.b16 %v109
    %v551 = vunpack.c.l.b16 %v110
    %v552 = vunpack.c.h.b16 %v110
    %v553 = vunpack.c.l.b16 %v111
    %v554 = vunpack.c.h.b16 %v111
    %v555 = vunpack.c.l.b16 %v112
    %v556 = vunpack.c.h.b16 %v112
    %v557 = vunpack.c.l.b16 %v113
    %v558 = vunpack.c.h.b16 %v113
    %v559 = vunpack.c.l.b16 %v114
    %v560 = vunpack.c.h.b16 %v114
    %v561 = vunpack.c.l.b16 %v115
    %v562 = vunpack.c.h.b16 %v115
    %v563 = vunpack.c.l.b16 %v116
    %v564 = vunpack.c.h.b16 %v116
    %v565 = vunpack.c.l.b16 %v117
    %v566 = vunpack.c.h.b16 %v117
    %v567 = vunpack.c.l.b16 %v118
    %v568 = vunpack.c.h.b16 %v118
    %v569 = vunpack.c.l.b16 %v119
    %v570 = vunpack.c.h.b16 %v119
    %v571 = vunpack.c.l.b16 %v120
    %v572 = vunpack.c.h.b16 %v120
    %v573 = vunpack.c.l.b16 %v121
    %v574 = vunpack.c.h.b16 %v121
    %v575 = vpack.c.b16 %v515, %v511
    %v576 = vpack.c.b16 %v516, %v512
    %v577 = vpack.c.b16 %v517, %v513
    %v578 = vpack.c.b16 %v518, %v514
    %v579 = vpack.c.b16 %v523, %v519
    %v580 = vpack.c.b16 %v524, %v520
    %v581 = vpack.c.b16 %v525, %v521
    %v582 = vpack.c.b16 %v526, %v522
    %v583 = vpack.c.b16 %v531, %v527
    %v584 = vpack.c.b16 %v532, %v528
    %v585 = vpack.c.b16 %v533, %v529
    %v586 = vpack.c.b16 %v534, %v530
    %v587 = vpack.c.b16 %v539, %v535
    %v588 = vpack.c.b16 %v540, %v536
    %v589 = vpack.c.b16 %v541, %v537
    %v590 = vpack.c.b16 %v542, %v538
    %v591 = vpack.c.b16 %v547, %v543
    %v592 = vpack.c.b16 %v548, %v544
    %v593 = vpack.c.b16 %v549, %v545
    %v594 = vpack.c.b16 %v550, %v546
    %v595 = vpack.c.b16 %v555, %v551
    %v596 = vpack.c.b16 %v556, %v552
    %v597 = vpack.c.b16 %v557, %v553
    %v598 = vpack.c.b16 %v558, %v554
    %v599 = vpack.c.b16 %v563, %v559
    %v600 = vpack.c.b16 %v564, %v560
    %v601 = vpack.c.b16 %v565, %v561
    %v602 = vpack.c.b16 %v566, %v562
    %v603 = vpack.c.b16 %v571, %v567
    %v604 = vpack.c.b16 %v572, %v568
    %v605 = vpack.c.b16 %v573, %v569
    %v606 = vpack.c.b16 %v574, %v570
    %639 = vmatprep.subr.bf16.mxu0 %v576
    %640 = vmatpush1.bf16.msra.mxu0 %v575
    %641 = vmatprep.subr.bf16.mxu0 %v580
    %642 = vmatpush1.bf16.msra.mxu0 %v579
    %643 = vmatprep.subr.bf16.mxu0 %v584
    %644 = vmatpush1.bf16.msra.mxu0 %v583
    %645 = vmatprep.subr.bf16.mxu0 %v588
    %646 = vmatpush1.bf16.msra.mxu0 %v587
    %647 = vmatprep.subr.bf16.mxu0 %v592
    %648 = vmatpush1.bf16.msra.mxu0 %v591
    %649 = vmatprep.subr.bf16.mxu0 %v596
    %650 = vmatpush1.bf16.msra.mxu0 %v595
    %651 = vmatprep.subr.bf16.mxu0 %v600
    %652 = vmatpush1.bf16.msra.mxu0 %v599
    %653 = vmatprep.subr.bf16.mxu0 %v604
    %654 = vmatpush1.bf16.msra.mxu0 %v603
    %655 = vmatprep.subr.bf16.mxu0 0
    %656 = vmatpush1.bf16.msra.mxu0 0
    %657 = vmatprep.subr.bf16.mxu0 0
    %658 = vmatpush1.bf16.msra.mxu0 0
    %659 = vmatprep.subr.bf16.mxu0 0
    %660 = vmatpush1.bf16.msra.mxu0 0
    %661 = vmatprep.subr.bf16.mxu0 0
    %662 = vmatpush1.bf16.msra.mxu0 0
    %663 = vmatprep.subr.bf16.mxu0 0
    %664 = vmatpush1.bf16.msra.mxu0 0
    %665 = vmatprep.subr.bf16.mxu0 0
    %666 = vmatpush1.bf16.msra.mxu0 0
    %667 = vmatprep.subr.bf16.mxu0 0
    %668 = vmatpush1.bf16.msra.mxu0 0
    %669 = vmatprep.subr.bf16.mxu0 0
    %670 = vmatpush1.bf16.msra.mxu0 0
    %671 = vmatprep.mubr.bf16.mxu0 0
    %672 = vmatmul.mubr.bf16.gmra.mrb[0].mxu0 %v478
    %v673 = vpop.f32.mrb[0].mxu0
    %v674 = vadd.f32 0.0, %v673
    %v675 = vpop.f32.mrb[0].mxu0
    %v676 = vadd.f32 0.0, %v675
    %v677 = vpop.f32.mrb[0].mxu0
    %v678 = vpop.f32.mrb[0].mxu0
    %679 = vdwg.mxu0
    %680 = vmatprep.subr.bf16.mxu0 %v578
    %681 = vmatpush1.bf16.msra.mxu0 %v577
    %682 = vmatprep.subr.bf16.mxu0 %v582
    %683 = vmatpush1.bf16.msra.mxu0 %v581
    %684 = vmatprep.subr.bf16.mxu0 %v586
    %685 = vmatpush1.bf16.msra.mxu0 %v585
    %686 = vmatprep.subr.bf16.mxu0 %v590
    %687 = vmatpush1.bf16.msra.mxu0 %v589
    %688 = vmatprep.subr.bf16.mxu0 %v594
    %689 = vmatpush1.bf16.msra.mxu0 %v593
    %690 = vmatprep.subr.bf16.mxu0 %v598
    %691 = vmatpush1.bf16.msra.mxu0 %v597
    %692 = vmatprep.subr.bf16.mxu0 %v602
    %693 = vmatpush1.bf16.msra.mxu0 %v601
    %694 = vmatprep.subr.bf16.mxu0 %v606
    %695 = vmatpush1.bf16.msra.mxu0 %v605
    %696 = vmatprep.subr.bf16.mxu0 0
    %697 = vmatpush1.bf16.msra.mxu0 0
    %698 = vmatprep.subr.bf16.mxu0 0
    %699 = vmatpush1.bf16.msra.mxu0 0
    %700 = vmatprep.subr.bf16.mxu0 0
    %701 = vmatpush1.bf16.msra.mxu0 0
    %702 = vmatprep.subr.bf16.mxu0 0
    %703 = vmatpush1.bf16.msra.mxu0 0
    %704 = vmatprep.subr.bf16.mxu0 0
    %705 = vmatpush1.bf16.msra.mxu0 0
    %706 = vmatprep.subr.bf16.mxu0 0
    %707 = vmatpush1.bf16.msra.mxu0 0
    %708 = vmatprep.subr.bf16.mxu0 0
    %709 = vmatpush1.bf16.msra.mxu0 0
    %710 = vmatprep.subr.bf16.mxu0 0
    %711 = vmatpush1.bf16.msra.mxu0 0
    %712 = vmatprep.mubr.bf16.mxu0 0
    %713 = vmatmul.mubr.bf16.gmra.mrb[0].mxu0 %v478
    %v714 = vpop.f32.mrb[0].mxu0
    %v715 = vadd.f32 0.0, %v714
    %v716 = vpop.f32.mrb[0].mxu0
    %v717 = vadd.f32 0.0, %v716
    %v718 = vpop.f32.mrb[0].mxu0
    %v719 = vpop.f32.mrb[0].mxu0
    %720 = vdwg.mxu0
    %v721 = vadd.f32 %v171, %v674
    %v722 = vadd.f32 %v175, %v676
    %v723 = vadd.f32 %v179, %v715
    %v724 = vadd.f32 %v183, %v717
    %v725 = vxor.u32 %v721, 2147483648
    %v726 = vmul.f32 %v725, 1.442695
    %v727 = vpow.pop %v726
    %v728 = vadd.f32 %v727, 1.0
    %v729 = vrcp.pop %v728
    %v730 = vmul.f32 1.0, %v729
    %v731 = vxor.u32 %v722, 2147483648
    %v732 = vmul.f32 %v731, 1.442695
    %v733 = vpow.pop %v732
    %v734 = vadd.f32 %v733, 1.0
    %v735 = vrcp.pop %v734
    %v736 = vmul.f32 1.0, %v735
    %v737 = vtanh.pop %v723
    %v738 = vxor.u32 %v724, 2147483648
    %v739 = vmul.f32 %v738, 1.442695
    %v740 = vpow.pop %v739
    %v741 = vadd.f32 %v740, 1.0
    %v742 = vrcp.pop %v741
    %v743 = vmul.f32 1.0, %v742
    %v744 = vmul.f32 %v736, 0.0
    %v745 = vmul.f32 %v730, %v737
    %v746 = vadd.f32 %v744, %v745
    %v747 = vtanh.pop %v746
    %v748 = vmul.f32 %v743, %v747
    %s749 = scalar_lea.vmem %s0, 8
    %v750 = vld [vmem:[%s749] sm:$0xff]
    %752 = vset.pattern.permute.xlu0 0
    %753 = vperm.xlu0 %752, %v750
    %v754 = vpop.permute.xlu0 %753
    %v756 = vmul.f32 %v754, %v127
    %v757 = vmul.f32 %v754, %v131
    %v758 = vmul.f32 %v754, %v135
    %v759 = vmul.f32 %v754, %v139
    %v760 = vadd.f32 %v756, %v149
    %v761 = vadd.f32 %v757, %v153
    %v762 = vadd.f32 %v758, %v157
    %v763 = vadd.f32 %v759, %v161
    %v764 = vpack.c.bf16 %v474, %v474
    %765 = vmatprep.subr.bf16.mxu0 %v302
    %766 = vmatpush1.bf16.msra.mxu0 %v301
    %767 = vmatprep.subr.bf16.mxu0 %v306
    %768 = vmatpush1.bf16.msra.mxu0 %v305
    %769 = vmatprep.subr.bf16.mxu0 %v310
    %770 = vmatpush1.bf16.msra.mxu0 %v309
    %771 = vmatprep.subr.bf16.mxu0 %v314
    %772 = vmatpush1.bf16.msra.mxu0 %v313
    %773 = vmatprep.subr.bf16.mxu0 %v318
    %774 = vmatpush1.bf16.msra.mxu0 %v317
    %775 = vmatprep.subr.bf16.mxu0 %v322
    %776 = vmatpush1.bf16.msra.mxu0 %v321
    %777 = vmatprep.subr.bf16.mxu0 %v326
    %778 = vmatpush1.bf16.msra.mxu0 %v325
    %779 = vmatprep.subr.bf16.mxu0 %v330
    %780 = vmatpush1.bf16.msra.mxu0 %v329
    %781 = vmatprep.subr.bf16.mxu0 0
    %782 = vmatpush1.bf16.msra.mxu0 0
    %783 = vmatprep.subr.bf16.mxu0 0
    %784 = vmatpush1.bf16.msra.mxu0 0
    %785 = vmatprep.subr.bf16.mxu0 0
    %786 = vmatpush1.bf16.msra.mxu0 0
    %787 = vmatprep.subr.bf16.mxu0 0
    %788 = vmatpush1.bf16.msra.mxu0 0
    %789 = vmatprep.subr.bf16.mxu0 0
    %790 = vmatpush1.bf16.msra.mxu0 0
    %791 = vmatprep.subr.bf16.mxu0 0
    %792 = vmatpush1.bf16.msra.mxu0 0
    %793 = vmatprep.subr.bf16.mxu0 0
    %794 = vmatpush1.bf16.msra.mxu0 0
    %795 = vmatprep.subr.bf16.mxu0 0
    %796 = vmatpush1.bf16.msra.mxu0 0
    %797 = vmatprep.mubr.bf16.mxu0 0
    %798 = vmatmul.mubr.bf16.gmra.mrb[0].mxu0 %v764
    %v799 = vpop.f32.mrb[0].mxu0
    %v800 = vadd.f32 0.0, %v799
    %v801 = vpop.f32.mrb[0].mxu0
    %v802 = vadd.f32 0.0, %v801
    %v803 = vpop.f32.mrb[0].mxu0
    %v804 = vpop.f32.mrb[0].mxu0
    %805 = vdwg.mxu0
    %806 = vmatprep.subr.bf16.mxu0 %v304
    %807 = vmatpush1.bf16.msra.mxu0 %v303
    %808 = vmatprep.subr.bf16.mxu0 %v308
    %809 = vmatpush1.bf16.msra.mxu0 %v307
    %810 = vmatprep.subr.bf16.mxu0 %v312
    %811 = vmatpush1.bf16.msra.mxu0 %v311
    %812 = vmatprep.subr.bf16.mxu0 %v316
    %813 = vmatpush1.bf16.msra.mxu0 %v315
    %814 = vmatprep.subr.bf16.mxu0 %v320
    %815 = vmatpush1.bf16.msra.mxu0 %v319
    %816 = vmatprep.subr.bf16.mxu0 %v324
    %817 = vmatpush1.bf16.msra.mxu0 %v323
    %818 = vmatprep.subr.bf16.mxu0 %v328
    %819 = vmatpush1.bf16.msra.mxu0 %v327
    %820 = vmatprep.subr.bf16.mxu0 %v332
    %821 = vmatpush1.bf16.msra.mxu0 %v331
    %822 = vmatprep.subr.bf16.mxu0 0
    %823 = vmatpush1.bf16.msra.mxu0 0
    %824 = vmatprep.subr.bf16.mxu0 0
    %825 = vmatpush1.bf16.msra.mxu0 0
    %826 = vmatprep.subr.bf16.mxu0 0
    %827 = vmatpush1.bf16.msra.mxu0 0
    %828 = vmatprep.subr.bf16.mxu0 0
    %829 = vmatpush1.bf16.msra.mxu0 0
    %830 = vmatprep.subr.bf16.mxu0 0
    %831 = vmatpush1.bf16.msra.mxu0 0
    %832 = vmatprep.subr.bf16.mxu0 0
    %833 = vmatpush1.bf16.msra.mxu0 0
    %834 = vmatprep.subr.bf16.mxu0 0
    %835 = vmatpush1.bf16.msra.mxu0 0
    %836 = vmatprep.subr.bf16.mxu0 0
    %837 = vmatpush1.bf16.msra.mxu0 0
    %838 = vmatprep.mubr.bf16.mxu0 0
    %839 = vmatmul.mubr.bf16.gmra.mrb[0].mxu0 %v764
    %v840 = vpop.f32.mrb[0].mxu0
    %v841 = vadd.f32 0.0, %v840
    %v842 = vpop.f32.mrb[0].mxu0
    %v843 = vadd.f32 0.0, %v842
    %v844 = vpop.f32.mrb[0].mxu0
    %v845 = vpop.f32.mrb[0].mxu0
    %846 = vdwg.mxu0
    %v847 = vadd.f32 %v760, %v800
    %v848 = vadd.f32 %v761, %v802
    %v849 = vadd.f32 %v762, %v841
    %v850 = vadd.f32 %v763, %v843
    %v851 = vxor.u32 %v847, 2147483648
    %v852 = vmul.f32 %v851, 1.442695
    %v853 = vpow.pop %v852
    %v854 = vadd.f32 %v853, 1.0
    %v855 = vrcp.pop %v854
    %v856 = vmul.f32 1.0, %v855
    %v857 = vxor.u32 %v848, 2147483648
    %v858 = vmul.f32 %v857, 1.442695
    %v859 = vpow.pop %v858
    %v860 = vadd.f32 %v859, 1.0
    %v861 = vrcp.pop %v860
    %v862 = vmul.f32 1.0, %v861
    %v863 = vtanh.pop %v849
    %v864 = vxor.u32 %v850, 2147483648
    %v865 = vmul.f32 %v864, 1.442695
    %v866 = vpow.pop %v865
    %v867 = vadd.f32 %v866, 1.0
    %v868 = vrcp.pop %v867
    %v869 = vmul.f32 1.0, %v868
    %v870 = vmul.f32 %v862, %v472
    %v871 = vmul.f32 %v856, %v863
    %v872 = vadd.f32 %v870, %v871
    %v873 = vtanh.pop %v872
    %v874 = vmul.f32 %v869, %v873
    %875 = vrot.lane.b32.xlu0 %v748, 64
    %v876 = vpop.permute.xlu0 %875
    %v877 = vsel %vm190, %v874, %v876
    %v878 = vpack.c.bf16 %v877, %v877
    %879 = vmatprep.subr.bf16.mxu0 %v576
    %880 = vmatpush1.bf16.msra.mxu0 %v575
    %881 = vmatprep.subr.bf16.mxu0 %v580
    %882 = vmatpush1.bf16.msra.mxu0 %v579
    %883 = vmatprep.subr.bf16.mxu0 %v584
    %884 = vmatpush1.bf16.msra.mxu0 %v583
    %885 = vmatprep.subr.bf16.mxu0 %v588
    %886 = vmatpush1.bf16.msra.mxu0 %v587
    %887 = vmatprep.subr.bf16.mxu0 %v592
    %888 = vmatpush1.bf16.msra.mxu0 %v591
    %889 = vmatprep.subr.bf16.mxu0 %v596
    %890 = vmatpush1.bf16.msra.mxu0 %v595
    %891 = vmatprep.subr.bf16.mxu0 %v600
    %892 = vmatpush1.bf16.msra.mxu0 %v599
    %893 = vmatprep.subr.bf16.mxu0 %v604
    %894 = vmatpush1.bf16.msra.mxu0 %v603
    %895 = vmatprep.subr.bf16.mxu0 0
    %896 = vmatpush1.bf16.msra.mxu0 0
    %897 = vmatprep.subr.bf16.mxu0 0
    %898 = vmatpush1.bf16.msra.mxu0 0
    %899 = vmatprep.subr.bf16.mxu0 0
    %900 = vmatpush1.bf16.msra.mxu0 0
    %901 = vmatprep.subr.bf16.mxu0 0
    %902 = vmatpush1.bf16.msra.mxu0 0
    %903 = vmatprep.subr.bf16.mxu0 0
    %904 = vmatpush1.bf16.msra.mxu0 0
    %905 = vmatprep.subr.bf16.mxu0 0
    %906 = vmatpush1.bf16.msra.mxu0 0
    %907 = vmatprep.subr.bf16.mxu0 0
    %908 = vmatpush1.bf16.msra.mxu0 0
    %909 = vmatprep.subr.bf16.mxu0 0
    %910 = vmatpush1.bf16.msra.mxu0 0
    %911 = vmatprep.mubr.bf16.mxu0 0
    %912 = vmatmul.mubr.bf16.gmra.mrb[0].mxu0 %v878
    %v913 = vpop.f32.mrb[0].mxu0
    %v914 = vadd.f32 0.0, %v913
    %v915 = vpop.f32.mrb[0].mxu0
    %v916 = vadd.f32 0.0, %v915
    %v917 = vpop.f32.mrb[0].mxu0
    %v918 = vpop.f32.mrb[0].mxu0
    %919 = vdwg.mxu0
    %920 = vmatprep.subr.bf16.mxu0 %v578
    %921 = vmatpush1.bf16.msra.mxu0 %v577
    %922 = vmatprep.subr.bf16.mxu0 %v582
    %923 = vmatpush1.bf16.msra.mxu0 %v581
    %924 = vmatprep.subr.bf16.mxu0 %v586
    %925 = vmatpush1.bf16.msra.mxu0 %v585
    %926 = vmatprep.subr.bf16.mxu0 %v590
    %927 = vmatpush1.bf16.msra.mxu0 %v589
    %928 = vmatprep.subr.bf16.mxu0 %v594
    %929 = vmatpush1.bf16.msra.mxu0 %v593
    %930 = vmatprep.subr.bf16.mxu0 %v598
    %931 = vmatpush1.bf16.msra.mxu0 %v597
    %932 = vmatprep.subr.bf16.mxu0 %v602
    %933 = vmatpush1.bf16.msra.mxu0 %v601
    %934 = vmatprep.subr.bf16.mxu0 %v606
    %935 = vmatpush1.bf16.msra.mxu0 %v605
    %936 = vmatprep.subr.bf16.mxu0 0
    %937 = vmatpush1.bf16.msra.mxu0 0
    %938 = vmatprep.subr.bf16.mxu0 0
    %939 = vmatpush1.bf16.msra.mxu0 0
    %940 = vmatprep.subr.bf16.mxu0 0
    %941 = vmatpush1.bf16.msra.mxu0 0
    %942 = vmatprep.subr.bf16.mxu0 0
    %943 = vmatpush1.bf16.msra.mxu0 0
    %944 = vmatprep.subr.bf16.mxu0 0
    %945 = vmatpush1.bf16.msra.mxu0 0
    %946 = vmatprep.subr.bf16.mxu0 0
    %947 = vmatpush1.bf16.msra.mxu0 0
    %948 = vmatprep.subr.bf16.mxu0 0
    %949 = vmatpush1.bf16.msra.mxu0 0
    %950 = vmatprep.subr.bf16.mxu0 0
    %951 = vmatpush1.bf16.msra.mxu0 0
    %952 = vmatprep.mubr.bf16.mxu0 0
    %953 = vmatmul.mubr.bf16.gmra.mrb[0].mxu0 %v878
    %v954 = vpop.f32.mrb[0].mxu0
    %v955 = vadd.f32 0.0, %v954
    %v956 = vpop.f32.mrb[0].mxu0
    %v957 = vadd.f32 0.0, %v956
    %v958 = vpop.f32.mrb[0].mxu0
    %v959 = vpop.f32.mrb[0].mxu0
    %960 = vdwg.mxu0
    %v961 = vadd.f32 %v171, %v914
    %v962 = vadd.f32 %v175, %v916
    %v963 = vadd.f32 %v179, %v955
    %v964 = vadd.f32 %v183, %v957
    %v965 = vxor.u32 %v961, 2147483648
    %v966 = vmul.f32 %v965, 1.442695
    %v967 = vpow.pop %v966
    %v968 = vadd.f32 %v967, 1.0
    %v969 = vrcp.pop %v968
    %v970 = vmul.f32 1.0, %v969
    %v971 = vxor.u32 %v962, 2147483648
    %v972 = vmul.f32 %v971, 1.442695
    %v973 = vpow.pop %v972
    %v974 = vadd.f32 %v973, 1.0
    %v975 = vrcp.pop %v974
    %v976 = vmul.f32 1.0, %v975
    %v977 = vtanh.pop %v963
    %v978 = vxor.u32 %v964, 2147483648
    %v979 = vmul.f32 %v978, 1.442695
    %v980 = vpow.pop %v979
    %v981 = vadd.f32 %v980, 1.0
    %v982 = vrcp.pop %v981
    %v983 = vmul.f32 1.0, %v982
    %v984 = vmul.f32 %v976, %v746
    %v985 = vmul.f32 %v970, %v977
    %v986 = vadd.f32 %v984, %v985
    %v987 = vtanh.pop %v986
    %v988 = vmul.f32 %v983, %v987
    %s989 = scalar_lea.vmem %s0, 16
    %v990 = vld [vmem:[%s989] sm:$0xff]
    %992 = vset.pattern.permute.xlu0 0
    %993 = vperm.xlu0 %992, %v990
    %v994 = vpop.permute.xlu0 %993
    %v996 = vmul.f32 %v994, %v127
    %v997 = vmul.f32 %v994, %v131
    %v998 = vmul.f32 %v994, %v135
    %v999 = vmul.f32 %v994, %v139
    %v1000 = vadd.f32 %v996, %v149
    %v1001 = vadd.f32 %v997, %v153
    %v1002 = vadd.f32 %v998, %v157
    %v1003 = vadd.f32 %v999, %v161
    %v1004 = vpack.c.bf16 %v874, %v874
    %1005 = vmatprep.subr.bf16.mxu0 %v302
    %1006 = vmatpush1.bf16.msra.mxu0 %v301
    %1007 = vmatprep.subr.bf16.mxu0 %v306
    %1008 = vmatpush1.bf16.msra.mxu0 %v305
    %1009 = vmatprep.subr.bf16.mxu0 %v310
    %1010 = vmatpush1.bf16.msra.mxu0 %v309
    %1011 = vmatprep.subr.bf16.mxu0 %v314
    %1012 = vmatpush1.bf16.msra.mxu0 %v313
    %1013 = vmatprep.subr.bf16.mxu0 %v318
    %1014 = vmatpush1.bf16.msra.mxu0 %v317
    %1015 = vmatprep.subr.bf16.mxu0 %v322
    %1016 = vmatpush1.bf16.msra.mxu0 %v321
    %1017 = vmatprep.subr.bf16.mxu0 %v326
    %1018 = vmatpush1.bf16.msra.mxu0 %v325
    %1019 = vmatprep.subr.bf16.mxu0 %v330
    %1020 = vmatpush1.bf16.msra.mxu0 %v329
    %1021 = vmatprep.subr.bf16.mxu0 0
    %1022 = vmatpush1.bf16.msra.mxu0 0
    %1023 = vmatprep.subr.bf16.mxu0 0
    %1024 = vmatpush1.bf16.msra.mxu0 0
    %1025 = vmatprep.subr.bf16.mxu0 0
    %1026 = vmatpush1.bf16.msra.mxu0 0
    %1027 = vmatprep.subr.bf16.mxu0 0
    %1028 = vmatpush1.bf16.msra.mxu0 0
    %1029 = vmatprep.subr.bf16.mxu0 0
    %1030 = vmatpush1.bf16.msra.mxu0 0
    %1031 = vmatprep.subr.bf16.mxu0 0
    %1032 = vmatpush1.bf16.msra.mxu0 0
    %1033 = vmatprep.subr.bf16.mxu0 0
    %1034 = vmatpush1.bf16.msra.mxu0 0
    %1035 = vmatprep.subr.bf16.mxu0 0
    %1036 = vmatpush1.bf16.msra.mxu0 0
    %1037 = vmatprep.mubr.bf16.mxu0 0
    %1038 = vmatmul.mubr.bf16.gmra.mrb[0].mxu0 %v1004
    %v1039 = vpop.f32.mrb[0].mxu0
    %v1040 = vadd.f32 0.0, %v1039
    %v1041 = vpop.f32.mrb[0].mxu0
    %v1042 = vadd.f32 0.0, %v1041
    %v1043 = vpop.f32.mrb[0].mxu0
    %v1044 = vpop.f32.mrb[0].mxu0
    %1045 = vdwg.mxu0
    %1046 = vmatprep.subr.bf16.mxu0 %v304
    %1047 = vmatpush1.bf16.msra.mxu0 %v303
    %1048 = vmatprep.subr.bf16.mxu0 %v308
    %1049 = vmatpush1.bf16.msra.mxu0 %v307
    %1050 = vmatprep.subr.bf16.mxu0 %v312
    %1051 = vmatpush1.bf16.msra.mxu0 %v311
    %1052 = vmatprep.subr.bf16.mxu0 %v316
    %1053 = vmatpush1.bf16.msra.mxu0 %v315
    %1054 = vmatprep.subr.bf16.mxu0 %v320
    %1055 = vmatpush1.bf16.msra.mxu0 %v319
    %1056 = vmatprep.subr.bf16.mxu0 %v324
    %1057 = vmatpush1.bf16.msra.mxu0 %v323
    %1058 = vmatprep.subr.bf16.mxu0 %v328
    %1059 = vmatpush1.bf16.msra.mxu0 %v327
    %1060 = vmatprep.subr.bf16.mxu0 %v332
    %1061 = vmatpush1.bf16.msra.mxu0 %v331
    %1062 = vmatprep.subr.bf16.mxu0 0
    %1063 = vmatpush1.bf16.msra.mxu0 0
    %1064 = vmatprep.subr.bf16.mxu0 0
    %1065 = vmatpush1.bf16.msra.mxu0 0
    %1066 = vmatprep.subr.bf16.mxu0 0
    %1067 = vmatpush1.bf16.msra.mxu0 0
    %1068 = vmatprep.subr.bf16.mxu0 0
    %1069 = vmatpush1.bf16.msra.mxu0 0
    %1070 = vmatprep.subr.bf16.mxu0 0
    %1071 = vmatpush1.bf16.msra.mxu0 0
    %1072 = vmatprep.subr.bf16.mxu0 0
    %1073 = vmatpush1.bf16.msra.mxu0 0
    %1074 = vmatprep.subr.bf16.mxu0 0
    %1075 = vmatpush1.bf16.msra.mxu0 0
    %1076 = vmatprep.subr.bf16.mxu0 0
    %1077 = vmatpush1.bf16.msra.mxu0 0
    %1078 = vmatprep.mubr.bf16.mxu0 0
    %1079 = vmatmul.mubr.bf16.gmra.mrb[0].mxu0 %v1004
    %v1080 = vpop.f32.mrb[0].mxu0
    %v1081 = vadd.f32 0.0, %v1080
    %v1082 = vpop.f32.mrb[0].mxu0
    %v1083 = vadd.f32 0.0, %v1082
    %v1084 = vpop.f32.mrb[0].mxu0
    %v1085 = vpop.f32.mrb[0].mxu0
    %1086 = vdwg.mxu0
    %v1087 = vadd.f32 %v1000, %v1040
    %v1088 = vadd.f32 %v1001, %v1042
    %v1089 = vadd.f32 %v1002, %v1081
    %v1090 = vadd.f32 %v1003, %v1083
    %v1091 = vxor.u32 %v1087, 2147483648
    %v1092 = vmul.f32 %v1091, 1.442695
    %v1093 = vpow.pop %v1092
    %v1094 = vadd.f32 %v1093, 1.0
    %v1095 = vrcp.pop %v1094
    %v1096 = vmul.f32 1.0, %v1095
    %v1097 = vxor.u32 %v1088, 2147483648
    %v1098 = vmul.f32 %v1097, 1.442695
    %v1099 = vpow.pop %v1098
    %v1100 = vadd.f32 %v1099, 1.0
    %v1101 = vrcp.pop %v1100
    %v1102 = vmul.f32 1.0, %v1101
    %v1103 = vtanh.pop %v1089
    %v1104 = vxor.u32 %v1090, 2147483648
    %v1105 = vmul.f32 %v1104, 1.442695
    %v1106 = vpow.pop %v1105
    %v1107 = vadd.f32 %v1106, 1.0
    %v1108 = vrcp.pop %v1107
    %v1109 = vmul.f32 1.0, %v1108
    %v1110 = vmul.f32 %v1102, %v872
    %v1111 = vmul.f32 %v1096, %v1103
    %v1112 = vadd.f32 %v1110, %v1111
    %v1113 = vtanh.pop %v1112
    %v1114 = vmul.f32 %v1109, %v1113
    %1115 = vrot.lane.b32.xlu0 %v988, 64
    %v1116 = vpop.permute.xlu0 %1115
    %v1117 = vsel %vm190, %v1114, %v1116
    %v1118 = vpack.c.bf16 %v1117, %v1117
    %1119 = vmatprep.subr.bf16.mxu0 %v576
    %1120 = vmatpush1.bf16.msra.mxu0 %v575
    %1121 = vmatprep.subr.bf16.mxu0 %v580
    %1122 = vmatpush1.bf16.msra.mxu0 %v579
    %1123 = vmatprep.subr.bf16.mxu0 %v584
    %1124 = vmatpush1.bf16.msra.mxu0 %v583
    %1125 = vmatprep.subr.bf16.mxu0 %v588
    %1126 = vmatpush1.bf16.msra.mxu0 %v587
    %1127 = vmatprep.subr.bf16.mxu0 %v592
    %1128 = vmatpush1.bf16.msra.mxu0 %v591
    %1129 = vmatprep.subr.bf16.mxu0 %v596
    %1130 = vmatpush1.bf16.msra.mxu0 %v595
    %1131 = vmatprep.subr.bf16.mxu0 %v600
    %1132 = vmatpush1.bf16.msra.mxu0 %v599
    %1133 = vmatprep.subr.bf16.mxu0 %v604
    %1134 = vmatpush1.bf16.msra.mxu0 %v603
    %1135 = vmatprep.subr.bf16.mxu0 0
    %1136 = vmatpush1.bf16.msra.mxu0 0
    %1137 = vmatprep.subr.bf16.mxu0 0
    %1138 = vmatpush1.bf16.msra.mxu0 0
    %1139 = vmatprep.subr.bf16.mxu0 0
    %1140 = vmatpush1.bf16.msra.mxu0 0
    %1141 = vmatprep.subr.bf16.mxu0 0
    %1142 = vmatpush1.bf16.msra.mxu0 0
    %1143 = vmatprep.subr.bf16.mxu0 0
    %1144 = vmatpush1.bf16.msra.mxu0 0
    %1145 = vmatprep.subr.bf16.mxu0 0
    %1146 = vmatpush1.bf16.msra.mxu0 0
    %1147 = vmatprep.subr.bf16.mxu0 0
    %1148 = vmatpush1.bf16.msra.mxu0 0
    %1149 = vmatprep.subr.bf16.mxu0 0
    %1150 = vmatpush1.bf16.msra.mxu0 0
    %1151 = vmatprep.mubr.bf16.mxu0 0
    %1152 = vmatmul.mubr.bf16.gmra.mrb[0].mxu0 %v1118
    %v1153 = vpop.f32.mrb[0].mxu0
    %v1154 = vadd.f32 0.0, %v1153
    %v1155 = vpop.f32.mrb[0].mxu0
    %v1156 = vadd.f32 0.0, %v1155
    %v1157 = vpop.f32.mrb[0].mxu0
    %v1158 = vpop.f32.mrb[0].mxu0
    %1159 = vdwg.mxu0
    %1160 = vmatprep.subr.bf16.mxu0 %v578
    %1161 = vmatpush1.bf16.msra.mxu0 %v577
    %1162 = vmatprep.subr.bf16.mxu0 %v582
    %1163 = vmatpush1.bf16.msra.mxu0 %v581
    %1164 = vmatprep.subr.bf16.mxu0 %v586
    %1165 = vmatpush1.bf16.msra.mxu0 %v585
    %1166 = vmatprep.subr.bf16.mxu0 %v590
    %1167 = vmatpush1.bf16.msra.mxu0 %v589
    %1168 = vmatprep.subr.bf16.mxu0 %v594
    %1169 = vmatpush1.bf16.msra.mxu0 %v593
    %1170 = vmatprep.subr.bf16.mxu0 %v598
    %1171 = vmatpush1.bf16.msra.mxu0 %v597
    %1172 = vmatprep.subr.bf16.mxu0 %v602
    %1173 = vmatpush1.bf16.msra.mxu0 %v601
    %1174 = vmatprep.subr.bf16.mxu0 %v606
    %1175 = vmatpush1.bf16.msra.mxu0 %v605
    %1176 = vmatprep.subr.bf16.mxu0 0
    %1177 = vmatpush1.bf16.msra.mxu0 0
    %1178 = vmatprep.subr.bf16.mxu0 0
    %1179 = vmatpush1.bf16.msra.mxu0 0
    %1180 = vmatprep.subr.bf16.mxu0 0
    %1181 = vmatpush1.bf16.msra.mxu0 0
    %1182 = vmatprep.subr.bf16.mxu0 0
    %1183 = vmatpush1.bf16.msra.mxu0 0
    %1184 = vmatprep.subr.bf16.mxu0 0
    %1185 = vmatpush1.bf16.msra.mxu0 0
    %1186 = vmatprep.subr.bf16.mxu0 0
    %1187 = vmatpush1.bf16.msra.mxu0 0
    %1188 = vmatprep.subr.bf16.mxu0 0
    %1189 = vmatpush1.bf16.msra.mxu0 0
    %1190 = vmatprep.subr.bf16.mxu0 0
    %1191 = vmatpush1.bf16.msra.mxu0 0
    %1192 = vmatprep.mubr.bf16.mxu0 0
    %1193 = vmatmul.mubr.bf16.gmra.mrb[0].mxu0 %v1118
    %v1194 = vpop.f32.mrb[0].mxu0
    %v1195 = vadd.f32 0.0, %v1194
    %v1196 = vpop.f32.mrb[0].mxu0
    %v1197 = vadd.f32 0.0, %v1196
    %v1198 = vpop.f32.mrb[0].mxu0
    %v1199 = vpop.f32.mrb[0].mxu0
    %1200 = vdwg.mxu0
    %v1201 = vadd.f32 %v171, %v1154
    %v1202 = vadd.f32 %v175, %v1156
    %v1203 = vadd.f32 %v179, %v1195
    %v1204 = vadd.f32 %v183, %v1197
    %v1205 = vxor.u32 %v1201, 2147483648
    %v1206 = vmul.f32 %v1205, 1.442695
    %v1207 = vpow.pop %v1206
    %v1208 = vadd.f32 %v1207, 1.0
    %v1209 = vrcp.pop %v1208
    %v1210 = vmul.f32 1.0, %v1209
    %v1211 = vxor.u32 %v1202, 2147483648
    %v1212 = vmul.f32 %v1211, 1.442695
    %v1213 = vpow.pop %v1212
    %v1214 = vadd.f32 %v1213, 1.0
    %v1215 = vrcp.pop %v1214
    %v1216 = vmul.f32 1.0, %v1215
    %v1217 = vtanh.pop %v1203
    %v1218 = vxor.u32 %v1204, 2147483648
    %v1219 = vmul.f32 %v1218, 1.442695
    %v1220 = vpow.pop %v1219
    %v1221 = vadd.f32 %v1220, 1.0
    %v1222 = vrcp.pop %v1221
    %v1223 = vmul.f32 1.0, %v1222
    %v1224 = vmul.f32 %v1216, %v986
    %v1225 = vmul.f32 %v1210, %v1217
    %v1226 = vadd.f32 %v1224, %v1225
    %v1227 = vtanh.pop %v1226
    %v1228 = vmul.f32 %v1223, %v1227
    %s1229 = scalar_lea.vmem %s0, 24
    %v1230 = vld [vmem:[%s1229] sm:$0xff]
    %1232 = vset.pattern.permute.xlu0 0
    %1233 = vperm.xlu0 %1232, %v1230
    %v1234 = vpop.permute.xlu0 %1233
    %v1236 = vmul.f32 %v1234, %v127
    %v1237 = vmul.f32 %v1234, %v131
    %v1238 = vmul.f32 %v1234, %v135
    %v1239 = vmul.f32 %v1234, %v139
    %v1240 = vadd.f32 %v1236, %v149
    %v1241 = vadd.f32 %v1237, %v153
    %v1242 = vadd.f32 %v1238, %v157
    %v1243 = vadd.f32 %v1239, %v161
    %v1244 = vpack.c.bf16 %v1114, %v1114
    %1245 = vmatprep.subr.bf16.mxu0 %v302
    %1246 = vmatpush1.bf16.msra.mxu0 %v301
    %1247 = vmatprep.subr.bf16.mxu0 %v306
    %1248 = vmatpush1.bf16.msra.mxu0 %v305
    %1249 = vmatprep.subr.bf16.mxu0 %v310
    %1250 = vmatpush1.bf16.msra.mxu0 %v309
    %1251 = vmatprep.subr.bf16.mxu0 %v314
    %1252 = vmatpush1.bf16.msra.mxu0 %v313
    %1253 = vmatprep.subr.bf16.mxu0 %v318
    %1254 = vmatpush1.bf16.msra.mxu0 %v317
    %1255 = vmatprep.subr.bf16.mxu0 %v322
    %1256 = vmatpush1.bf16.msra.mxu0 %v321
    %1257 = vmatprep.subr.bf16.mxu0 %v326
    %1258 = vmatpush1.bf16.msra.mxu0 %v325
    %1259 = vmatprep.subr.bf16.mxu0 %v330
    %1260 = vmatpush1.bf16.msra.mxu0 %v329
    %1261 = vmatprep.subr.bf16.mxu0 0
    %1262 = vmatpush1.bf16.msra.mxu0 0
    %1263 = vmatprep.subr.bf16.mxu0 0
    %1264 = vmatpush1.bf16.msra.mxu0 0
    %1265 = vmatprep.subr.bf16.mxu0 0
    %1266 = vmatpush1.bf16.msra.mxu0 0
    %1267 = vmatprep.subr.bf16.mxu0 0
    %1268 = vmatpush1.bf16.msra.mxu0 0
    %1269 = vmatprep.subr.bf16.mxu0 0
    %1270 = vmatpush1.bf16.msra.mxu0 0
    %1271 = vmatprep.subr.bf16.mxu0 0
    %1272 = vmatpush1.bf16.msra.mxu0 0
    %1273 = vmatprep.subr.bf16.mxu0 0
    %1274 = vmatpush1.bf16.msra.mxu0 0
    %1275 = vmatprep.subr.bf16.mxu0 0
    %1276 = vmatpush1.bf16.msra.mxu0 0
    %1277 = vmatprep.mubr.bf16.mxu0 0
    %1278 = vmatmul.mubr.bf16.gmra.mrb[0].mxu0 %v1244
    %v1279 = vpop.f32.mrb[0].mxu0
    %v1280 = vadd.f32 0.0, %v1279
    %v1281 = vpop.f32.mrb[0].mxu0
    %v1282 = vadd.f32 0.0, %v1281
    %v1283 = vpop.f32.mrb[0].mxu0
    %v1284 = vpop.f32.mrb[0].mxu0
    %1285 = vdwg.mxu0
    %1286 = vmatprep.subr.bf16.mxu0 %v304
    %1287 = vmatpush1.bf16.msra.mxu0 %v303
    %1288 = vmatprep.subr.bf16.mxu0 %v308
    %1289 = vmatpush1.bf16.msra.mxu0 %v307
    %1290 = vmatprep.subr.bf16.mxu0 %v312
    %1291 = vmatpush1.bf16.msra.mxu0 %v311
    %1292 = vmatprep.subr.bf16.mxu0 %v316
    %1293 = vmatpush1.bf16.msra.mxu0 %v315
    %1294 = vmatprep.subr.bf16.mxu0 %v320
    %1295 = vmatpush1.bf16.msra.mxu0 %v319
    %1296 = vmatprep.subr.bf16.mxu0 %v324
    %1297 = vmatpush1.bf16.msra.mxu0 %v323
    %1298 = vmatprep.subr.bf16.mxu0 %v328
    %1299 = vmatpush1.bf16.msra.mxu0 %v327
    %1300 = vmatprep.subr.bf16.mxu0 %v332
    %1301 = vmatpush1.bf16.msra.mxu0 %v331
    %1302 = vmatprep.subr.bf16.mxu0 0
    %1303 = vmatpush1.bf16.msra.mxu0 0
    %1304 = vmatprep.subr.bf16.mxu0 0
    %1305 = vmatpush1.bf16.msra.mxu0 0
    %1306 = vmatprep.subr.bf16.mxu0 0
    %1307 = vmatpush1.bf16.msra.mxu0 0
    %1308 = vmatprep.subr.bf16.mxu0 0
    %1309 = vmatpush1.bf16.msra.mxu0 0
    %1310 = vmatprep.subr.bf16.mxu0 0
    %1311 = vmatpush1.bf16.msra.mxu0 0
    %1312 = vmatprep.subr.bf16.mxu0 0
    %1313 = vmatpush1.bf16.msra.mxu0 0
    %1314 = vmatprep.subr.bf16.mxu0 0
    %1315 = vmatpush1.bf16.msra.mxu0 0
    %1316 = vmatprep.subr.bf16.mxu0 0
    %1317 = vmatpush1.bf16.msra.mxu0 0
    %1318 = vmatprep.mubr.bf16.mxu0 0
    %1319 = vmatmul.mubr.bf16.gmra.mrb[0].mxu0 %v1244
    %v1320 = vpop.f32.mrb[0].mxu0
    %v1321 = vadd.f32 0.0, %v1320
    %v1322 = vpop.f32.mrb[0].mxu0
    %v1323 = vadd.f32 0.0, %v1322
    %v1324 = vpop.f32.mrb[0].mxu0
    %v1325 = vpop.f32.mrb[0].mxu0
    %1326 = vdwg.mxu0
    %v1327 = vadd.f32 %v1240, %v1280
    %v1328 = vadd.f32 %v1241, %v1282
    %v1329 = vadd.f32 %v1242, %v1321
    %v1330 = vadd.f32 %v1243, %v1323
    %v1331 = vxor.u32 %v1327, 2147483648
    %v1332 = vmul.f32 %v1331, 1.442695
    %v1333 = vpow.pop %v1332
    %v1334 = vadd.f32 %v1333, 1.0
    %v1335 = vrcp.pop %v1334
    %v1336 = vmul.f32 1.0, %v1335
    %v1337 = vxor.u32 %v1328, 2147483648
    %v1338 = vmul.f32 %v1337, 1.442695
    %v1339 = vpow.pop %v1338
    %v1340 = vadd.f32 %v1339, 1.0
    %v1341 = vrcp.pop %v1340
    %v1342 = vmul.f32 1.0, %v1341
    %v1343 = vtanh.pop %v1329
    %v1344 = vxor.u32 %v1330, 2147483648
    %v1345 = vmul.f32 %v1344, 1.442695
    %v1346 = vpow.pop %v1345
    %v1347 = vadd.f32 %v1346, 1.0
    %v1348 = vrcp.pop %v1347
    %v1349 = vmul.f32 1.0, %v1348
    %v1350 = vmul.f32 %v1342, %v1112
    %v1351 = vmul.f32 %v1336, %v1343
    %v1352 = vadd.f32 %v1350, %v1351
    %v1353 = vtanh.pop %v1352
    %v1354 = vmul.f32 %v1349, %v1353
    %1355 = vrot.lane.b32.xlu0 %v1228, 64
    %v1356 = vpop.permute.xlu0 %1355
    %v1357 = vsel %vm190, %v1354, %v1356
    %v1358 = vpack.c.bf16 %v1357, %v1357
    %1359 = vmatprep.subr.bf16.mxu0 %v576
    %1360 = vmatpush1.bf16.msra.mxu0 %v575
    %1361 = vmatprep.subr.bf16.mxu0 %v580
    %1362 = vmatpush1.bf16.msra.mxu0 %v579
    %1363 = vmatprep.subr.bf16.mxu0 %v584
    %1364 = vmatpush1.bf16.msra.mxu0 %v583
    %1365 = vmatprep.subr.bf16.mxu0 %v588
    %1366 = vmatpush1.bf16.msra.mxu0 %v587
    %1367 = vmatprep.subr.bf16.mxu0 %v592
    %1368 = vmatpush1.bf16.msra.mxu0 %v591
    %1369 = vmatprep.subr.bf16.mxu0 %v596
    %1370 = vmatpush1.bf16.msra.mxu0 %v595
    %1371 = vmatprep.subr.bf16.mxu0 %v600
    %1372 = vmatpush1.bf16.msra.mxu0 %v599
    %1373 = vmatprep.subr.bf16.mxu0 %v604
    %1374 = vmatpush1.bf16.msra.mxu0 %v603
    %1375 = vmatprep.subr.bf16.mxu0 0
    %1376 = vmatpush1.bf16.msra.mxu0 0
    %1377 = vmatprep.subr.bf16.mxu0 0
    %1378 = vmatpush1.bf16.msra.mxu0 0
    %1379 = vmatprep.subr.bf16.mxu0 0
    %1380 = vmatpush1.bf16.msra.mxu0 0
    %1381 = vmatprep.subr.bf16.mxu0 0
    %1382 = vmatpush1.bf16.msra.mxu0 0
    %1383 = vmatprep.subr.bf16.mxu0 0
    %1384 = vmatpush1.bf16.msra.mxu0 0
    %1385 = vmatprep.subr.bf16.mxu0 0
    %1386 = vmatpush1.bf16.msra.mxu0 0
    %1387 = vmatprep.subr.bf16.mxu0 0
    %1388 = vmatpush1.bf16.msra.mxu0 0
    %1389 = vmatprep.subr.bf16.mxu0 0
    %1390 = vmatpush1.bf16.msra.mxu0 0
    %1391 = vmatprep.mubr.bf16.mxu0 0
    %1392 = vmatmul.mubr.bf16.gmra.mrb[0].mxu0 %v1358
    %v1393 = vpop.f32.mrb[0].mxu0
    %v1394 = vadd.f32 0.0, %v1393
    %v1395 = vpop.f32.mrb[0].mxu0
    %v1396 = vadd.f32 0.0, %v1395
    %v1397 = vpop.f32.mrb[0].mxu0
    %v1398 = vpop.f32.mrb[0].mxu0
    %1399 = vdwg.mxu0
    %1400 = vmatprep.subr.bf16.mxu0 %v578
    %1401 = vmatpush1.bf16.msra.mxu0 %v577
    %1402 = vmatprep.subr.bf16.mxu0 %v582
    %1403 = vmatpush1.bf16.msra.mxu0 %v581
    %1404 = vmatprep.subr.bf16.mxu0 %v586
    %1405 = vmatpush1.bf16.msra.mxu0 %v585
    %1406 = vmatprep.subr.bf16.mxu0 %v590
    %1407 = vmatpush1.bf16.msra.mxu0 %v589
    %1408 = vmatprep.subr.bf16.mxu0 %v594
    %1409 = vmatpush1.bf16.msra.mxu0 %v593
    %1410 = vmatprep.subr.bf16.mxu0 %v598
    %1411 = vmatpush1.bf16.msra.mxu0 %v597
    %1412 = vmatprep.subr.bf16.mxu0 %v602
    %1413 = vmatpush1.bf16.msra.mxu0 %v601
    %1414 = vmatprep.subr.bf16.mxu0 %v606
    %1415 = vmatpush1.bf16.msra.mxu0 %v605
    %1416 = vmatprep.subr.bf16.mxu0 0
    %1417 = vmatpush1.bf16.msra.mxu0 0
    %1418 = vmatprep.subr.bf16.mxu0 0
    %1419 = vmatpush1.bf16.msra.mxu0 0
    %1420 = vmatprep.subr.bf16.mxu0 0
    %1421 = vmatpush1.bf16.msra.mxu0 0
    %1422 = vmatprep.subr.bf16.mxu0 0
    %1423 = vmatpush1.bf16.msra.mxu0 0
    %1424 = vmatprep.subr.bf16.mxu0 0
    %1425 = vmatpush1.bf16.msra.mxu0 0
    %1426 = vmatprep.subr.bf16.mxu0 0
    %1427 = vmatpush1.bf16.msra.mxu0 0
    %1428 = vmatprep.subr.bf16.mxu0 0
    %1429 = vmatpush1.bf16.msra.mxu0 0
    %1430 = vmatprep.subr.bf16.mxu0 0
    %1431 = vmatpush1.bf16.msra.mxu0 0
    %1432 = vmatprep.mubr.bf16.mxu0 0
    %1433 = vmatmul.mubr.bf16.gmra.mrb[0].mxu0 %v1358
    %v1434 = vpop.f32.mrb[0].mxu0
    %v1435 = vadd.f32 0.0, %v1434
    %v1436 = vpop.f32.mrb[0].mxu0
    %v1437 = vadd.f32 0.0, %v1436
    %v1438 = vpop.f32.mrb[0].mxu0
    %v1439 = vpop.f32.mrb[0].mxu0
    %1440 = vdwg.mxu0
    %v1441 = vadd.f32 %v171, %v1394
    %v1442 = vadd.f32 %v175, %v1396
    %v1443 = vadd.f32 %v179, %v1435
    %v1444 = vadd.f32 %v183, %v1437
    %v1445 = vxor.u32 %v1441, 2147483648
    %v1446 = vmul.f32 %v1445, 1.442695
    %v1447 = vpow.pop %v1446
    %v1448 = vadd.f32 %v1447, 1.0
    %v1449 = vrcp.pop %v1448
    %v1450 = vmul.f32 1.0, %v1449
    %v1451 = vxor.u32 %v1442, 2147483648
    %v1452 = vmul.f32 %v1451, 1.442695
    %v1453 = vpow.pop %v1452
    %v1454 = vadd.f32 %v1453, 1.0
    %v1455 = vrcp.pop %v1454
    %v1456 = vmul.f32 1.0, %v1455
    %v1457 = vtanh.pop %v1443
    %v1458 = vxor.u32 %v1444, 2147483648
    %v1459 = vmul.f32 %v1458, 1.442695
    %v1460 = vpow.pop %v1459
    %v1461 = vadd.f32 %v1460, 1.0
    %v1462 = vrcp.pop %v1461
    %v1463 = vmul.f32 1.0, %v1462
    %v1464 = vmul.f32 %v1456, %v1226
    %v1465 = vmul.f32 %v1450, %v1457
    %v1466 = vadd.f32 %v1464, %v1465
    %v1467 = vtanh.pop %v1466
    %v1468 = vmul.f32 %v1463, %v1467
    %s1469 = scalar_lea.vmem %s0, 32
    %v1470 = vld [vmem:[%s1469] sm:$0xff]
    %1472 = vset.pattern.permute.xlu0 0
    %1473 = vperm.xlu0 %1472, %v1470
    %v1474 = vpop.permute.xlu0 %1473
    %v1476 = vmul.f32 %v1474, %v127
    %v1477 = vmul.f32 %v1474, %v131
    %v1478 = vmul.f32 %v1474, %v135
    %v1479 = vmul.f32 %v1474, %v139
    %v1480 = vadd.f32 %v1476, %v149
    %v1481 = vadd.f32 %v1477, %v153
    %v1482 = vadd.f32 %v1478, %v157
    %v1483 = vadd.f32 %v1479, %v161
    %v1484 = vpack.c.bf16 %v1354, %v1354
    %1485 = vmatprep.subr.bf16.mxu0 %v302
    %1486 = vmatpush1.bf16.msra.mxu0 %v301
    %1487 = vmatprep.subr.bf16.mxu0 %v306
    %1488 = vmatpush1.bf16.msra.mxu0 %v305
    %1489 = vmatprep.subr.bf16.mxu0 %v310
    %1490 = vmatpush1.bf16.msra.mxu0 %v309
    %1491 = vmatprep.subr.bf16.mxu0 %v314
    %1492 = vmatpush1.bf16.msra.mxu0 %v313
    %1493 = vmatprep.subr.bf16.mxu0 %v318
    %1494 = vmatpush1.bf16.msra.mxu0 %v317
    %1495 = vmatprep.subr.bf16.mxu0 %v322
    %1496 = vmatpush1.bf16.msra.mxu0 %v321
    %1497 = vmatprep.subr.bf16.mxu0 %v326
    %1498 = vmatpush1.bf16.msra.mxu0 %v325
    %1499 = vmatprep.subr.bf16.mxu0 %v330
    %1500 = vmatpush1.bf16.msra.mxu0 %v329
    %1501 = vmatprep.subr.bf16.mxu0 0
    %1502 = vmatpush1.bf16.msra.mxu0 0
    %1503 = vmatprep.subr.bf16.mxu0 0
    %1504 = vmatpush1.bf16.msra.mxu0 0
    %1505 = vmatprep.subr.bf16.mxu0 0
    %1506 = vmatpush1.bf16.msra.mxu0 0
    %1507 = vmatprep.subr.bf16.mxu0 0
    %1508 = vmatpush1.bf16.msra.mxu0 0
    %1509 = vmatprep.subr.bf16.mxu0 0
    %1510 = vmatpush1.bf16.msra.mxu0 0
    %1511 = vmatprep.subr.bf16.mxu0 0
    %1512 = vmatpush1.bf16.msra.mxu0 0
    %1513 = vmatprep.subr.bf16.mxu0 0
    %1514 = vmatpush1.bf16.msra.mxu0 0
    %1515 = vmatprep.subr.bf16.mxu0 0
    %1516 = vmatpush1.bf16.msra.mxu0 0
    %1517 = vmatprep.mubr.bf16.mxu0 0
    %1518 = vmatmul.mubr.bf16.gmra.mrb[0].mxu0 %v1484
    %v1519 = vpop.f32.mrb[0].mxu0
    %v1520 = vadd.f32 0.0, %v1519
    %v1521 = vpop.f32.mrb[0].mxu0
    %v1522 = vadd.f32 0.0, %v1521
    %v1523 = vpop.f32.mrb[0].mxu0
    %v1524 = vpop.f32.mrb[0].mxu0
    %1525 = vdwg.mxu0
    %1526 = vmatprep.subr.bf16.mxu0 %v304
    %1527 = vmatpush1.bf16.msra.mxu0 %v303
    %1528 = vmatprep.subr.bf16.mxu0 %v308
    %1529 = vmatpush1.bf16.msra.mxu0 %v307
    %1530 = vmatprep.subr.bf16.mxu0 %v312
    %1531 = vmatpush1.bf16.msra.mxu0 %v311
    %1532 = vmatprep.subr.bf16.mxu0 %v316
    %1533 = vmatpush1.bf16.msra.mxu0 %v315
    %1534 = vmatprep.subr.bf16.mxu0 %v320
    %1535 = vmatpush1.bf16.msra.mxu0 %v319
    %1536 = vmatprep.subr.bf16.mxu0 %v324
    %1537 = vmatpush1.bf16.msra.mxu0 %v323
    %1538 = vmatprep.subr.bf16.mxu0 %v328
    %1539 = vmatpush1.bf16.msra.mxu0 %v327
    %1540 = vmatprep.subr.bf16.mxu0 %v332
    %1541 = vmatpush1.bf16.msra.mxu0 %v331
    %1542 = vmatprep.subr.bf16.mxu0 0
    %1543 = vmatpush1.bf16.msra.mxu0 0
    %1544 = vmatprep.subr.bf16.mxu0 0
    %1545 = vmatpush1.bf16.msra.mxu0 0
    %1546 = vmatprep.subr.bf16.mxu0 0
    %1547 = vmatpush1.bf16.msra.mxu0 0
    %1548 = vmatprep.subr.bf16.mxu0 0
    %1549 = vmatpush1.bf16.msra.mxu0 0
    %1550 = vmatprep.subr.bf16.mxu0 0
    %1551 = vmatpush1.bf16.msra.mxu0 0
    %1552 = vmatprep.subr.bf16.mxu0 0
    %1553 = vmatpush1.bf16.msra.mxu0 0
    %1554 = vmatprep.subr.bf16.mxu0 0
    %1555 = vmatpush1.bf16.msra.mxu0 0
    %1556 = vmatprep.subr.bf16.mxu0 0
    %1557 = vmatpush1.bf16.msra.mxu0 0
    %1558 = vmatprep.mubr.bf16.mxu0 0
    %1559 = vmatmul.mubr.bf16.gmra.mrb[0].mxu0 %v1484
    %v1560 = vpop.f32.mrb[0].mxu0
    %v1561 = vadd.f32 0.0, %v1560
    %v1562 = vpop.f32.mrb[0].mxu0
    %v1563 = vadd.f32 0.0, %v1562
    %v1564 = vpop.f32.mrb[0].mxu0
    %v1565 = vpop.f32.mrb[0].mxu0
    %1566 = vdwg.mxu0
    %v1567 = vadd.f32 %v1480, %v1520
    %v1568 = vadd.f32 %v1481, %v1522
    %v1569 = vadd.f32 %v1482, %v1561
    %v1570 = vadd.f32 %v1483, %v1563
    %v1571 = vxor.u32 %v1567, 2147483648
    %v1572 = vmul.f32 %v1571, 1.442695
    %v1573 = vpow.pop %v1572
    %v1574 = vadd.f32 %v1573, 1.0
    %v1575 = vrcp.pop %v1574
    %v1576 = vmul.f32 1.0, %v1575
    %v1577 = vxor.u32 %v1568, 2147483648
    %v1578 = vmul.f32 %v1577, 1.442695
    %v1579 = vpow.pop %v1578
    %v1580 = vadd.f32 %v1579, 1.0
    %v1581 = vrcp.pop %v1580
    %v1582 = vmul.f32 1.0, %v1581
    %v1583 = vtanh.pop %v1569
    %v1584 = vxor.u32 %v1570, 2147483648
    %v1585 = vmul.f32 %v1584, 1.442695
    %v1586 = vpow.pop %v1585
    %v1587 = vadd.f32 %v1586, 1.0
    %v1588 = vrcp.pop %v1587
    %v1589 = vmul.f32 1.0, %v1588
    %v1590 = vmul.f32 %v1582, %v1352
    %v1591 = vmul.f32 %v1576, %v1583
    %v1592 = vadd.f32 %v1590, %v1591
    %v1593 = vtanh.pop %v1592
    %v1594 = vmul.f32 %v1589, %v1593
    %1595 = vrot.lane.b32.xlu0 %v1468, 64
    %v1596 = vpop.permute.xlu0 %1595
    %v1597 = vsel %vm190, %v1594, %v1596
    %v1598 = vpack.c.bf16 %v1597, %v1597
    %1599 = vmatprep.subr.bf16.mxu0 %v576
    %1600 = vmatpush1.bf16.msra.mxu0 %v575
    %1601 = vmatprep.subr.bf16.mxu0 %v580
    %1602 = vmatpush1.bf16.msra.mxu0 %v579
    %1603 = vmatprep.subr.bf16.mxu0 %v584
    %1604 = vmatpush1.bf16.msra.mxu0 %v583
    %1605 = vmatprep.subr.bf16.mxu0 %v588
    %1606 = vmatpush1.bf16.msra.mxu0 %v587
    %1607 = vmatprep.subr.bf16.mxu0 %v592
    %1608 = vmatpush1.bf16.msra.mxu0 %v591
    %1609 = vmatprep.subr.bf16.mxu0 %v596
    %1610 = vmatpush1.bf16.msra.mxu0 %v595
    %1611 = vmatprep.subr.bf16.mxu0 %v600
    %1612 = vmatpush1.bf16.msra.mxu0 %v599
    %1613 = vmatprep.subr.bf16.mxu0 %v604
    %1614 = vmatpush1.bf16.msra.mxu0 %v603
    %1615 = vmatprep.subr.bf16.mxu0 0
    %1616 = vmatpush1.bf16.msra.mxu0 0
    %1617 = vmatprep.subr.bf16.mxu0 0
    %1618 = vmatpush1.bf16.msra.mxu0 0
    %1619 = vmatprep.subr.bf16.mxu0 0
    %1620 = vmatpush1.bf16.msra.mxu0 0
    %1621 = vmatprep.subr.bf16.mxu0 0
    %1622 = vmatpush1.bf16.msra.mxu0 0
    %1623 = vmatprep.subr.bf16.mxu0 0
    %1624 = vmatpush1.bf16.msra.mxu0 0
    %1625 = vmatprep.subr.bf16.mxu0 0
    %1626 = vmatpush1.bf16.msra.mxu0 0
    %1627 = vmatprep.subr.bf16.mxu0 0
    %1628 = vmatpush1.bf16.msra.mxu0 0
    %1629 = vmatprep.subr.bf16.mxu0 0
    %1630 = vmatpush1.bf16.msra.mxu0 0
    %1631 = vmatprep.mubr.bf16.mxu0 0
    %1632 = vmatmul.mubr.bf16.gmra.mrb[0].mxu0 %v1598
    %v1633 = vpop.f32.mrb[0].mxu0
    %v1634 = vadd.f32 0.0, %v1633
    %v1635 = vpop.f32.mrb[0].mxu0
    %v1636 = vadd.f32 0.0, %v1635
    %v1637 = vpop.f32.mrb[0].mxu0
    %v1638 = vpop.f32.mrb[0].mxu0
    %1639 = vdwg.mxu0
    %1640 = vmatprep.subr.bf16.mxu0 %v578
    %1641 = vmatpush1.bf16.msra.mxu0 %v577
    %1642 = vmatprep.subr.bf16.mxu0 %v582
    %1643 = vmatpush1.bf16.msra.mxu0 %v581
    %1644 = vmatprep.subr.bf16.mxu0 %v586
    %1645 = vmatpush1.bf16.msra.mxu0 %v585
    %1646 = vmatprep.subr.bf16.mxu0 %v590
    %1647 = vmatpush1.bf16.msra.mxu0 %v589
    %1648 = vmatprep.subr.bf16.mxu0 %v594
    %1649 = vmatpush1.bf16.msra.mxu0 %v593
    %1650 = vmatprep.subr.bf16.mxu0 %v598
    %1651 = vmatpush1.bf16.msra.mxu0 %v597
    %1652 = vmatprep.subr.bf16.mxu0 %v602
    %1653 = vmatpush1.bf16.msra.mxu0 %v601
    %1654 = vmatprep.subr.bf16.mxu0 %v606
    %1655 = vmatpush1.bf16.msra.mxu0 %v605
    %1656 = vmatprep.subr.bf16.mxu0 0
    %1657 = vmatpush1.bf16.msra.mxu0 0
    %1658 = vmatprep.subr.bf16.mxu0 0
    %1659 = vmatpush1.bf16.msra.mxu0 0
    %1660 = vmatprep.subr.bf16.mxu0 0
    %1661 = vmatpush1.bf16.msra.mxu0 0
    %1662 = vmatprep.subr.bf16.mxu0 0
    %1663 = vmatpush1.bf16.msra.mxu0 0
    %1664 = vmatprep.subr.bf16.mxu0 0
    %1665 = vmatpush1.bf16.msra.mxu0 0
    %1666 = vmatprep.subr.bf16.mxu0 0
    %1667 = vmatpush1.bf16.msra.mxu0 0
    %1668 = vmatprep.subr.bf16.mxu0 0
    %1669 = vmatpush1.bf16.msra.mxu0 0
    %1670 = vmatprep.subr.bf16.mxu0 0
    %1671 = vmatpush1.bf16.msra.mxu0 0
    %1672 = vmatprep.mubr.bf16.mxu0 0
    %1673 = vmatmul.mubr.bf16.gmra.mrb[0].mxu0 %v1598
    %v1674 = vpop.f32.mrb[0].mxu0
    %v1675 = vadd.f32 0.0, %v1674
    %v1676 = vpop.f32.mrb[0].mxu0
    %v1677 = vadd.f32 0.0, %v1676
    %v1678 = vpop.f32.mrb[0].mxu0
    %v1679 = vpop.f32.mrb[0].mxu0
    %1680 = vdwg.mxu0
    %v1681 = vadd.f32 %v171, %v1634
    %v1682 = vadd.f32 %v175, %v1636
    %v1683 = vadd.f32 %v179, %v1675
    %v1684 = vadd.f32 %v183, %v1677
    %v1685 = vxor.u32 %v1681, 2147483648
    %v1686 = vmul.f32 %v1685, 1.442695
    %v1687 = vpow.pop %v1686
    %v1688 = vadd.f32 %v1687, 1.0
    %v1689 = vrcp.pop %v1688
    %v1690 = vmul.f32 1.0, %v1689
    %v1691 = vxor.u32 %v1682, 2147483648
    %v1692 = vmul.f32 %v1691, 1.442695
    %v1693 = vpow.pop %v1692
    %v1694 = vadd.f32 %v1693, 1.0
    %v1695 = vrcp.pop %v1694
    %v1696 = vmul.f32 1.0, %v1695
    %v1697 = vtanh.pop %v1683
    %v1698 = vxor.u32 %v1684, 2147483648
    %v1699 = vmul.f32 %v1698, 1.442695
    %v1700 = vpow.pop %v1699
    %v1701 = vadd.f32 %v1700, 1.0
    %v1702 = vrcp.pop %v1701
    %v1703 = vmul.f32 1.0, %v1702
    %v1704 = vmul.f32 %v1696, %v1466
    %v1705 = vmul.f32 %v1690, %v1697
    %v1706 = vadd.f32 %v1704, %v1705
    %v1707 = vtanh.pop %v1706
    %v1708 = vmul.f32 %v1703, %v1707
    %s1709 = scalar_lea.vmem %s0, 40
    %v1710 = vld [vmem:[%s1709] sm:$0xff]
    %1712 = vset.pattern.permute.xlu0 0
    %1713 = vperm.xlu0 %1712, %v1710
    %v1714 = vpop.permute.xlu0 %1713
    %v1716 = vmul.f32 %v1714, %v127
    %v1717 = vmul.f32 %v1714, %v131
    %v1718 = vmul.f32 %v1714, %v135
    %v1719 = vmul.f32 %v1714, %v139
    %v1720 = vadd.f32 %v1716, %v149
    %v1721 = vadd.f32 %v1717, %v153
    %v1722 = vadd.f32 %v1718, %v157
    %v1723 = vadd.f32 %v1719, %v161
    %v1724 = vpack.c.bf16 %v1594, %v1594
    %1725 = vmatprep.subr.bf16.mxu0 %v302
    %1726 = vmatpush1.bf16.msra.mxu0 %v301
    %1727 = vmatprep.subr.bf16.mxu0 %v306
    %1728 = vmatpush1.bf16.msra.mxu0 %v305
    %1729 = vmatprep.subr.bf16.mxu0 %v310
    %1730 = vmatpush1.bf16.msra.mxu0 %v309
    %1731 = vmatprep.subr.bf16.mxu0 %v314
    %1732 = vmatpush1.bf16.msra.mxu0 %v313
    %1733 = vmatprep.subr.bf16.mxu0 %v318
    %1734 = vmatpush1.bf16.msra.mxu0 %v317
    %1735 = vmatprep.subr.bf16.mxu0 %v322
    %1736 = vmatpush1.bf16.msra.mxu0 %v321
    %1737 = vmatprep.subr.bf16.mxu0 %v326
    %1738 = vmatpush1.bf16.msra.mxu0 %v325
    %1739 = vmatprep.subr.bf16.mxu0 %v330
    %1740 = vmatpush1.bf16.msra.mxu0 %v329
    %1741 = vmatprep.subr.bf16.mxu0 0
    %1742 = vmatpush1.bf16.msra.mxu0 0
    %1743 = vmatprep.subr.bf16.mxu0 0
    %1744 = vmatpush1.bf16.msra.mxu0 0
    %1745 = vmatprep.subr.bf16.mxu0 0
    %1746 = vmatpush1.bf16.msra.mxu0 0
    %1747 = vmatprep.subr.bf16.mxu0 0
    %1748 = vmatpush1.bf16.msra.mxu0 0
    %1749 = vmatprep.subr.bf16.mxu0 0
    %1750 = vmatpush1.bf16.msra.mxu0 0
    %1751 = vmatprep.subr.bf16.mxu0 0
    %1752 = vmatpush1.bf16.msra.mxu0 0
    %1753 = vmatprep.subr.bf16.mxu0 0
    %1754 = vmatpush1.bf16.msra.mxu0 0
    %1755 = vmatprep.subr.bf16.mxu0 0
    %1756 = vmatpush1.bf16.msra.mxu0 0
    %1757 = vmatprep.mubr.bf16.mxu0 0
    %1758 = vmatmul.mubr.bf16.gmra.mrb[0].mxu0 %v1724
    %v1759 = vpop.f32.mrb[0].mxu0
    %v1760 = vadd.f32 0.0, %v1759
    %v1761 = vpop.f32.mrb[0].mxu0
    %v1762 = vadd.f32 0.0, %v1761
    %v1763 = vpop.f32.mrb[0].mxu0
    %v1764 = vpop.f32.mrb[0].mxu0
    %1765 = vdwg.mxu0
    %1766 = vmatprep.subr.bf16.mxu0 %v304
    %1767 = vmatpush1.bf16.msra.mxu0 %v303
    %1768 = vmatprep.subr.bf16.mxu0 %v308
    %1769 = vmatpush1.bf16.msra.mxu0 %v307
    %1770 = vmatprep.subr.bf16.mxu0 %v312
    %1771 = vmatpush1.bf16.msra.mxu0 %v311
    %1772 = vmatprep.subr.bf16.mxu0 %v316
    %1773 = vmatpush1.bf16.msra.mxu0 %v315
    %1774 = vmatprep.subr.bf16.mxu0 %v320
    %1775 = vmatpush1.bf16.msra.mxu0 %v319
    %1776 = vmatprep.subr.bf16.mxu0 %v324
    %1777 = vmatpush1.bf16.msra.mxu0 %v323
    %1778 = vmatprep.subr.bf16.mxu0 %v328
    %1779 = vmatpush1.bf16.msra.mxu0 %v327
    %1780 = vmatprep.subr.bf16.mxu0 %v332
    %1781 = vmatpush1.bf16.msra.mxu0 %v331
    %1782 = vmatprep.subr.bf16.mxu0 0
    %1783 = vmatpush1.bf16.msra.mxu0 0
    %1784 = vmatprep.subr.bf16.mxu0 0
    %1785 = vmatpush1.bf16.msra.mxu0 0
    %1786 = vmatprep.subr.bf16.mxu0 0
    %1787 = vmatpush1.bf16.msra.mxu0 0
    %1788 = vmatprep.subr.bf16.mxu0 0
    %1789 = vmatpush1.bf16.msra.mxu0 0
    %1790 = vmatprep.subr.bf16.mxu0 0
    %1791 = vmatpush1.bf16.msra.mxu0 0
    %1792 = vmatprep.subr.bf16.mxu0 0
    %1793 = vmatpush1.bf16.msra.mxu0 0
    %1794 = vmatprep.subr.bf16.mxu0 0
    %1795 = vmatpush1.bf16.msra.mxu0 0
    %1796 = vmatprep.subr.bf16.mxu0 0
    %1797 = vmatpush1.bf16.msra.mxu0 0
    %1798 = vmatprep.mubr.bf16.mxu0 0
    %1799 = vmatmul.mubr.bf16.gmra.mrb[0].mxu0 %v1724
    %v1800 = vpop.f32.mrb[0].mxu0
    %v1801 = vadd.f32 0.0, %v1800
    %v1802 = vpop.f32.mrb[0].mxu0
    %v1803 = vadd.f32 0.0, %v1802
    %v1804 = vpop.f32.mrb[0].mxu0
    %v1805 = vpop.f32.mrb[0].mxu0
    %1806 = vdwg.mxu0
    %v1807 = vadd.f32 %v1720, %v1760
    %v1808 = vadd.f32 %v1721, %v1762
    %v1809 = vadd.f32 %v1722, %v1801
    %v1810 = vadd.f32 %v1723, %v1803
    %v1811 = vxor.u32 %v1807, 2147483648
    %v1812 = vmul.f32 %v1811, 1.442695
    %v1813 = vpow.pop %v1812
    %v1814 = vadd.f32 %v1813, 1.0
    %v1815 = vrcp.pop %v1814
    %v1816 = vmul.f32 1.0, %v1815
    %v1817 = vxor.u32 %v1808, 2147483648
    %v1818 = vmul.f32 %v1817, 1.442695
    %v1819 = vpow.pop %v1818
    %v1820 = vadd.f32 %v1819, 1.0
    %v1821 = vrcp.pop %v1820
    %v1822 = vmul.f32 1.0, %v1821
    %v1823 = vtanh.pop %v1809
    %v1824 = vxor.u32 %v1810, 2147483648
    %v1825 = vmul.f32 %v1824, 1.442695
    %v1826 = vpow.pop %v1825
    %v1827 = vadd.f32 %v1826, 1.0
    %v1828 = vrcp.pop %v1827
    %v1829 = vmul.f32 1.0, %v1828
    %v1830 = vmul.f32 %v1822, %v1592
    %v1831 = vmul.f32 %v1816, %v1823
    %v1832 = vadd.f32 %v1830, %v1831
    %v1833 = vtanh.pop %v1832
    %v1834 = vmul.f32 %v1829, %v1833
    %1835 = vrot.lane.b32.xlu0 %v1708, 64
    %v1836 = vpop.permute.xlu0 %1835
    %v1837 = vsel %vm190, %v1834, %v1836
    %v1838 = vpack.c.bf16 %v1837, %v1837
    %1839 = vmatprep.subr.bf16.mxu0 %v576
    %1840 = vmatpush1.bf16.msra.mxu0 %v575
    %1841 = vmatprep.subr.bf16.mxu0 %v580
    %1842 = vmatpush1.bf16.msra.mxu0 %v579
    %1843 = vmatprep.subr.bf16.mxu0 %v584
    %1844 = vmatpush1.bf16.msra.mxu0 %v583
    %1845 = vmatprep.subr.bf16.mxu0 %v588
    %1846 = vmatpush1.bf16.msra.mxu0 %v587
    %1847 = vmatprep.subr.bf16.mxu0 %v592
    %1848 = vmatpush1.bf16.msra.mxu0 %v591
    %1849 = vmatprep.subr.bf16.mxu0 %v596
    %1850 = vmatpush1.bf16.msra.mxu0 %v595
    %1851 = vmatprep.subr.bf16.mxu0 %v600
    %1852 = vmatpush1.bf16.msra.mxu0 %v599
    %1853 = vmatprep.subr.bf16.mxu0 %v604
    %1854 = vmatpush1.bf16.msra.mxu0 %v603
    %1855 = vmatprep.subr.bf16.mxu0 0
    %1856 = vmatpush1.bf16.msra.mxu0 0
    %1857 = vmatprep.subr.bf16.mxu0 0
    %1858 = vmatpush1.bf16.msra.mxu0 0
    %1859 = vmatprep.subr.bf16.mxu0 0
    %1860 = vmatpush1.bf16.msra.mxu0 0
    %1861 = vmatprep.subr.bf16.mxu0 0
    %1862 = vmatpush1.bf16.msra.mxu0 0
    %1863 = vmatprep.subr.bf16.mxu0 0
    %1864 = vmatpush1.bf16.msra.mxu0 0
    %1865 = vmatprep.subr.bf16.mxu0 0
    %1866 = vmatpush1.bf16.msra.mxu0 0
    %1867 = vmatprep.subr.bf16.mxu0 0
    %1868 = vmatpush1.bf16.msra.mxu0 0
    %1869 = vmatprep.subr.bf16.mxu0 0
    %1870 = vmatpush1.bf16.msra.mxu0 0
    %1871 = vmatprep.mubr.bf16.mxu0 0
    %1872 = vmatmul.mubr.bf16.gmra.mrb[0].mxu0 %v1838
    %v1873 = vpop.f32.mrb[0].mxu0
    %v1874 = vadd.f32 0.0, %v1873
    %v1875 = vpop.f32.mrb[0].mxu0
    %v1876 = vadd.f32 0.0, %v1875
    %v1877 = vpop.f32.mrb[0].mxu0
    %v1878 = vpop.f32.mrb[0].mxu0
    %1879 = vdwg.mxu0
    %1880 = vmatprep.subr.bf16.mxu0 %v578
    %1881 = vmatpush1.bf16.msra.mxu0 %v577
    %1882 = vmatprep.subr.bf16.mxu0 %v582
    %1883 = vmatpush1.bf16.msra.mxu0 %v581
    %1884 = vmatprep.subr.bf16.mxu0 %v586
    %1885 = vmatpush1.bf16.msra.mxu0 %v585
    %1886 = vmatprep.subr.bf16.mxu0 %v590
    %1887 = vmatpush1.bf16.msra.mxu0 %v589
    %1888 = vmatprep.subr.bf16.mxu0 %v594
    %1889 = vmatpush1.bf16.msra.mxu0 %v593
    %1890 = vmatprep.subr.bf16.mxu0 %v598
    %1891 = vmatpush1.bf16.msra.mxu0 %v597
    %1892 = vmatprep.subr.bf16.mxu0 %v602
    %1893 = vmatpush1.bf16.msra.mxu0 %v601
    %1894 = vmatprep.subr.bf16.mxu0 %v606
    %1895 = vmatpush1.bf16.msra.mxu0 %v605
    %1896 = vmatprep.subr.bf16.mxu0 0
    %1897 = vmatpush1.bf16.msra.mxu0 0
    %1898 = vmatprep.subr.bf16.mxu0 0
    %1899 = vmatpush1.bf16.msra.mxu0 0
    %1900 = vmatprep.subr.bf16.mxu0 0
    %1901 = vmatpush1.bf16.msra.mxu0 0
    %1902 = vmatprep.subr.bf16.mxu0 0
    %1903 = vmatpush1.bf16.msra.mxu0 0
    %1904 = vmatprep.subr.bf16.mxu0 0
    %1905 = vmatpush1.bf16.msra.mxu0 0
    %1906 = vmatprep.subr.bf16.mxu0 0
    %1907 = vmatpush1.bf16.msra.mxu0 0
    %1908 = vmatprep.subr.bf16.mxu0 0
    %1909 = vmatpush1.bf16.msra.mxu0 0
    %1910 = vmatprep.subr.bf16.mxu0 0
    %1911 = vmatpush1.bf16.msra.mxu0 0
    %1912 = vmatprep.mubr.bf16.mxu0 0
    %1913 = vmatmul.mubr.bf16.gmra.mrb[0].mxu0 %v1838
    %v1914 = vpop.f32.mrb[0].mxu0
    %v1915 = vadd.f32 0.0, %v1914
    %v1916 = vpop.f32.mrb[0].mxu0
    %v1917 = vadd.f32 0.0, %v1916
    %v1918 = vpop.f32.mrb[0].mxu0
    %v1919 = vpop.f32.mrb[0].mxu0
    %1920 = vdwg.mxu0
    %v1921 = vadd.f32 %v171, %v1874
    %v1922 = vadd.f32 %v175, %v1876
    %v1923 = vadd.f32 %v179, %v1915
    %v1924 = vadd.f32 %v183, %v1917
    %v1925 = vxor.u32 %v1921, 2147483648
    %v1926 = vmul.f32 %v1925, 1.442695
    %v1927 = vpow.pop %v1926
    %v1928 = vadd.f32 %v1927, 1.0
    %v1929 = vrcp.pop %v1928
    %v1930 = vmul.f32 1.0, %v1929
    %v1931 = vxor.u32 %v1922, 2147483648
    %v1932 = vmul.f32 %v1931, 1.442695
    %v1933 = vpow.pop %v1932
    %v1934 = vadd.f32 %v1933, 1.0
    %v1935 = vrcp.pop %v1934
    %v1936 = vmul.f32 1.0, %v1935
    %v1937 = vtanh.pop %v1923
    %v1938 = vxor.u32 %v1924, 2147483648
    %v1939 = vmul.f32 %v1938, 1.442695
    %v1940 = vpow.pop %v1939
    %v1941 = vadd.f32 %v1940, 1.0
    %v1942 = vrcp.pop %v1941
    %v1943 = vmul.f32 1.0, %v1942
    %v1944 = vmul.f32 %v1936, %v1706
    %v1945 = vmul.f32 %v1930, %v1937
    %v1946 = vadd.f32 %v1944, %v1945
    %v1947 = vtanh.pop %v1946
    %v1948 = vmul.f32 %v1943, %v1947
    %s1949 = scalar_lea.vmem %s0, 48
    %v1950 = vld [vmem:[%s1949] sm:$0xff]
    %1952 = vset.pattern.permute.xlu0 0
    %1953 = vperm.xlu0 %1952, %v1950
    %v1954 = vpop.permute.xlu0 %1953
    %v1956 = vmul.f32 %v1954, %v127
    %v1957 = vmul.f32 %v1954, %v131
    %v1958 = vmul.f32 %v1954, %v135
    %v1959 = vmul.f32 %v1954, %v139
    %v1960 = vadd.f32 %v1956, %v149
    %v1961 = vadd.f32 %v1957, %v153
    %v1962 = vadd.f32 %v1958, %v157
    %v1963 = vadd.f32 %v1959, %v161
    %v1964 = vpack.c.bf16 %v1834, %v1834
    %1965 = vmatprep.subr.bf16.mxu0 %v302
    %1966 = vmatpush1.bf16.msra.mxu0 %v301
    %1967 = vmatprep.subr.bf16.mxu0 %v306
    %1968 = vmatpush1.bf16.msra.mxu0 %v305
    %1969 = vmatprep.subr.bf16.mxu0 %v310
    %1970 = vmatpush1.bf16.msra.mxu0 %v309
    %1971 = vmatprep.subr.bf16.mxu0 %v314
    %1972 = vmatpush1.bf16.msra.mxu0 %v313
    %1973 = vmatprep.subr.bf16.mxu0 %v318
    %1974 = vmatpush1.bf16.msra.mxu0 %v317
    %1975 = vmatprep.subr.bf16.mxu0 %v322
    %1976 = vmatpush1.bf16.msra.mxu0 %v321
    %1977 = vmatprep.subr.bf16.mxu0 %v326
    %1978 = vmatpush1.bf16.msra.mxu0 %v325
    %1979 = vmatprep.subr.bf16.mxu0 %v330
    %1980 = vmatpush1.bf16.msra.mxu0 %v329
    %1981 = vmatprep.subr.bf16.mxu0 0
    %1982 = vmatpush1.bf16.msra.mxu0 0
    %1983 = vmatprep.subr.bf16.mxu0 0
    %1984 = vmatpush1.bf16.msra.mxu0 0
    %1985 = vmatprep.subr.bf16.mxu0 0
    %1986 = vmatpush1.bf16.msra.mxu0 0
    %1987 = vmatprep.subr.bf16.mxu0 0
    %1988 = vmatpush1.bf16.msra.mxu0 0
    %1989 = vmatprep.subr.bf16.mxu0 0
    %1990 = vmatpush1.bf16.msra.mxu0 0
    %1991 = vmatprep.subr.bf16.mxu0 0
    %1992 = vmatpush1.bf16.msra.mxu0 0
    %1993 = vmatprep.subr.bf16.mxu0 0
    %1994 = vmatpush1.bf16.msra.mxu0 0
    %1995 = vmatprep.subr.bf16.mxu0 0
    %1996 = vmatpush1.bf16.msra.mxu0 0
    %1997 = vmatprep.mubr.bf16.mxu0 0
    %1998 = vmatmul.mubr.bf16.gmra.mrb[0].mxu0 %v1964
    %v1999 = vpop.f32.mrb[0].mxu0
    %v2000 = vadd.f32 0.0, %v1999
    %v2001 = vpop.f32.mrb[0].mxu0
    %v2002 = vadd.f32 0.0, %v2001
    %v2003 = vpop.f32.mrb[0].mxu0
    %v2004 = vpop.f32.mrb[0].mxu0
    %2005 = vdwg.mxu0
    %2006 = vmatprep.subr.bf16.mxu0 %v304
    %2007 = vmatpush1.bf16.msra.mxu0 %v303
    %2008 = vmatprep.subr.bf16.mxu0 %v308
    %2009 = vmatpush1.bf16.msra.mxu0 %v307
    %2010 = vmatprep.subr.bf16.mxu0 %v312
    %2011 = vmatpush1.bf16.msra.mxu0 %v311
    %2012 = vmatprep.subr.bf16.mxu0 %v316
    %2013 = vmatpush1.bf16.msra.mxu0 %v315
    %2014 = vmatprep.subr.bf16.mxu0 %v320
    %2015 = vmatpush1.bf16.msra.mxu0 %v319
    %2016 = vmatprep.subr.bf16.mxu0 %v324
    %2017 = vmatpush1.bf16.msra.mxu0 %v323
    %2018 = vmatprep.subr.bf16.mxu0 %v328
    %2019 = vmatpush1.bf16.msra.mxu0 %v327
    %2020 = vmatprep.subr.bf16.mxu0 %v332
    %2021 = vmatpush1.bf16.msra.mxu0 %v331
    %2022 = vmatprep.subr.bf16.mxu0 0
    %2023 = vmatpush1.bf16.msra.mxu0 0
    %2024 = vmatprep.subr.bf16.mxu0 0
    %2025 = vmatpush1.bf16.msra.mxu0 0
    %2026 = vmatprep.subr.bf16.mxu0 0
    %2027 = vmatpush1.bf16.msra.mxu0 0
    %2028 = vmatprep.subr.bf16.mxu0 0
    %2029 = vmatpush1.bf16.msra.mxu0 0
    %2030 = vmatprep.subr.bf16.mxu0 0
    %2031 = vmatpush1.bf16.msra.mxu0 0
    %2032 = vmatprep.subr.bf16.mxu0 0
    %2033 = vmatpush1.bf16.msra.mxu0 0
    %2034 = vmatprep.subr.bf16.mxu0 0
    %2035 = vmatpush1.bf16.msra.mxu0 0
    %2036 = vmatprep.subr.bf16.mxu0 0
    %2037 = vmatpush1.bf16.msra.mxu0 0
    %2038 = vmatprep.mubr.bf16.mxu0 0
    %2039 = vmatmul.mubr.bf16.gmra.mrb[0].mxu0 %v1964
    %v2040 = vpop.f32.mrb[0].mxu0
    %v2041 = vadd.f32 0.0, %v2040
    %v2042 = vpop.f32.mrb[0].mxu0
    %v2043 = vadd.f32 0.0, %v2042
    %v2044 = vpop.f32.mrb[0].mxu0
    %v2045 = vpop.f32.mrb[0].mxu0
    %2046 = vdwg.mxu0
    %v2047 = vadd.f32 %v1960, %v2000
    %v2048 = vadd.f32 %v1961, %v2002
    %v2049 = vadd.f32 %v1962, %v2041
    %v2050 = vadd.f32 %v1963, %v2043
    %v2051 = vxor.u32 %v2047, 2147483648
    %v2052 = vmul.f32 %v2051, 1.442695
    %v2053 = vpow.pop %v2052
    %v2054 = vadd.f32 %v2053, 1.0
    %v2055 = vrcp.pop %v2054
    %v2056 = vmul.f32 1.0, %v2055
    %v2057 = vxor.u32 %v2048, 2147483648
    %v2058 = vmul.f32 %v2057, 1.442695
    %v2059 = vpow.pop %v2058
    %v2060 = vadd.f32 %v2059, 1.0
    %v2061 = vrcp.pop %v2060
    %v2062 = vmul.f32 1.0, %v2061
    %v2063 = vtanh.pop %v2049
    %v2064 = vxor.u32 %v2050, 2147483648
    %v2065 = vmul.f32 %v2064, 1.442695
    %v2066 = vpow.pop %v2065
    %v2067 = vadd.f32 %v2066, 1.0
    %v2068 = vrcp.pop %v2067
    %v2069 = vmul.f32 1.0, %v2068
    %v2070 = vmul.f32 %v2062, %v1832
    %v2071 = vmul.f32 %v2056, %v2063
    %v2072 = vadd.f32 %v2070, %v2071
    %v2073 = vtanh.pop %v2072
    %v2074 = vmul.f32 %v2069, %v2073
    %2075 = vrot.lane.b32.xlu0 %v1948, 64
    %v2076 = vpop.permute.xlu0 %2075
    %v2077 = vsel %vm190, %v2074, %v2076
    %v2078 = vpack.c.bf16 %v2077, %v2077
    %2079 = vmatprep.subr.bf16.mxu0 %v576
    %2080 = vmatpush1.bf16.msra.mxu0 %v575
    %2081 = vmatprep.subr.bf16.mxu0 %v580
    %2082 = vmatpush1.bf16.msra.mxu0 %v579
    %2083 = vmatprep.subr.bf16.mxu0 %v584
    %2084 = vmatpush1.bf16.msra.mxu0 %v583
    %2085 = vmatprep.subr.bf16.mxu0 %v588
    %2086 = vmatpush1.bf16.msra.mxu0 %v587
    %2087 = vmatprep.subr.bf16.mxu0 %v592
    %2088 = vmatpush1.bf16.msra.mxu0 %v591
    %2089 = vmatprep.subr.bf16.mxu0 %v596
    %2090 = vmatpush1.bf16.msra.mxu0 %v595
    %2091 = vmatprep.subr.bf16.mxu0 %v600
    %2092 = vmatpush1.bf16.msra.mxu0 %v599
    %2093 = vmatprep.subr.bf16.mxu0 %v604
    %2094 = vmatpush1.bf16.msra.mxu0 %v603
    %2095 = vmatprep.subr.bf16.mxu0 0
    %2096 = vmatpush1.bf16.msra.mxu0 0
    %2097 = vmatprep.subr.bf16.mxu0 0
    %2098 = vmatpush1.bf16.msra.mxu0 0
    %2099 = vmatprep.subr.bf16.mxu0 0
    %2100 = vmatpush1.bf16.msra.mxu0 0
    %2101 = vmatprep.subr.bf16.mxu0 0
    %2102 = vmatpush1.bf16.msra.mxu0 0
    %2103 = vmatprep.subr.bf16.mxu0 0
    %2104 = vmatpush1.bf16.msra.mxu0 0
    %2105 = vmatprep.subr.bf16.mxu0 0
    %2106 = vmatpush1.bf16.msra.mxu0 0
    %2107 = vmatprep.subr.bf16.mxu0 0
    %2108 = vmatpush1.bf16.msra.mxu0 0
    %2109 = vmatprep.subr.bf16.mxu0 0
    %2110 = vmatpush1.bf16.msra.mxu0 0
    %2111 = vmatprep.mubr.bf16.mxu0 0
    %2112 = vmatmul.mubr.bf16.gmra.mrb[0].mxu0 %v2078
    %v2113 = vpop.f32.mrb[0].mxu0
    %v2114 = vadd.f32 0.0, %v2113
    %v2115 = vpop.f32.mrb[0].mxu0
    %v2116 = vadd.f32 0.0, %v2115
    %v2117 = vpop.f32.mrb[0].mxu0
    %v2118 = vpop.f32.mrb[0].mxu0
    %2119 = vdwg.mxu0
    %2120 = vmatprep.subr.bf16.mxu0 %v578
    %2121 = vmatpush1.bf16.msra.mxu0 %v577
    %2122 = vmatprep.subr.bf16.mxu0 %v582
    %2123 = vmatpush1.bf16.msra.mxu0 %v581
    %2124 = vmatprep.subr.bf16.mxu0 %v586
    %2125 = vmatpush1.bf16.msra.mxu0 %v585
    %2126 = vmatprep.subr.bf16.mxu0 %v590
    %2127 = vmatpush1.bf16.msra.mxu0 %v589
    %2128 = vmatprep.subr.bf16.mxu0 %v594
    %2129 = vmatpush1.bf16.msra.mxu0 %v593
    %2130 = vmatprep.subr.bf16.mxu0 %v598
    %2131 = vmatpush1.bf16.msra.mxu0 %v597
    %2132 = vmatprep.subr.bf16.mxu0 %v602
    %2133 = vmatpush1.bf16.msra.mxu0 %v601
    %2134 = vmatprep.subr.bf16.mxu0 %v606
    %2135 = vmatpush1.bf16.msra.mxu0 %v605
    %2136 = vmatprep.subr.bf16.mxu0 0
    %2137 = vmatpush1.bf16.msra.mxu0 0
    %2138 = vmatprep.subr.bf16.mxu0 0
    %2139 = vmatpush1.bf16.msra.mxu0 0
    %2140 = vmatprep.subr.bf16.mxu0 0
    %2141 = vmatpush1.bf16.msra.mxu0 0
    %2142 = vmatprep.subr.bf16.mxu0 0
    %2143 = vmatpush1.bf16.msra.mxu0 0
    %2144 = vmatprep.subr.bf16.mxu0 0
    %2145 = vmatpush1.bf16.msra.mxu0 0
    %2146 = vmatprep.subr.bf16.mxu0 0
    %2147 = vmatpush1.bf16.msra.mxu0 0
    %2148 = vmatprep.subr.bf16.mxu0 0
    %2149 = vmatpush1.bf16.msra.mxu0 0
    %2150 = vmatprep.subr.bf16.mxu0 0
    %2151 = vmatpush1.bf16.msra.mxu0 0
    %2152 = vmatprep.mubr.bf16.mxu0 0
    %2153 = vmatmul.mubr.bf16.gmra.mrb[0].mxu0 %v2078
    %v2154 = vpop.f32.mrb[0].mxu0
    %v2155 = vadd.f32 0.0, %v2154
    %v2156 = vpop.f32.mrb[0].mxu0
    %v2157 = vadd.f32 0.0, %v2156
    %v2158 = vpop.f32.mrb[0].mxu0
    %v2159 = vpop.f32.mrb[0].mxu0
    %2160 = vdwg.mxu0
    %v2161 = vadd.f32 %v171, %v2114
    %v2162 = vadd.f32 %v175, %v2116
    %v2163 = vadd.f32 %v179, %v2155
    %v2164 = vadd.f32 %v183, %v2157
    %v2165 = vxor.u32 %v2161, 2147483648
    %v2166 = vmul.f32 %v2165, 1.442695
    %v2167 = vpow.pop %v2166
    %v2168 = vadd.f32 %v2167, 1.0
    %v2169 = vrcp.pop %v2168
    %v2170 = vmul.f32 1.0, %v2169
    %v2171 = vxor.u32 %v2162, 2147483648
    %v2172 = vmul.f32 %v2171, 1.442695
    %v2173 = vpow.pop %v2172
    %v2174 = vadd.f32 %v2173, 1.0
    %v2175 = vrcp.pop %v2174
    %v2176 = vmul.f32 1.0, %v2175
    %v2177 = vtanh.pop %v2163
    %v2178 = vxor.u32 %v2164, 2147483648
    %v2179 = vmul.f32 %v2178, 1.442695
    %v2180 = vpow.pop %v2179
    %v2181 = vadd.f32 %v2180, 1.0
    %v2182 = vrcp.pop %v2181
    %v2183 = vmul.f32 1.0, %v2182
    %v2184 = vmul.f32 %v2176, %v1946
    %v2185 = vmul.f32 %v2170, %v2177
    %v2186 = vadd.f32 %v2184, %v2185
    %v2187 = vtanh.pop %v2186
    %v2188 = vmul.f32 %v2183, %v2187
    %s2189 = scalar_lea.vmem %s0, 56
    %v2190 = vld [vmem:[%s2189] sm:$0xff]
    %2192 = vset.pattern.permute.xlu0 0
    %2193 = vperm.xlu0 %2192, %v2190
    %v2194 = vpop.permute.xlu0 %2193
    %v2196 = vmul.f32 %v2194, %v127
    %v2197 = vmul.f32 %v2194, %v131
    %v2198 = vmul.f32 %v2194, %v135
    %v2199 = vmul.f32 %v2194, %v139
    %v2200 = vadd.f32 %v2196, %v149
    %v2201 = vadd.f32 %v2197, %v153
    %v2202 = vadd.f32 %v2198, %v157
    %v2203 = vadd.f32 %v2199, %v161
    %v2204 = vpack.c.bf16 %v2074, %v2074
    %2205 = vmatprep.subr.bf16.mxu0 %v302
    %2206 = vmatpush1.bf16.msra.mxu0 %v301
    %2207 = vmatprep.subr.bf16.mxu0 %v306
    %2208 = vmatpush1.bf16.msra.mxu0 %v305
    %2209 = vmatprep.subr.bf16.mxu0 %v310
    %2210 = vmatpush1.bf16.msra.mxu0 %v309
    %2211 = vmatprep.subr.bf16.mxu0 %v314
    %2212 = vmatpush1.bf16.msra.mxu0 %v313
    %2213 = vmatprep.subr.bf16.mxu0 %v318
    %2214 = vmatpush1.bf16.msra.mxu0 %v317
    %2215 = vmatprep.subr.bf16.mxu0 %v322
    %2216 = vmatpush1.bf16.msra.mxu0 %v321
    %2217 = vmatprep.subr.bf16.mxu0 %v326
    %2218 = vmatpush1.bf16.msra.mxu0 %v325
    %2219 = vmatprep.subr.bf16.mxu0 %v330
    %2220 = vmatpush1.bf16.msra.mxu0 %v329
    %2221 = vmatprep.subr.bf16.mxu0 0
    %2222 = vmatpush1.bf16.msra.mxu0 0
    %2223 = vmatprep.subr.bf16.mxu0 0
    %2224 = vmatpush1.bf16.msra.mxu0 0
    %2225 = vmatprep.subr.bf16.mxu0 0
    %2226 = vmatpush1.bf16.msra.mxu0 0
    %2227 = vmatprep.subr.bf16.mxu0 0
    %2228 = vmatpush1.bf16.msra.mxu0 0
    %2229 = vmatprep.subr.bf16.mxu0 0
    %2230 = vmatpush1.bf16.msra.mxu0 0
    %2231 = vmatprep.subr.bf16.mxu0 0
    %2232 = vmatpush1.bf16.msra.mxu0 0
    %2233 = vmatprep.subr.bf16.mxu0 0
    %2234 = vmatpush1.bf16.msra.mxu0 0
    %2235 = vmatprep.subr.bf16.mxu0 0
    %2236 = vmatpush1.bf16.msra.mxu0 0
    %2237 = vmatprep.mubr.bf16.mxu0 0
    %2238 = vmatmul.mubr.bf16.gmra.mrb[0].mxu0 %v2204
    %v2239 = vpop.f32.mrb[0].mxu0
    %v2240 = vadd.f32 0.0, %v2239
    %v2241 = vpop.f32.mrb[0].mxu0
    %v2242 = vadd.f32 0.0, %v2241
    %v2243 = vpop.f32.mrb[0].mxu0
    %v2244 = vpop.f32.mrb[0].mxu0
    %2245 = vdwg.mxu0
    %2246 = vmatprep.subr.bf16.mxu0 %v304
    %2247 = vmatpush1.bf16.msra.mxu0 %v303
    %2248 = vmatprep.subr.bf16.mxu0 %v308
    %2249 = vmatpush1.bf16.msra.mxu0 %v307
    %2250 = vmatprep.subr.bf16.mxu0 %v312
    %2251 = vmatpush1.bf16.msra.mxu0 %v311
    %2252 = vmatprep.subr.bf16.mxu0 %v316
    %2253 = vmatpush1.bf16.msra.mxu0 %v315
    %2254 = vmatprep.subr.bf16.mxu0 %v320
    %2255 = vmatpush1.bf16.msra.mxu0 %v319
    %2256 = vmatprep.subr.bf16.mxu0 %v324
    %2257 = vmatpush1.bf16.msra.mxu0 %v323
    %2258 = vmatprep.subr.bf16.mxu0 %v328
    %2259 = vmatpush1.bf16.msra.mxu0 %v327
    %2260 = vmatprep.subr.bf16.mxu0 %v332
    %2261 = vmatpush1.bf16.msra.mxu0 %v331
    %2262 = vmatprep.subr.bf16.mxu0 0
    %2263 = vmatpush1.bf16.msra.mxu0 0
    %2264 = vmatprep.subr.bf16.mxu0 0
    %2265 = vmatpush1.bf16.msra.mxu0 0
    %2266 = vmatprep.subr.bf16.mxu0 0
    %2267 = vmatpush1.bf16.msra.mxu0 0
    %2268 = vmatprep.subr.bf16.mxu0 0
    %2269 = vmatpush1.bf16.msra.mxu0 0
    %2270 = vmatprep.subr.bf16.mxu0 0
    %2271 = vmatpush1.bf16.msra.mxu0 0
    %2272 = vmatprep.subr.bf16.mxu0 0
    %2273 = vmatpush1.bf16.msra.mxu0 0
    %2274 = vmatprep.subr.bf16.mxu0 0
    %2275 = vmatpush1.bf16.msra.mxu0 0
    %2276 = vmatprep.subr.bf16.mxu0 0
    %2277 = vmatpush1.bf16.msra.mxu0 0
    %2278 = vmatprep.mubr.bf16.mxu0 0
    %2279 = vmatmul.mubr.bf16.gmra.mrb[0].mxu0 %v2204
    %v2280 = vpop.f32.mrb[0].mxu0
    %v2281 = vadd.f32 0.0, %v2280
    %v2282 = vpop.f32.mrb[0].mxu0
    %v2283 = vadd.f32 0.0, %v2282
    %v2284 = vpop.f32.mrb[0].mxu0
    %v2285 = vpop.f32.mrb[0].mxu0
    %2286 = vdwg.mxu0
    %v2287 = vadd.f32 %v2200, %v2240
    %v2288 = vadd.f32 %v2201, %v2242
    %v2289 = vadd.f32 %v2202, %v2281
    %v2290 = vadd.f32 %v2203, %v2283
    %v2291 = vxor.u32 %v2287, 2147483648
    %v2292 = vmul.f32 %v2291, 1.442695
    %v2293 = vpow.pop %v2292
    %v2294 = vadd.f32 %v2293, 1.0
    %v2295 = vrcp.pop %v2294
    %v2296 = vmul.f32 1.0, %v2295
    %v2297 = vxor.u32 %v2288, 2147483648
    %v2298 = vmul.f32 %v2297, 1.442695
    %v2299 = vpow.pop %v2298
    %v2300 = vadd.f32 %v2299, 1.0
    %v2301 = vrcp.pop %v2300
    %v2302 = vmul.f32 1.0, %v2301
    %v2303 = vtanh.pop %v2289
    %v2304 = vxor.u32 %v2290, 2147483648
    %v2305 = vmul.f32 %v2304, 1.442695
    %v2306 = vpow.pop %v2305
    %v2307 = vadd.f32 %v2306, 1.0
    %v2308 = vrcp.pop %v2307
    %v2309 = vmul.f32 1.0, %v2308
    %v2310 = vmul.f32 %v2302, %v2072
    %v2311 = vmul.f32 %v2296, %v2303
    %v2312 = vadd.f32 %v2310, %v2311
    %v2313 = vtanh.pop %v2312
    %v2314 = vmul.f32 %v2309, %v2313
    %2315 = vrot.lane.b32.xlu0 %v2188, 64
    %v2316 = vpop.permute.xlu0 %2315
    %v2317 = vsel %vm190, %v2314, %v2316
    %v2318 = vpack.c.bf16 %v2317, %v2317
    %2319 = vmatprep.subr.bf16.mxu0 %v576
    %2320 = vmatpush1.bf16.msra.mxu0 %v575
    %2321 = vmatprep.subr.bf16.mxu0 %v580
    %2322 = vmatpush1.bf16.msra.mxu0 %v579
    %2323 = vmatprep.subr.bf16.mxu0 %v584
    %2324 = vmatpush1.bf16.msra.mxu0 %v583
    %2325 = vmatprep.subr.bf16.mxu0 %v588
    %2326 = vmatpush1.bf16.msra.mxu0 %v587
    %2327 = vmatprep.subr.bf16.mxu0 %v592
    %2328 = vmatpush1.bf16.msra.mxu0 %v591
    %2329 = vmatprep.subr.bf16.mxu0 %v596
    %2330 = vmatpush1.bf16.msra.mxu0 %v595
    %2331 = vmatprep.subr.bf16.mxu0 %v600
    %2332 = vmatpush1.bf16.msra.mxu0 %v599
    %2333 = vmatprep.subr.bf16.mxu0 %v604
    %2334 = vmatpush1.bf16.msra.mxu0 %v603
    %2335 = vmatprep.subr.bf16.mxu0 0
    %2336 = vmatpush1.bf16.msra.mxu0 0
    %2337 = vmatprep.subr.bf16.mxu0 0
    %2338 = vmatpush1.bf16.msra.mxu0 0
    %2339 = vmatprep.subr.bf16.mxu0 0
    %2340 = vmatpush1.bf16.msra.mxu0 0
    %2341 = vmatprep.subr.bf16.mxu0 0
    %2342 = vmatpush1.bf16.msra.mxu0 0
    %2343 = vmatprep.subr.bf16.mxu0 0
    %2344 = vmatpush1.bf16.msra.mxu0 0
    %2345 = vmatprep.subr.bf16.mxu0 0
    %2346 = vmatpush1.bf16.msra.mxu0 0
    %2347 = vmatprep.subr.bf16.mxu0 0
    %2348 = vmatpush1.bf16.msra.mxu0 0
    %2349 = vmatprep.subr.bf16.mxu0 0
    %2350 = vmatpush1.bf16.msra.mxu0 0
    %2351 = vmatprep.mubr.bf16.mxu0 0
    %2352 = vmatmul.mubr.bf16.gmra.mrb[0].mxu0 %v2318
    %v2353 = vpop.f32.mrb[0].mxu0
    %v2354 = vadd.f32 0.0, %v2353
    %v2355 = vpop.f32.mrb[0].mxu0
    %v2356 = vadd.f32 0.0, %v2355
    %v2357 = vpop.f32.mrb[0].mxu0
    %v2358 = vpop.f32.mrb[0].mxu0
    %2359 = vdwg.mxu0
    %2360 = vmatprep.subr.bf16.mxu0 %v578
    %2361 = vmatpush1.bf16.msra.mxu0 %v577
    %2362 = vmatprep.subr.bf16.mxu0 %v582
    %2363 = vmatpush1.bf16.msra.mxu0 %v581
    %2364 = vmatprep.subr.bf16.mxu0 %v586
    %2365 = vmatpush1.bf16.msra.mxu0 %v585
    %2366 = vmatprep.subr.bf16.mxu0 %v590
    %2367 = vmatpush1.bf16.msra.mxu0 %v589
    %2368 = vmatprep.subr.bf16.mxu0 %v594
    %2369 = vmatpush1.bf16.msra.mxu0 %v593
    %2370 = vmatprep.subr.bf16.mxu0 %v598
    %2371 = vmatpush1.bf16.msra.mxu0 %v597
    %2372 = vmatprep.subr.bf16.mxu0 %v602
    %2373 = vmatpush1.bf16.msra.mxu0 %v601
    %2374 = vmatprep.subr.bf16.mxu0 %v606
    %2375 = vmatpush1.bf16.msra.mxu0 %v605
    %2376 = vmatprep.subr.bf16.mxu0 0
    %2377 = vmatpush1.bf16.msra.mxu0 0
    %2378 = vmatprep.subr.bf16.mxu0 0
    %2379 = vmatpush1.bf16.msra.mxu0 0
    %2380 = vmatprep.subr.bf16.mxu0 0
    %2381 = vmatpush1.bf16.msra.mxu0 0
    %2382 = vmatprep.subr.bf16.mxu0 0
    %2383 = vmatpush1.bf16.msra.mxu0 0
    %2384 = vmatprep.subr.bf16.mxu0 0
    %2385 = vmatpush1.bf16.msra.mxu0 0
    %2386 = vmatprep.subr.bf16.mxu0 0
    %2387 = vmatpush1.bf16.msra.mxu0 0
    %2388 = vmatprep.subr.bf16.mxu0 0
    %2389 = vmatpush1.bf16.msra.mxu0 0
    %2390 = vmatprep.subr.bf16.mxu0 0
    %2391 = vmatpush1.bf16.msra.mxu0 0
    %2392 = vmatprep.mubr.bf16.mxu0 0
    %2393 = vmatmul.mubr.bf16.gmra.mrb[0].mxu0 %v2318
    %v2394 = vpop.f32.mrb[0].mxu0
    %v2395 = vadd.f32 0.0, %v2394
    %v2396 = vpop.f32.mrb[0].mxu0
    %v2397 = vadd.f32 0.0, %v2396
    %v2398 = vpop.f32.mrb[0].mxu0
    %v2399 = vpop.f32.mrb[0].mxu0
    %2400 = vdwg.mxu0
    %v2401 = vadd.f32 %v171, %v2354
    %v2402 = vadd.f32 %v175, %v2356
    %v2403 = vadd.f32 %v179, %v2395
    %v2404 = vadd.f32 %v183, %v2397
    %v2405 = vxor.u32 %v2401, 2147483648
    %v2406 = vmul.f32 %v2405, 1.442695
    %v2407 = vpow.pop %v2406
    %v2408 = vadd.f32 %v2407, 1.0
    %v2409 = vrcp.pop %v2408
    %v2410 = vmul.f32 1.0, %v2409
    %v2411 = vxor.u32 %v2402, 2147483648
    %v2412 = vmul.f32 %v2411, 1.442695
    %v2413 = vpow.pop %v2412
    %v2414 = vadd.f32 %v2413, 1.0
    %v2415 = vrcp.pop %v2414
    %v2416 = vmul.f32 1.0, %v2415
    %v2417 = vtanh.pop %v2403
    %v2418 = vxor.u32 %v2404, 2147483648
    %v2419 = vmul.f32 %v2418, 1.442695
    %v2420 = vpow.pop %v2419
    %v2421 = vadd.f32 %v2420, 1.0
    %v2422 = vrcp.pop %v2421
    %v2423 = vmul.f32 1.0, %v2422
    %v2424 = vmul.f32 %v2416, %v2186
    %v2425 = vmul.f32 %v2410, %v2417
    %v2426 = vadd.f32 %v2424, %v2425
    %v2427 = vtanh.pop %v2426
    %v2428 = vmul.f32 %v2423, %v2427
    %v2429 = vpack.c.bf16 %v2428, %v2428
    %v2430 = vld [vmem:[%s6] sm:$0xf]
    %v2431 = vld [vmem:[%s6 + $0x4] sm:$0xf]
    %v2432 = vld [vmem:[%s6 + $0x8] sm:$0xf]
    %v2433 = vld [vmem:[%s6 + $0xc] sm:$0xf]
    %v2434 = vld [vmem:[%s6 + $0x10] sm:$0xf]
    %v2435 = vld [vmem:[%s6 + $0x14] sm:$0xf]
    %v2436 = vld [vmem:[%s6 + $0x18] sm:$0xf]
    %v2437 = vld [vmem:[%s6 + $0x1c] sm:$0xf]
    %v2438 = vld [vmem:[%s6 + $0x20] sm:$0xf]
    %v2439 = vld [vmem:[%s6 + $0x24] sm:$0xf]
    %v2440 = vld [vmem:[%s6 + $0x28] sm:$0xf]
    %v2441 = vld [vmem:[%s6 + $0x2c] sm:$0xf]
    %v2442 = vld [vmem:[%s6 + $0x30] sm:$0xf]
    %v2443 = vld [vmem:[%s6 + $0x34] sm:$0xf]
    %v2444 = vld [vmem:[%s6 + $0x38] sm:$0xf]
    %v2445 = vld [vmem:[%s6 + $0x3c] sm:$0xf]
    %v2446 = vld [vmem:[%s7] sm:$0x1]
    %v2448 = vlaneseq
    %v2449 = vshrl.u32 %v2448, 7
    %v2450 = vsub.s32 0, %v2449
    %v2451 = vrot.slane %v2446, %v2450
    %v2469 = vunpack.c.l.b16 %v2430
    %v2470 = vunpack.c.l.b16 %v2431
    %v2471 = vunpack.c.l.b16 %v2432
    %v2472 = vunpack.c.l.b16 %v2433
    %v2473 = vunpack.c.l.b16 %v2434
    %v2474 = vunpack.c.l.b16 %v2435
    %v2475 = vunpack.c.l.b16 %v2436
    %v2476 = vunpack.c.l.b16 %v2437
    %v2477 = vunpack.c.l.b16 %v2438
    %v2478 = vunpack.c.l.b16 %v2439
    %v2479 = vunpack.c.l.b16 %v2440
    %v2480 = vunpack.c.l.b16 %v2441
    %v2481 = vunpack.c.l.b16 %v2442
    %v2482 = vunpack.c.l.b16 %v2443
    %v2483 = vunpack.c.l.b16 %v2444
    %v2484 = vunpack.c.l.b16 %v2445
    %v2485 = vpack.c.b16 %v2470, %v2469
    %v2486 = vpack.c.b16 %v2472, %v2471
    %v2487 = vpack.c.b16 %v2474, %v2473
    %v2488 = vpack.c.b16 %v2476, %v2475
    %v2489 = vpack.c.b16 %v2478, %v2477
    %v2490 = vpack.c.b16 %v2480, %v2479
    %v2491 = vpack.c.b16 %v2482, %v2481
    %v2492 = vpack.c.b16 %v2484, %v2483
    %2501 = vmatprep.subr.bf16.mxu0 0
    %2502 = vmatpush1.bf16.msra.mxu0 %v2485
    %2503 = vmatprep.subr.bf16.mxu0 0
    %2504 = vmatpush1.bf16.msra.mxu0 %v2486
    %2505 = vmatprep.subr.bf16.mxu0 0
    %2506 = vmatpush1.bf16.msra.mxu0 %v2487
    %2507 = vmatprep.subr.bf16.mxu0 0
    %2508 = vmatpush1.bf16.msra.mxu0 %v2488
    %2509 = vmatprep.subr.bf16.mxu0 0
    %2510 = vmatpush1.bf16.msra.mxu0 %v2489
    %2511 = vmatprep.subr.bf16.mxu0 0
    %2512 = vmatpush1.bf16.msra.mxu0 %v2490
    %2513 = vmatprep.subr.bf16.mxu0 0
    %2514 = vmatpush1.bf16.msra.mxu0 %v2491
    %2515 = vmatprep.subr.bf16.mxu0 0
    %2516 = vmatpush1.bf16.msra.mxu0 %v2492
    %2517 = vmatprep.subr.bf16.mxu0 0
    %2518 = vmatpush1.bf16.msra.mxu0 0
    %2519 = vmatprep.subr.bf16.mxu0 0
    %2520 = vmatpush1.bf16.msra.mxu0 0
    %2521 = vmatprep.subr.bf16.mxu0 0
    %2522 = vmatpush1.bf16.msra.mxu0 0
    %2523 = vmatprep.subr.bf16.mxu0 0
    %2524 = vmatpush1.bf16.msra.mxu0 0
    %2525 = vmatprep.subr.bf16.mxu0 0
    %2526 = vmatpush1.bf16.msra.mxu0 0
    %2527 = vmatprep.subr.bf16.mxu0 0
    %2528 = vmatpush1.bf16.msra.mxu0 0
    %2529 = vmatprep.subr.bf16.mxu0 0
    %2530 = vmatpush1.bf16.msra.mxu0 0
    %2531 = vmatprep.subr.bf16.mxu0 0
    %2532 = vmatpush1.bf16.msra.mxu0 0
    %2533 = vmatprep.mubr.bf16.mxu0 0
    %2534 = vmatmul.mubr.bf16.gmra.mrb[0].mxu0 %v2429
    %v2535 = vpop.f32.mrb[0].mxu0
    %v2536 = vadd.f32 %v2451, %v2535
    %v2537 = vpop.f32.mrb[0].mxu0
    %v2538 = vpop.f32.mrb[0].mxu0
    %v2539 = vpop.f32.mrb[0].mxu0
    %2540 = vdwg.mxu0
    %2541 = vst [vmem:[%s8] sm:$0xff] %v2536
    // Predicated region
    $region42: #{model_forward.1} parent=1 // pred_check
      _
    $region43: #{model_forward.1} parent=1 // pred_check_branch
      %2543 = sbr.rel (0) target = $region45
    $region44: #{model_forward.1} parent=1 // pred_region
      _
    $region45: #{model_forward.1} parent=1 // pred_fallthru
      _
    // Predicated region
    $region46: #{model_forward.1} parent=1 // pred_check
      _
    $region47: #{model_forward.1} parent=1 // pred_check_branch
      %2545 = sbr.rel (0) target = $region49
    $region48: #{model_forward.1} parent=1 // pred_region
      _
    $region49: #{model_forward.1} parent=1 // pred_fallthru
      _
    %2546 = vsyncpa [#allocation3], 1
    %2547 = vsyncpa [#allocation5], 1

</llo_original>
